<compile_context>
chip_gen: v7x
topology: tpu7x:2x2x1
jax: 0.10.0
libtpu: 0.0.40
codegen_flags: <defaults>
</compile_context>

<pallas_src>
import functools

import jax
import jax.numpy as jnp
from jax import lax
from jax.experimental import pallas as pl
from jax.experimental.pallas import tpu as pltpu


# --------------------------------------------------------------------------
# In-kernel helpers
# --------------------------------------------------------------------------
def _conv3x3_flat(a, w_mat, b_row, *, Wp, R, PAD):
    """3x3 'SAME' conv on a zero-haloed flat activation.

    a:     (R, Cin)  activation on the padded (Hp, Wp) grid, flattened
           row-major (R = Hp * Wp); halo rows/cols are exactly zero.
    w_mat: (9*Cin, Cout) weights, rows ordered (dy, dx, cin).
    b_row: (1, Cout) bias.
    Returns (R, Cout); only interior rows are valid - halo rows are garbage
    and must be masked / ignored by the caller.
    """
    Cin = a.shape[-1]
    Cout = w_mat.shape[-1]
    zeros = jnp.zeros((PAD, Cin), jnp.float32)
    # Row-extended copy so every tap shift is a plain (second-minor) slice.
    a_ext = jnp.concatenate([zeros, a, zeros], axis=0)        # (R + 2*PAD, Cin)
    acc = jnp.zeros((R, Cout), jnp.float32)
    for ky in range(3):                                        # dy = ky - 1
        base = PAD + (ky - 1) * Wp
        # Fuse the three dx taps into one K = 3*Cin contraction instead of
        # three skinny K = Cin matmuls (better MXU fill, fewer pushes).
        patch = jnp.concatenate(
            [a_ext[base + dx - 1:base + dx - 1 + R, :] for dx in range(3)],
            axis=-1)                                           # (R, 3*Cin)
        acc = acc + jnp.dot(patch,
                            w_mat[ky * 3 * Cin:(ky + 1) * 3 * Cin, :],
                            preferred_element_type=jnp.float32)
    return acc + b_row


def _espcn_kernel(x1_ref, mask_ref, w1_ref, b1_ref, w2_ref, b2_ref,
                  w3_ref, b3_ref, o_ref, *, Wp, R, PAD):
    mask = mask_ref[...]                         # (R, 1): 1.0 on interior px
    x1 = x1_ref[0]                               # (R, K1p) layer-1 im2col rows

    # Layer 1: 5x5 conv as a single fat-K matmul, + bias + tanh, halo zeroed.
    a = jnp.dot(x1, w1_ref[...], preferred_element_type=jnp.float32)
    a = jnp.tanh(a + b1_ref[...]) * mask         # (R, 64)

    # Layer 2: 3x3 conv + bias + tanh, halo zeroed again.
    a = _conv3x3_flat(a, w2_ref[...], b2_ref[...], Wp=Wp, R=R, PAD=PAD)
    a = jnp.tanh(a) * mask                       # (R, 32)

    # Layer 3: 3x3 conv (linear).  Clip commutes with pixel-shuffle, so clip
    # here; the wrapper only crops/permutes afterwards.
    h = _conv3x3_flat(a, w3_ref[...], b3_ref[...], Wp=Wp, R=R, PAD=PAD)
    o_ref[0] = jnp.clip(h, 0.0, 1.0)             # (R, 3*scale**2)


# --------------------------------------------------------------------------
# Wrapper (host-side layout plumbing + pallas_call)
# --------------------------------------------------------------------------
def _pixel_shuffle_nhwc_to_nchw(x, scale):
    """x: (N, H, W, C*scale*scale), channel index c*scale^2 + i*scale + j."""
    N, H, W, CS = x.shape
    C = CS // (scale * scale)
    x = x.reshape(N, H, W, C, scale, scale)
    x = jnp.transpose(x, (0, 3, 1, 4, 2, 5))     # (N, C, H, s, W, s)
    return x.reshape(N, C, H * scale, W * scale)


def espcn_pallas_forward(x_nchw, params, scale):
    w1, b1, w2, b2, w3, b3 = params              # w: HWIO, b: (Cout,)
    N, Cin, H, W = x_nchw.shape
    k1 = w1.shape[0]                             # 5
    c1 = w1.shape[-1]                            # 64
    c2 = w2.shape[-1]                            # 32
    c3 = w3.shape[-1]                            # 3 * scale^2
    p1 = k1 // 2

    # Shared padded flat grid for the in-kernel 3x3 layers: 1-pixel halo plus
    # extra bottom rows so R is a multiple of 8 (keeps every in-kernel concat
    # sublane-aligned).
    Wp = W + 2
    Hp = H + 2
    while (Hp * Wp) % 8 != 0:
        Hp += 1
    R = Hp * Wp
    PAD = ((Wp + 1 + 7) // 8) * 8                # row extension for tap shifts

    # ---- host-side, one-off, tiny preprocessing ----
    x = jnp.transpose(x_nchw, (0, 2, 3, 1)).astype(jnp.float32)   # NHWC
    # im2col for the 5x5 / Cin=3 layer: one dense K instead of 25 K=3 taps.
    xp = jnp.pad(x, ((0, 0), (p1, p1), (p1, p1), (0, 0)))
    cols = [xp[:, dy:dy + H, dx:dx + W, :]
            for dy in range(k1) for dx in range(k1)]
    x1 = jnp.concatenate(cols, axis=-1)                           # (N,H,W,75)
    # Embed on the shared padded grid and flatten row-major.
    x1 = jnp.pad(x1, ((0, 0), (1, Hp - H - 1), (1, Wp - W - 1), (0, 0)))
    x1 = x1.reshape(N, R, k1 * k1 * Cin)

    # Pad layer-1 K to a multiple of 8 (zero columns / zero weight rows).
    K1 = k1 * k1 * Cin
    K1p = ((K1 + 7) // 8) * 8
    w1m = w1.reshape(K1, c1)
    if K1p != K1:
        x1 = jnp.pad(x1, ((0, 0), (0, 0), (0, K1p - K1)))
        w1m = jnp.pad(w1m, ((0, K1p - K1), (0, 0)))

    mask = jnp.pad(jnp.ones((H, W), jnp.float32),
                   ((1, Hp - H - 1), (1, Wp - W - 1))).reshape(R, 1)

    # Pack 3x3 weights as matmul operands, rows ordered (dy, dx, cin).
    w2m = w2.reshape(9 * c1, c2)
    w3m = w3.reshape(9 * c2, c3)
    b1r = b1.reshape(1, c1)
    b2r = b2.reshape(1, c2)
    b3r = b3.reshape(1, c3)

    kernel = functools.partial(_espcn_kernel, Wp=Wp, R=R, PAD=PAD)
    out_flat = pl.pallas_call(
        kernel,
        out_shape=jax.ShapeDtypeStruct((N, R, c3), jnp.float32),
        grid=(N,),
        in_specs=[
            pl.BlockSpec((1, R, K1p), lambda n: (n, 0, 0)),
            pl.BlockSpec((R, 1), lambda n: (0, 0)),
            pl.BlockSpec((K1p, c1), lambda n: (0, 0)),
            pl.BlockSpec((1, c1), lambda n: (0, 0)),
            pl.BlockSpec((9 * c1, c2), lambda n: (0, 0)),
            pl.BlockSpec((1, c2), lambda n: (0, 0)),
            pl.BlockSpec((9 * c2, c3), lambda n: (0, 0)),
            pl.BlockSpec((1, c3), lambda n: (0, 0)),
        ],
        out_specs=pl.BlockSpec((1, R, c3), lambda n: (n, 0, 0)),
        compiler_params=pltpu.CompilerParams(
            dimension_semantics=("parallel",)),
    )(x1, mask, w1m, b1r, w2m, b2r, w3m, b3r)

    # Crop interior, pixel-shuffle, back to NCHW (clip already applied).
    out = out_flat.reshape(N, Hp, Wp, c3)[:, 1:H + 1, 1:W + 1, :]
    return _pixel_shuffle_nhwc_to_nchw(out, scale)


# --------------------------------------------------------------------------
# Pure-JAX reference (for correctness check) and parameter init
# --------------------------------------------------------------------------
def espcn_reference(x_nchw, params, scale):
    w1, b1, w2, b2, w3, b3 = params
    dn = ('NHWC', 'HWIO', 'NHWC')
    prec = lax.Precision.HIGHEST
    x = jnp.transpose(x_nchw, (0, 2, 3, 1)).astype(jnp.float32)
    h = jnp.tanh(lax.conv_general_dilated(x, w1, (1, 1), 'SAME',
                                          dimension_numbers=dn,
                                          precision=prec) + b1)
    h = jnp.tanh(lax.conv_general_dilated(h, w2, (1, 1), 'SAME',
                                          dimension_numbers=dn,
                                          precision=prec) + b2)
    h = lax.conv_general_dilated(h, w3, (1, 1), 'SAME',
                                 dimension_numbers=dn, precision=prec) + b3
    y = _pixel_shuffle_nhwc_to_nchw(h, scale)
    return jnp.clip(y, 0.0, 1.0)


def init_espcn_params(key, scale):
    """Deterministic PyTorch-like (fan-in uniform) init; weights are HWIO."""
    dims = [(3, 64, 5), (64, 32, 3), (32, 3 * scale * scale, 3)]
    params = []
    for cin, cout, k in dims:
        key, kw, kb = jax.random.split(key, 3)
        bound = (cin * k * k) ** -0.5
        w = jax.random.uniform(kw, (k, k, cin, cout), jnp.float32,
                               -bound, bound)
        b = jax.random.uniform(kb, (cout,), jnp.float32, -bound, bound)
        params += [w, b]
    return tuple(params)


if __name__ == "__main__":
    scale = 2
    key = jax.random.PRNGKey(0)
    k_in, k_params = jax.random.split(key)

    # Small deterministic input consistent with ESPCN: batch=2, C=3, 16x16.
    x = jax.random.uniform(k_in, (2, 3, 16, 16), jnp.float32)
    params = init_espcn_params(k_params, scale)

    fwd = jax.jit(functools.partial(espcn_pallas_forward,
                                    params=params, scale=scale))
    y = fwd(x)
    jax.block_until_ready(y)

    y_ref = jax.jit(functools.partial(espcn_reference,
                                      params=params, scale=scale))(x)
    jax.block_until_ready(y_ref)

    assert y.shape == (2, 3, 16 * scale, 16 * scale), y.shape
    assert bool(jnp.all(y >= 0.0)) and bool(jnp.all(y <= 1.0))
    max_err = float(jnp.max(jnp.abs(y - y_ref)))
    assert max_err < 2e-2, f"mismatch vs reference: max abs err = {max_err}"
    print("KERNEL_OK")
</pallas_src>

<mosaic_0001>
module attributes {stable_mosaic.version = 11 : i64} {
  func.func @_espcn_kernel(%arg0: i32, %arg1: memref<1x360x80xf32, #tpu.memory_space<vmem>>, %arg2: memref<360x1xf32, #tpu.memory_space<vmem>>, %arg3: memref<80x64xf32, #tpu.memory_space<vmem>>, %arg4: memref<1x64xf32, #tpu.memory_space<vmem>>, %arg5: memref<576x32xf32, #tpu.memory_space<vmem>>, %arg6: memref<1x32xf32, #tpu.memory_space<vmem>>, %arg7: memref<288x12xf32, #tpu.memory_space<vmem>>, %arg8: memref<1x12xf32, #tpu.memory_space<vmem>>, %arg9: memref<1x360x12xf32, #tpu.memory_space<vmem>>) attributes {dimension_semantics = [#tpu.dimension_semantics<parallel>], iteration_bounds = array<i64: 2>, scalar_prefetch = 0 : i64, scratch_operands = 0 : i64, tpu.core_type = #tpu.core_type<tc>, window_params = [{transform_indices = @transform_0, window_bounds = array<i64: 1, 360, 80>}, {pipeline_mode = #tpu.pipeline_mode<synchronous>, transform_indices = @transform_1, window_bounds = array<i64: 360, 1>}, {pipeline_mode = #tpu.pipeline_mode<synchronous>, transform_indices = @transform_2, window_bounds = array<i64: 80, 64>}, {pipeline_mode = #tpu.pipeline_mode<synchronous>, transform_indices = @transform_3, window_bounds = array<i64: 1, 64>}, {pipeline_mode = #tpu.pipeline_mode<synchronous>, transform_indices = @transform_4, window_bounds = array<i64: 576, 32>}, {pipeline_mode = #tpu.pipeline_mode<synchronous>, transform_indices = @transform_5, window_bounds = array<i64: 1, 32>}, {pipeline_mode = #tpu.pipeline_mode<synchronous>, transform_indices = @transform_6, window_bounds = array<i64: 288, 12>}, {pipeline_mode = #tpu.pipeline_mode<synchronous>, transform_indices = @transform_7, window_bounds = array<i64: 1, 12>}, {transform_indices = @transform_8, window_bounds = array<i64: 1, 360, 12>}]} {
    %c0 = arith.constant 0 : index
    %c0_0 = arith.constant 0 : index
    %0 = vector.load %arg2[%c0, %c0_0] : memref<360x1xf32, #tpu.memory_space<vmem>>, vector<360x1xf32>
    %c0_1 = arith.constant 0 : index
    %c0_2 = arith.constant 0 : index
    %c0_3 = arith.constant 0 : index
    %1 = vector.load %arg1[%c0_1, %c0_2, %c0_3] : memref<1x360x80xf32, #tpu.memory_space<vmem>>, vector<1x360x80xf32>
    %2 = vector.shape_cast %1 : vector<1x360x80xf32> to vector<360x80xf32>
    %c0_4 = arith.constant 0 : index
    %c0_5 = arith.constant 0 : index
    %3 = vector.load %arg3[%c0_4, %c0_5] : memref<80x64xf32, #tpu.memory_space<vmem>>, vector<80x64xf32>
    %cst = arith.constant dense<0.000000e+00> : vector<360x64xf32>
    %4 = tpu.matmul %2, %3, %cst {dimension_numbers = #tpu.dot_dimension_numbers<[1], [0], [0], [1], [0, 0, 1, 1], [], []>} : vector<360x80xf32>, vector<80x64xf32>, vector<360x64xf32> -> vector<360x64xf32>
    %c0_6 = arith.constant 0 : index
    %c0_7 = arith.constant 0 : index
    %5 = vector.load %arg4[%c0_6, %c0_7] : memref<1x64xf32, #tpu.memory_space<vmem>>, vector<1x64xf32>
    %6 = vector.broadcast %5 : vector<1x64xf32> to vector<360x64xf32>
    %7 = arith.addf %4, %6 : vector<360x64xf32>
    %8 = math.tanh %7 : vector<360x64xf32>
    %9 = vector.broadcast %0 : vector<360x1xf32> to vector<360x64xf32>
    %10 = arith.mulf %8, %9 : vector<360x64xf32>
    %c0_8 = arith.constant 0 : index
    %c0_9 = arith.constant 0 : index
    %11 = vector.load %arg5[%c0_8, %c0_9] : memref<576x32xf32, #tpu.memory_space<vmem>>, vector<576x32xf32>
    %c0_10 = arith.constant 0 : index
    %c0_11 = arith.constant 0 : index
    %12 = vector.load %arg6[%c0_10, %c0_11] : memref<1x32xf32, #tpu.memory_space<vmem>>, vector<1x32xf32>
    %cst_12 = arith.constant 0.000000e+00 : f32
    %13 = vector.broadcast %cst_12 : f32 to vector<24x64xf32>
    %14 = tpu.concatenate %13, %10, %13 in 0 : vector<24x64xf32>, vector<360x64xf32>, vector<24x64xf32> -> vector<408x64xf32>
    %cst_13 = arith.constant 0.000000e+00 : f32
    %15 = vector.broadcast %cst_13 : f32 to vector<360x32xf32>
    %16 = vector.extract_strided_slice %14 {offsets = [5, 0], sizes = [360, 64], strides = [1, 1]} : vector<408x64xf32> to vector<360x64xf32>
    %17 = vector.extract_strided_slice %14 {offsets = [6, 0], sizes = [360, 64], strides = [1, 1]} : vector<408x64xf32> to vector<360x64xf32>
    %18 = vector.extract_strided_slice %14 {offsets = [7, 0], sizes = [360, 64], strides = [1, 1]} : vector<408x64xf32> to vector<360x64xf32>
    %19 = tpu.concatenate %16, %17, %18 in 1 : vector<360x64xf32>, vector<360x64xf32>, vector<360x64xf32> -> vector<360x192xf32>
    %20 = vector.extract_strided_slice %11 {offsets = [0, 0], sizes = [192, 32], strides = [1, 1]} : vector<576x32xf32> to vector<192x32xf32>
    %cst_14 = arith.constant dense<0.000000e+00> : vector<360x32xf32>
    %21 = tpu.matmul %19, %20, %cst_14 {dimension_numbers = #tpu.dot_dimension_numbers<[1], [0], [0], [1], [0, 0, 1, 1], [], []>} : vector<360x192xf32>, vector<192x32xf32>, vector<360x32xf32> -> vector<360x32xf32>
    %22 = arith.addf %15, %21 : vector<360x32xf32>
    %23 = vector.extract_strided_slice %14 {offsets = [23, 0], sizes = [360, 64], strides = [1, 1]} : vector<408x64xf32> to vector<360x64xf32>
    %24 = vector.extract_strided_slice %14 {offsets = [24, 0], sizes = [360, 64], strides = [1, 1]} : vector<408x64xf32> to vector<360x64xf32>
    %25 = vector.extract_strided_slice %14 {offsets = [25, 0], sizes = [360, 64], strides = [1, 1]} : vector<408x64xf32> to vector<360x64xf32>
    %26 = tpu.concatenate %23, %24, %25 in 1 : vector<360x64xf32>, vector<360x64xf32>, vector<360x64xf32> -> vector<360x192xf32>
    %27 = vector.extract_strided_slice %11 {offsets = [192, 0], sizes = [192, 32], strides = [1, 1]} : vector<576x32xf32> to vector<192x32xf32>
    %cst_15 = arith.constant dense<0.000000e+00> : vector<360x32xf32>
    %28 = tpu.matmul %26, %27, %cst_15 {dimension_numbers = #tpu.dot_dimension_numbers<[1], [0], [0], [1], [0, 0, 1, 1], [], []>} : vector<360x192xf32>, vector<192x32xf32>, vector<360x32xf32> -> vector<360x32xf32>
    %29 = arith.addf %22, %28 : vector<360x32xf32>
    %30 = vector.extract_strided_slice %14 {offsets = [41, 0], sizes = [360, 64], strides = [1, 1]} : vector<408x64xf32> to vector<360x64xf32>
    %31 = vector.extract_strided_slice %14 {offsets = [42, 0], sizes = [360, 64], strides = [1, 1]} : vector<408x64xf32> to vector<360x64xf32>
    %32 = vector.extract_strided_slice %14 {offsets = [43, 0], sizes = [360, 64], strides = [1, 1]} : vector<408x64xf32> to vector<360x64xf32>
    %33 = tpu.concatenate %30, %31, %32 in 1 : vector<360x64xf32>, vector<360x64xf32>, vector<360x64xf32> -> vector<360x192xf32>
    %34 = vector.extract_strided_slice %11 {offsets = [384, 0], sizes = [192, 32], strides = [1, 1]} : vector<576x32xf32> to vector<192x32xf32>
    %cst_16 = arith.constant dense<0.000000e+00> : vector<360x32xf32>
    %35 = tpu.matmul %33, %34, %cst_16 {dimension_numbers = #tpu.dot_dimension_numbers<[1], [0], [0], [1], [0, 0, 1, 1], [], []>} : vector<360x192xf32>, vector<192x32xf32>, vector<360x32xf32> -> vector<360x32xf32>
    %36 = arith.addf %29, %35 : vector<360x32xf32>
    %37 = vector.broadcast %12 : vector<1x32xf32> to vector<360x32xf32>
    %38 = arith.addf %36, %37 : vector<360x32xf32>
    %39 = math.tanh %38 : vector<360x32xf32>
    %40 = vector.broadcast %0 : vector<360x1xf32> to vector<360x32xf32>
    %41 = arith.mulf %39, %40 : vector<360x32xf32>
    %c0_17 = arith.constant 0 : index
    %c0_18 = arith.constant 0 : index
    %42 = vector.load %arg7[%c0_17, %c0_18] : memref<288x12xf32, #tpu.memory_space<vmem>>, vector<288x12xf32>
    %c0_19 = arith.constant 0 : index
    %c0_20 = arith.constant 0 : index
    %43 = vector.load %arg8[%c0_19, %c0_20] : memref<1x12xf32, #tpu.memory_space<vmem>>, vector<1x12xf32>
    %cst_21 = arith.constant 0.000000e+00 : f32
    %44 = vector.broadcast %cst_21 : f32 to vector<24x32xf32>
    %45 = tpu.concatenate %44, %41, %44 in 0 : vector<24x32xf32>, vector<360x32xf32>, vector<24x32xf32> -> vector<408x32xf32>
    %cst_22 = arith.constant 0.000000e+00 : f32
    %46 = vector.broadcast %cst_22 : f32 to vector<360x12xf32>
    %47 = vector.extract_strided_slice %45 {offsets = [5, 0], sizes = [360, 32], strides = [1, 1]} : vector<408x32xf32> to vector<360x32xf32>
    %48 = vector.extract_strided_slice %45 {offsets = [6, 0], sizes = [360, 32], strides = [1, 1]} : vector<408x32xf32> to vector<360x32xf32>
    %49 = vector.extract_strided_slice %45 {offsets = [7, 0], sizes = [360, 32], strides = [1, 1]} : vector<408x32xf32> to vector<360x32xf32>
    %50 = tpu.concatenate %47, %48, %49 in 1 : vector<360x32xf32>, vector<360x32xf32>, vector<360x32xf32> -> vector<360x96xf32>
    %51 = vector.extract_strided_slice %42 {offsets = [0, 0], sizes = [96, 12], strides = [1, 1]} : vector<288x12xf32> to vector<96x12xf32>
    %cst_23 = arith.constant dense<0.000000e+00> : vector<360x12xf32>
    %52 = tpu.matmul %50, %51, %cst_23 {dimension_numbers = #tpu.dot_dimension_numbers<[1], [0], [0], [1], [0, 0, 1, 1], [], []>} : vector<360x96xf32>, vector<96x12xf32>, vector<360x12xf32> -> vector<360x12xf32>
    %53 = arith.addf %46, %52 : vector<360x12xf32>
    %54 = vector.extract_strided_slice %45 {offsets = [23, 0], sizes = [360, 32], strides = [1, 1]} : vector<408x32xf32> to vector<360x32xf32>
    %55 = vector.extract_strided_slice %45 {offsets = [24, 0], sizes = [360, 32], strides = [1, 1]} : vector<408x32xf32> to vector<360x32xf32>
    %56 = vector.extract_strided_slice %45 {offsets = [25, 0], sizes = [360, 32], strides = [1, 1]} : vector<408x32xf32> to vector<360x32xf32>
    %57 = tpu.concatenate %54, %55, %56 in 1 : vector<360x32xf32>, vector<360x32xf32>, vector<360x32xf32> -> vector<360x96xf32>
    %58 = vector.extract_strided_slice %42 {offsets = [96, 0], sizes = [96, 12], strides = [1, 1]} : vector<288x12xf32> to vector<96x12xf32>
    %cst_24 = arith.constant dense<0.000000e+00> : vector<360x12xf32>
    %59 = tpu.matmul %57, %58, %cst_24 {dimension_numbers = #tpu.dot_dimension_numbers<[1], [0], [0], [1], [0, 0, 1, 1], [], []>} : vector<360x96xf32>, vector<96x12xf32>, vector<360x12xf32> -> vector<360x12xf32>
    %60 = arith.addf %53, %59 : vector<360x12xf32>
    %61 = vector.extract_strided_slice %45 {offsets = [41, 0], sizes = [360, 32], strides = [1, 1]} : vector<408x32xf32> to vector<360x32xf32>
    %62 = vector.extract_strided_slice %45 {offsets = [42, 0], sizes = [360, 32], strides = [1, 1]} : vector<408x32xf32> to vector<360x32xf32>
    %63 = vector.extract_strided_slice %45 {offsets = [43, 0], sizes = [360, 32], strides = [1, 1]} : vector<408x32xf32> to vector<360x32xf32>
    %64 = tpu.concatenate %61, %62, %63 in 1 : vector<360x32xf32>, vector<360x32xf32>, vector<360x32xf32> -> vector<360x96xf32>
    %65 = vector.extract_strided_slice %42 {offsets = [192, 0], sizes = [96, 12], strides = [1, 1]} : vector<288x12xf32> to vector<96x12xf32>
    %cst_25 = arith.constant dense<0.000000e+00> : vector<360x12xf32>
    %66 = tpu.matmul %64, %65, %cst_25 {dimension_numbers = #tpu.dot_dimension_numbers<[1], [0], [0], [1], [0, 0, 1, 1], [], []>} : vector<360x96xf32>, vector<96x12xf32>, vector<360x12xf32> -> vector<360x12xf32>
    %67 = arith.addf %60, %66 : vector<360x12xf32>
    %68 = vector.broadcast %43 : vector<1x12xf32> to vector<360x12xf32>
    %69 = arith.addf %67, %68 : vector<360x12xf32>
    %cst_26 = arith.constant 0.000000e+00 : f32
    %cst_27 = arith.constant 1.000000e+00 : f32
    %70 = vector.broadcast %cst_26 : f32 to vector<360x12xf32>
    %71 = arith.maximumf %70, %69 : vector<360x12xf32>
    %72 = vector.broadcast %cst_27 : f32 to vector<360x12xf32>
    %73 = arith.minimumf %72, %71 : vector<360x12xf32>
    %c0_28 = arith.constant 0 : index
    %c0_29 = arith.constant 0 : index
    %c0_30 = arith.constant 0 : index
    %74 = vector.load %arg9[%c0_28, %c0_29, %c0_30] : memref<1x360x12xf32, #tpu.memory_space<vmem>>, vector<1x360x12xf32>
    %75 = vector.shape_cast %74 : vector<1x360x12xf32> to vector<360x12xf32>
    %76 = vector.shape_cast %73 : vector<360x12xf32> to vector<1x360x12xf32>
    tpu.vector_store %arg9[%c0_28, %c0_29, %c0_30], %76 {strides = array<i32>} : memref<1x360x12xf32, #tpu.memory_space<vmem>>, vector<1x360x12xf32>,
    return
  }
  func.func @transform_0(%arg0: i32) -> (i32, i32, i32) {
    %c0_i32 = arith.constant 0 : i32
    %c0_i32_0 = arith.constant 0 : i32
    %c0_i32_1 = arith.constant 0 : i32
    return %arg0, %c0_i32, %c0_i32_0 : i32, i32, i32
  }
  func.func @transform_1(%arg0: i32) -> (i32, i32) {
    %c0_i32 = arith.constant 0 : i32
    %c0_i32_0 = arith.constant 0 : i32
    %c0_i32_1 = arith.constant 0 : i32
    return %c0_i32, %c0_i32_0 : i32, i32
  }
  func.func @transform_2(%arg0: i32) -> (i32, i32) {
    %c0_i32 = arith.constant 0 : i32
    %c0_i32_0 = arith.constant 0 : i32
    %c0_i32_1 = arith.constant 0 : i32
    return %c0_i32, %c0_i32_0 : i32, i32
  }
  func.func @transform_3(%arg0: i32) -> (i32, i32) {
    %c0_i32 = arith.constant 0 : i32
    %c0_i32_0 = arith.constant 0 : i32
    %c0_i32_1 = arith.constant 0 : i32
    return %c0_i32, %c0_i32_0 : i32, i32
  }
  func.func @transform_4(%arg0: i32) -> (i32, i32) {
    %c0_i32 = arith.constant 0 : i32
    %c0_i32_0 = arith.constant 0 : i32
    %c0_i32_1 = arith.constant 0 : i32
    return %c0_i32, %c0_i32_0 : i32, i32
  }
  func.func @transform_5(%arg0: i32) -> (i32, i32) {
    %c0_i32 = arith.constant 0 : i32
    %c0_i32_0 = arith.constant 0 : i32
    %c0_i32_1 = arith.constant 0 : i32
    return %c0_i32, %c0_i32_0 : i32, i32
  }
  func.func @transform_6(%arg0: i32) -> (i32, i32) {
    %c0_i32 = arith.constant 0 : i32
    %c0_i32_0 = arith.constant 0 : i32
    %c0_i32_1 = arith.constant 0 : i32
    return %c0_i32, %c0_i32_0 : i32, i32
  }
  func.func @transform_7(%arg0: i32) -> (i32, i32) {
    %c0_i32 = arith.constant 0 : i32
    %c0_i32_0 = arith.constant 0 : i32
    %c0_i32_1 = arith.constant 0 : i32
    return %c0_i32, %c0_i32_0 : i32, i32
  }
  func.func @transform_8(%arg0: i32) -> (i32, i32, i32) {
    %c0_i32 = arith.constant 0 : i32
    %c0_i32_0 = arith.constant 0 : i32
    %c0_i32_1 = arith.constant 0 : i32
    return %arg0, %c0_i32, %c0_i32_0 : i32, i32, i32
  }
}

</mosaic_0001>

<llo_original>
// kernel: espcn_pallas_forward.1
$region0: #{espcn_pallas_forward.1}
  #allocation0 [shape = 'u32[]', space=smem, size = 0x4, offset = 0x4, fixed_abs, tag = 'smem constant byte address 0x4 - core index']
  #allocation1 [shape = 'u32[144,128]{1,0:T(1,128)}', space=vmem, size = 0x12000, scoped, tag = 'internal scratch']
  %s0 = inlined_call_operand.vmem [shape: f32[2,360,80], index: 0, kind: input, shape index: {}]
  %s1 = inlined_call_operand.vmem [shape: f32[360,1], index: 1, kind: input, shape index: {}]
  %s2 = inlined_call_operand.vmem [shape: f32[80,64], index: 2, kind: input, shape index: {}]
  %s3 = inlined_call_operand.vmem [shape: f32[1,64], index: 3, kind: input, shape index: {}]
  %s4 = inlined_call_operand.vmem [shape: f32[576,32], index: 4, kind: input, shape index: {}]
  %s5 = inlined_call_operand.vmem [shape: f32[1,32], index: 5, kind: input, shape index: {}]
  %s6 = inlined_call_operand.vmem [shape: f32[288,12], index: 6, kind: input, shape index: {}]
  %s7 = inlined_call_operand.vmem [shape: f32[1,12], index: 7, kind: input, shape index: {}]
  %s8 = inlined_call_operand.vmem [shape: f32[2,360,12], index: 8, kind: output, shape index: {}]
  %s9 = sld [smem:[#allocation0]]
  $region65: #{espcn_pallas_forward.1} parent=0
    _
  %s11 = ssub.s32 1, %s9
  %s12 = scalar_select 0, %s11, %s9
  loop: start=0, step=1, limit=4
  $region2: #{espcn_pallas_forward.1} parent=0 // loop_pre_header
    _
  $region3: #{espcn_pallas_forward.1} parent=0 // loop_header
    %s14 = sphi 0, %s18
    %p15 = scmp.ge.s32.totalorder %s14, 4
    %s24 = sphi 0, %s26
    %s27 = sphi 0, %s24
    %s28 = sphi 0, %s27
    %s44 = sphi 0, %s28
    %s48 = sphi 0, %s48
    %s50 = sphi 0, %s48
    %s51 = sphi 0, %s50
    %s65 = sphi 0, %s51
    %s69 = sphi 0, %s69
    %s71 = sphi 0, %s69
    %s72 = sphi 0, %s71
    %s86 = sphi 0, %s72
    %s90 = sphi 0, %s90
    %s92 = sphi 0, %s90
    %s93 = sphi 0, %s92
    %s107 = sphi 0, %s93
    %s111 = sphi 0, %s111
    %s113 = sphi 0, %s111
    %s114 = sphi 0, %s113
    %s128 = sphi 0, %s114
    %s132 = sphi 0, %s132
    %s134 = sphi 0, %s132
    %s135 = sphi 0, %s134
    %s149 = sphi 0, %s135
    %s153 = sphi 0, %s153
    %s155 = sphi 0, %s153
    %s156 = sphi 0, %s155
    %s170 = sphi 0, %s156
    %s174 = sphi 0, %s174
    %s176 = sphi 0, %s174
    %s177 = sphi 0, %s176
    %s191 = sphi 0, %s177
    %s197 = sphi 0, %s199
    %s200 = sphi 0, %s197
    %s201 = sphi 0, %s200
    %s217 = sphi 0, %s201
  $region4: #{espcn_pallas_forward.1} parent=0 // loop_header_branch
    %17 = sbr.rel (%p15) target = $region8
  $region5: #{espcn_pallas_forward.1} parent=0 // loop_body
    %s19 = ssub.s32 %s14, 1
    %s20 = ssub.s32 %s14, 2
    %s21 = sadd.s32 %s14, 1
    %s22 = ssub.s32 %s14, %s21
    %p23 = scmp.eq.s32.totalorder %s22, 0
    %s25 = sadd.s32 %s24, 1
    %s26 = scalar_select %p23, %s24, %s25
    %p29 = pneg %p23
    %p30 = scmp.eq.s32.totalorder %s14, 1
    %p31 = por %p29, %p30
    %p32 = scmp.ne.s32.totalorder %s24, %s27
    %p33 = scmp.eq.s32.totalorder %s14, 0
    %p34 = por %p32, %p33
    %p35 = scmp.ne.s32.totalorder %s24, %s27
    %p36 = scmp.eq.s32.totalorder %s19, 1
    %p37 = por %p35, %p36
    %p38 = scmp.ne.s32.totalorder %s27, %s28
    %p39 = scmp.eq.s32.totalorder %s19, 0
    %p40 = por %p38, %p39
    %p41 = scmp.ne.s32.totalorder %s27, %s28
    %p42 = scmp.eq.s32.totalorder %s20, 1
    %p43 = por %p41, %p42
    %p45 = scmp.ne.s32.totalorder %s28, %s44
    %p46 = scmp.eq.s32.totalorder %s20, 0
    %p47 = por %p45, %p46
    %s49 = sadd.s32 %s48, 1
    %p52 = scmp.eq.s32.totalorder %s14, 1
    %p53 = scmp.ne.s32.totalorder %s48, %s50
    %p54 = scmp.eq.s32.totalorder %s14, 0
    %p55 = por %p53, %p54
    %p56 = scmp.ne.s32.totalorder %s48, %s50
    %p57 = scmp.eq.s32.totalorder %s19, 1
    %p58 = por %p56, %p57
    %p59 = scmp.ne.s32.totalorder %s50, %s51
    %p60 = scmp.eq.s32.totalorder %s19, 0
    %p61 = por %p59, %p60
    %p62 = scmp.ne.s32.totalorder %s50, %s51
    %p63 = scmp.eq.s32.totalorder %s20, 1
    %p64 = por %p62, %p63
    %p66 = scmp.ne.s32.totalorder %s51, %s65
    %p67 = scmp.eq.s32.totalorder %s20, 0
    %p68 = por %p66, %p67
    %s70 = sadd.s32 %s69, 1
    %p73 = scmp.eq.s32.totalorder %s14, 1
    %p74 = scmp.ne.s32.totalorder %s69, %s71
    %p75 = scmp.eq.s32.totalorder %s14, 0
    %p76 = por %p74, %p75
    %p77 = scmp.ne.s32.totalorder %s69, %s71
    %p78 = scmp.eq.s32.totalorder %s19, 1
    %p79 = por %p77, %p78
    %p80 = scmp.ne.s32.totalorder %s71, %s72
    %p81 = scmp.eq.s32.totalorder %s19, 0
    %p82 = por %p80, %p81
    %p83 = scmp.ne.s32.totalorder %s71, %s72
    %p84 = scmp.eq.s32.totalorder %s20, 1
    %p85 = por %p83, %p84
    %p87 = scmp.ne.s32.totalorder %s72, %s86
    %p88 = scmp.eq.s32.totalorder %s20, 0
    %p89 = por %p87, %p88
    %s91 = sadd.s32 %s90, 1
    %p94 = scmp.eq.s32.totalorder %s14, 1
    %p95 = scmp.ne.s32.totalorder %s90, %s92
    %p96 = scmp.eq.s32.totalorder %s14, 0
    %p97 = por %p95, %p96
    %p98 = scmp.ne.s32.totalorder %s90, %s92
    %p99 = scmp.eq.s32.totalorder %s19, 1
    %p100 = por %p98, %p99
    %p101 = scmp.ne.s32.totalorder %s92, %s93
    %p102 = scmp.eq.s32.totalorder %s19, 0
    %p103 = por %p101, %p102
    %p104 = scmp.ne.s32.totalorder %s92, %s93
    %p105 = scmp.eq.s32.totalorder %s20, 1
    %p106 = por %p104, %p105
    %p108 = scmp.ne.s32.totalorder %s93, %s107
    %p109 = scmp.eq.s32.totalorder %s20, 0
    %p110 = por %p108, %p109
    %s112 = sadd.s32 %s111, 1
    %p115 = scmp.eq.s32.totalorder %s14, 1
    %p116 = scmp.ne.s32.totalorder %s111, %s113
    %p117 = scmp.eq.s32.totalorder %s14, 0
    %p118 = por %p116, %p117
    %p119 = scmp.ne.s32.totalorder %s111, %s113
    %p120 = scmp.eq.s32.totalorder %s19, 1
    %p121 = por %p119, %p120
    %p122 = scmp.ne.s32.totalorder %s113, %s114
    %p123 = scmp.eq.s32.totalorder %s19, 0
    %p124 = por %p122, %p123
    %p125 = scmp.ne.s32.totalorder %s113, %s114
    %p126 = scmp.eq.s32.totalorder %s20, 1
    %p127 = por %p125, %p126
    %p129 = scmp.ne.s32.totalorder %s114, %s128
    %p130 = scmp.eq.s32.totalorder %s20, 0
    %p131 = por %p129, %p130
    %s133 = sadd.s32 %s132, 1
    %p136 = scmp.eq.s32.totalorder %s14, 1
    %p137 = scmp.ne.s32.totalorder %s132, %s134
    %p138 = scmp.eq.s32.totalorder %s14, 0
    %p139 = por %p137, %p138
    %p140 = scmp.ne.s32.totalorder %s132, %s134
    %p141 = scmp.eq.s32.totalorder %s19, 1
    %p142 = por %p140, %p141
    %p143 = scmp.ne.s32.totalorder %s134, %s135
    %p144 = scmp.eq.s32.totalorder %s19, 0
    %p145 = por %p143, %p144
    %p146 = scmp.ne.s32.totalorder %s134, %s135
    %p147 = scmp.eq.s32.totalorder %s20, 1
    %p148 = por %p146, %p147
    %p150 = scmp.ne.s32.totalorder %s135, %s149
    %p151 = scmp.eq.s32.totalorder %s20, 0
    %p152 = por %p150, %p151
    %s154 = sadd.s32 %s153, 1
    %p157 = scmp.eq.s32.totalorder %s14, 1
    %p158 = scmp.ne.s32.totalorder %s153, %s155
    %p159 = scmp.eq.s32.totalorder %s14, 0
    %p160 = por %p158, %p159
    %p161 = scmp.ne.s32.totalorder %s153, %s155
    %p162 = scmp.eq.s32.totalorder %s19, 1
    %p163 = por %p161, %p162
    %p164 = scmp.ne.s32.totalorder %s155, %s156
    %p165 = scmp.eq.s32.totalorder %s19, 0
    %p166 = por %p164, %p165
    %p167 = scmp.ne.s32.totalorder %s155, %s156
    %p168 = scmp.eq.s32.totalorder %s20, 1
    %p169 = por %p167, %p168
    %p171 = scmp.ne.s32.totalorder %s156, %s170
    %p172 = scmp.eq.s32.totalorder %s20, 0
    %p173 = por %p171, %p172
    %s175 = sadd.s32 %s174, 1
    %p178 = scmp.eq.s32.totalorder %s14, 1
    %p179 = scmp.ne.s32.totalorder %s174, %s176
    %p180 = scmp.eq.s32.totalorder %s14, 0
    %p181 = por %p179, %p180
    %p182 = scmp.ne.s32.totalorder %s174, %s176
    %p183 = scmp.eq.s32.totalorder %s19, 1
    %p184 = por %p182, %p183
    %p185 = scmp.ne.s32.totalorder %s176, %s177
    %p186 = scmp.eq.s32.totalorder %s19, 0
    %p187 = por %p185, %p186
    %p188 = scmp.ne.s32.totalorder %s176, %s177
    %p189 = scmp.eq.s32.totalorder %s20, 1
    %p190 = por %p188, %p189
    %p192 = scmp.ne.s32.totalorder %s177, %s191
    %p193 = scmp.eq.s32.totalorder %s20, 0
    %p194 = por %p192, %p193
    %s195 = ssub.s32 %s14, %s21
    %p196 = scmp.eq.s32.totalorder %s195, 0
    %s198 = sadd.s32 %s197, 1
    %s199 = scalar_select %p196, %s197, %s198
    %p202 = pneg %p196
    %p203 = scmp.eq.s32.totalorder %s14, 1
    %p204 = por %p202, %p203
    %p205 = scmp.ne.s32.totalorder %s197, %s200
    %p206 = scmp.eq.s32.totalorder %s14, 0
    %p207 = por %p205, %p206
    %p208 = scmp.ne.s32.totalorder %s197, %s200
    %p209 = scmp.eq.s32.totalorder %s19, 1
    %p210 = por %p208, %p209
    %p211 = scmp.ne.s32.totalorder %s200, %s201
    %p212 = scmp.eq.s32.totalorder %s19, 0
    %p213 = por %p211, %p212
    %p214 = scmp.ne.s32.totalorder %s200, %s201
    %p215 = scmp.eq.s32.totalorder %s20, 1
    %p216 = por %p214, %p215
    %p218 = scmp.ne.s32.totalorder %s201, %s217
    %p219 = scmp.eq.s32.totalorder %s20, 0
    %p220 = por %p218, %p219
    %p221 = scmp.le.s32.totalorder 1, %s14
    %p222 = scmp.lt.s32.totalorder %s14, 3
    %p223 = pnand %p221, %p222
    %p224 = pneg %p223
    // Predicated region
    $region9: #{espcn_pallas_forward.1} parent=5 // pred_check
      _
    $region10: #{espcn_pallas_forward.1} parent=5 // pred_check_branch
      %226 = sbr.rel (%p223) target = $region12
    $region11: #{espcn_pallas_forward.1} parent=5 // pred_region
      %s227 = ssub.s32 %s14, 1
      // Predicated region
      $region13: #{espcn_pallas_forward.1} parent=11 // pred_check
        %p228 = pneg %p61
      $region14: #{espcn_pallas_forward.1} parent=11 // pred_check_branch
        %230 = sbr.rel (%p228) target = $region16
      $region15: #{espcn_pallas_forward.1} parent=11 // pred_region
        _
      $region16: #{espcn_pallas_forward.1} parent=11 // pred_fallthru
        _
      // Predicated region
      $region17: #{espcn_pallas_forward.1} parent=11 // pred_check
        %p231 = pneg %p82
      $region18: #{espcn_pallas_forward.1} parent=11 // pred_check_branch
        %233 = sbr.rel (%p231) target = $region20
      $region19: #{espcn_pallas_forward.1} parent=11 // pred_region
        _
      $region20: #{espcn_pallas_forward.1} parent=11 // pred_fallthru
        _
      // Predicated region
      $region21: #{espcn_pallas_forward.1} parent=11 // pred_check
        %p234 = pneg %p103
      $region22: #{espcn_pallas_forward.1} parent=11 // pred_check_branch
        %236 = sbr.rel (%p234) target = $region24
      $region23: #{espcn_pallas_forward.1} parent=11 // pred_region
        _
      $region24: #{espcn_pallas_forward.1} parent=11 // pred_fallthru
        _
      // Predicated region
      $region25: #{espcn_pallas_forward.1} parent=11 // pred_check
        %p237 = pneg %p124
      $region26: #{espcn_pallas_forward.1} parent=11 // pred_check_branch
        %239 = sbr.rel (%p237) target = $region28
      $region27: #{espcn_pallas_forward.1} parent=11 // pred_region
        _
      $region28: #{espcn_pallas_forward.1} parent=11 // pred_fallthru
        _
      // Predicated region
      $region29: #{espcn_pallas_forward.1} parent=11 // pred_check
        %p240 = pneg %p145
      $region30: #{espcn_pallas_forward.1} parent=11 // pred_check_branch
        %242 = sbr.rel (%p240) target = $region32
      $region31: #{espcn_pallas_forward.1} parent=11 // pred_region
        _
      $region32: #{espcn_pallas_forward.1} parent=11 // pred_fallthru
        _
      // Predicated region
      $region33: #{espcn_pallas_forward.1} parent=11 // pred_check
        %p243 = pneg %p166
      $region34: #{espcn_pallas_forward.1} parent=11 // pred_check_branch
        %245 = sbr.rel (%p243) target = $region36
      $region35: #{espcn_pallas_forward.1} parent=11 // pred_region
        _
      $region36: #{espcn_pallas_forward.1} parent=11 // pred_fallthru
        _
      // Predicated region
      $region37: #{espcn_pallas_forward.1} parent=11 // pred_check
        %p246 = pneg %p187
      $region38: #{espcn_pallas_forward.1} parent=11 // pred_check_branch
        %248 = sbr.rel (%p246) target = $region40
      $region39: #{espcn_pallas_forward.1} parent=11 // pred_region
        _
      $region40: #{espcn_pallas_forward.1} parent=11 // pred_fallthru
        _
    $region12: #{espcn_pallas_forward.1} parent=5 // pred_fallthru
      _
    %p249 = scmp.lt.s32.totalorder %s14, 2
    // Predicated region
    $region41: #{espcn_pallas_forward.1} parent=5 // pred_check
      %p250 = pneg %p249
    $region42: #{espcn_pallas_forward.1} parent=5 // pred_check_branch
      %252 = sbr.rel (%p250) target = $region44
    $region43: #{espcn_pallas_forward.1} parent=5 // pred_region
      // Predicated region
      $region45: #{espcn_pallas_forward.1} parent=43 // pred_check
        %p253 = pneg %p34
      $region46: #{espcn_pallas_forward.1} parent=43 // pred_check_branch
        %255 = sbr.rel (%p253) target = $region48
      $region47: #{espcn_pallas_forward.1} parent=43 // pred_region
        %p256 = scmp.lt.s32.totalorder %s14, 1
        %s257 = scalar_select %p256, %s14, 1
        %s258 = smul.addr %s257, 45
        %s259 = smul.addr %s258, 8
        %s260 = scalar_lea.vmem %s0, %s259
      $region48: #{espcn_pallas_forward.1} parent=43 // pred_fallthru
        _
    $region44: #{espcn_pallas_forward.1} parent=5 // pred_fallthru
      _
    %p261 = scmp.le.s32.totalorder 1, %s14
    %p262 = scmp.lt.s32.totalorder %s14, 3
    %p263 = pnand %p261, %p262
    %p264 = pneg %p263
    // Predicated region
    $region49: #{espcn_pallas_forward.1} parent=5 // pred_check
      _
    $region50: #{espcn_pallas_forward.1} parent=5 // pred_check_branch
      %266 = sbr.rel (%p263) target = $region52
    $region51: #{espcn_pallas_forward.1} parent=5 // pred_region
      %s267 = ssub.s32 %s14, 1
      %p268 = scmp.lt.s32.totalorder %s19, 1
      %s269 = scalar_select %p268, %s19, 1
      %s270 = smul.addr %s269, 45
      %s271 = smul.addr %s270, 8
      %s272 = scalar_lea.vmem %s0, %s271
      %p273 = pneg %p40
      %p274 = pneg %p37
      %p275 = pneg %p61
      %p276 = pneg %p58
      %p277 = pneg %p82
      %p278 = pneg %p79
      %p279 = pneg %p103
      %p280 = pneg %p100
      %p281 = pneg %p124
      %p282 = pneg %p121
      %p283 = pneg %p145
      %p284 = pneg %p142
      %p285 = pneg %p166
      %p286 = pneg %p163
      %p287 = pneg %p187
      %p288 = pneg %p184
      %p289 = pneg %p213
      %p290 = pneg %p210
      %p291 = scmp.lt.s32.totalorder %s19, 1
      %s292 = scalar_select %p291, %s19, 1
      %s293 = smul.addr %s292, 45
      %s294 = smul.addr %s293, 8
      %s295 = scalar_lea.vmem %s8, %s294
      %p296 = scmp.lt.s32.totalorder %s19, 1
      %s297 = scalar_select %p296, %s19, 1
      %s298 = smul.addr %s297, 45
      %s299 = smul.addr %s298, 8
      %s300 = scalar_lea.vmem %s0, %s299
      %p301 = scmp.lt.s32.totalorder %s19, 1
      %s302 = scalar_select %p301, %s19, 1
      %s303 = smul.addr %s302, 45
      %s304 = smul.addr %s303, 8
      %s305 = scalar_lea.vmem %s8, %s304
      %v306 = vld [vmem:[%s1] sm:$0xff]
      %v307 = vld [vmem:[%s1 + $0x8] sm:$0xff]
      %v308 = vld [vmem:[%s1 + $0x10] sm:$0xff]
      %v309 = vld [vmem:[%s1 + $0x18] sm:$0xff]
      %v310 = vld [vmem:[%s1 + $0x20] sm:$0xff]
      %v311 = vld [vmem:[%s1 + $0x28] sm:$0xff]
      %v312 = vld [vmem:[%s1 + $0x30] sm:$0xff]
      %v313 = vld [vmem:[%s1 + $0x38] sm:$0xff]
      %v314 = vld [vmem:[%s1 + $0x40] sm:$0xff]
      %v315 = vld [vmem:[%s1 + $0x48] sm:$0xff]
      %v316 = vld [vmem:[%s1 + $0x50] sm:$0xff]
      %v317 = vld [vmem:[%s1 + $0x58] sm:$0xff]
      %v318 = vld [vmem:[%s1 + $0x60] sm:$0xff]
      %v319 = vld [vmem:[%s1 + $0x68] sm:$0xff]
      %v320 = vld [vmem:[%s1 + $0x70] sm:$0xff]
      %v321 = vld [vmem:[%s1 + $0x78] sm:$0xff]
      %v322 = vld [vmem:[%s1 + $0x80] sm:$0xff]
      %v323 = vld [vmem:[%s1 + $0x88] sm:$0xff]
      %v324 = vld [vmem:[%s1 + $0x90] sm:$0xff]
      %v325 = vld [vmem:[%s1 + $0x98] sm:$0xff]
      %v326 = vld [vmem:[%s1 + $0xa0] sm:$0xff]
      %v327 = vld [vmem:[%s1 + $0xa8] sm:$0xff]
      %v328 = vld [vmem:[%s1 + $0xb0] sm:$0xff]
      %v329 = vld [vmem:[%s1 + $0xb8] sm:$0xff]
      %v330 = vld [vmem:[%s1 + $0xc0] sm:$0xff]
      %v331 = vld [vmem:[%s1 + $0xc8] sm:$0xff]
      %v332 = vld [vmem:[%s1 + $0xd0] sm:$0xff]
      %v333 = vld [vmem:[%s1 + $0xd8] sm:$0xff]
      %v334 = vld [vmem:[%s1 + $0xe0] sm:$0xff]
      %v335 = vld [vmem:[%s1 + $0xe8] sm:$0xff]
      %v336 = vld [vmem:[%s1 + $0xf0] sm:$0xff]
      %v337 = vld [vmem:[%s1 + $0xf8] sm:$0xff]
      %v338 = vld [vmem:[%s1 + $0x100] sm:$0xff]
      %v339 = vld [vmem:[%s1 + $0x108] sm:$0xff]
      %v340 = vld [vmem:[%s1 + $0x110] sm:$0xff]
      %v341 = vld [vmem:[%s1 + $0x118] sm:$0xff]
      %v342 = vld [vmem:[%s1 + $0x120] sm:$0xff]
      %v343 = vld [vmem:[%s1 + $0x128] sm:$0xff]
      %v344 = vld [vmem:[%s1 + $0x130] sm:$0xff]
      %v345 = vld [vmem:[%s1 + $0x138] sm:$0xff]
      %v346 = vld [vmem:[%s1 + $0x140] sm:$0xff]
      %v347 = vld [vmem:[%s1 + $0x148] sm:$0xff]
      %v348 = vld [vmem:[%s1 + $0x150] sm:$0xff]
      %v349 = vld [vmem:[%s1 + $0x158] sm:$0xff]
      %v350 = vld [vmem:[%s1 + $0x160] sm:$0xff]
      %v351 = vld [vmem:[%s300] sm:$0xff]
      %v352 = vld [vmem:[%s300 + $0x8] sm:$0xff]
      %v353 = vld [vmem:[%s300 + $0x10] sm:$0xff]
      %v354 = vld [vmem:[%s300 + $0x18] sm:$0xff]
      %v355 = vld [vmem:[%s300 + $0x20] sm:$0xff]
      %v356 = vld [vmem:[%s300 + $0x28] sm:$0xff]
      %v357 = vld [vmem:[%s300 + $0x30] sm:$0xff]
      %v358 = vld [vmem:[%s300 + $0x38] sm:$0xff]
      %v359 = vld [vmem:[%s300 + $0x40] sm:$0xff]
      %v360 = vld [vmem:[%s300 + $0x48] sm:$0xff]
      %v361 = vld [vmem:[%s300 + $0x50] sm:$0xff]
      %v362 = vld [vmem:[%s300 + $0x58] sm:$0xff]
      %v363 = vld [vmem:[%s300 + $0x60] sm:$0xff]
      %v364 = vld [vmem:[%s300 + $0x68] sm:$0xff]
      %v365 = vld [vmem:[%s300 + $0x70] sm:$0xff]
      %v366 = vld [vmem:[%s300 + $0x78] sm:$0xff]
      %v367 = vld [vmem:[%s300 + $0x80] sm:$0xff]
      %v368 = vld [vmem:[%s300 + $0x88] sm:$0xff]
      %v369 = vld [vmem:[%s300 + $0x90] sm:$0xff]
      %v370 = vld [vmem:[%s300 + $0x98] sm:$0xff]
      %v371 = vld [vmem:[%s300 + $0xa0] sm:$0xff]
      %v372 = vld [vmem:[%s300 + $0xa8] sm:$0xff]
      %v373 = vld [vmem:[%s300 + $0xb0] sm:$0xff]
      %v374 = vld [vmem:[%s300 + $0xb8] sm:$0xff]
      %v375 = vld [vmem:[%s300 + $0xc0] sm:$0xff]
      %v376 = vld [vmem:[%s300 + $0xc8] sm:$0xff]
      %v377 = vld [vmem:[%s300 + $0xd0] sm:$0xff]
      %v378 = vld [vmem:[%s300 + $0xd8] sm:$0xff]
      %v379 = vld [vmem:[%s300 + $0xe0] sm:$0xff]
      %v380 = vld [vmem:[%s300 + $0xe8] sm:$0xff]
      %v381 = vld [vmem:[%s300 + $0xf0] sm:$0xff]
      %v382 = vld [vmem:[%s300 + $0xf8] sm:$0xff]
      %v383 = vld [vmem:[%s300 + $0x100] sm:$0xff]
      %v384 = vld [vmem:[%s300 + $0x108] sm:$0xff]
      %v385 = vld [vmem:[%s300 + $0x110] sm:$0xff]
      %v386 = vld [vmem:[%s300 + $0x118] sm:$0xff]
      %v387 = vld [vmem:[%s300 + $0x120] sm:$0xff]
      %v388 = vld [vmem:[%s300 + $0x128] sm:$0xff]
      %v389 = vld [vmem:[%s300 + $0x130] sm:$0xff]
      %v390 = vld [vmem:[%s300 + $0x138] sm:$0xff]
      %v391 = vld [vmem:[%s300 + $0x140] sm:$0xff]
      %v392 = vld [vmem:[%s300 + $0x148] sm:$0xff]
      %v393 = vld [vmem:[%s300 + $0x150] sm:$0xff]
      %v394 = vld [vmem:[%s300 + $0x158] sm:$0xff]
      %v395 = vld [vmem:[%s300 + $0x160] sm:$0xff]
      %v396 = vld [vmem:[%s2] sm:$0xff]
      %v397 = vld [vmem:[%s2 + $0x8] sm:$0xff]
      %v398 = vld [vmem:[%s2 + $0x10] sm:$0xff]
      %v399 = vld [vmem:[%s2 + $0x18] sm:$0xff]
      %v400 = vld [vmem:[%s2 + $0x20] sm:$0xff]
      %v401 = vld [vmem:[%s2 + $0x28] sm:$0xff]
      %v402 = vld [vmem:[%s2 + $0x30] sm:$0xff]
      %v403 = vld [vmem:[%s2 + $0x38] sm:$0xff]
      %v404 = vld [vmem:[%s2 + $0x40] sm:$0xff]
      %v405 = vld [vmem:[%s2 + $0x48] sm:$0xff]
      %v406 = vld [vmem:[%s3] sm:$0x1]
      %v408 = vlaneseq
      %v409 = vshrl.u32 %v408, 7
      %v410 = vsub.s32 0, %v409
      %v411 = vrot.slane %v406, %v410
      %vm413 = vcmask 654336
      %v415 = vsel %vm413, %v351, 0
      %v418 = vsel %vm413, %v352, 0
      %v421 = vsel %vm413, %v353, 0
      %v424 = vsel %vm413, %v354, 0
      %v427 = vsel %vm413, %v355, 0
      %v430 = vsel %vm413, %v356, 0
      %v433 = vsel %vm413, %v357, 0
      %v436 = vsel %vm413, %v358, 0
      %v439 = vsel %vm413, %v359, 0
      %v442 = vsel %vm413, %v360, 0
      %v445 = vsel %vm413, %v361, 0
      %v448 = vsel %vm413, %v362, 0
      %v451 = vsel %vm413, %v363, 0
      %v454 = vsel %vm413, %v364, 0
      %v457 = vsel %vm413, %v365, 0
      %v460 = vsel %vm413, %v366, 0
      %v463 = vsel %vm413, %v367, 0
      %v466 = vsel %vm413, %v368, 0
      %v469 = vsel %vm413, %v369, 0
      %v472 = vsel %vm413, %v370, 0
      %v475 = vsel %vm413, %v371, 0
      %v478 = vsel %vm413, %v372, 0
      %v481 = vsel %vm413, %v373, 0
      %v484 = vsel %vm413, %v374, 0
      %v487 = vsel %vm413, %v375, 0
      %v490 = vsel %vm413, %v376, 0
      %v493 = vsel %vm413, %v377, 0
      %v496 = vsel %vm413, %v378, 0
      %v499 = vsel %vm413, %v379, 0
      %v502 = vsel %vm413, %v380, 0
      %v505 = vsel %vm413, %v381, 0
      %v508 = vsel %vm413, %v382, 0
      %v511 = vsel %vm413, %v383, 0
      %v514 = vsel %vm413, %v384, 0
      %v517 = vsel %vm413, %v385, 0
      %v520 = vsel %vm413, %v386, 0
      %v523 = vsel %vm413, %v387, 0
      %v526 = vsel %vm413, %v388, 0
      %v529 = vsel %vm413, %v389, 0
      %v532 = vsel %vm413, %v390, 0
      %v535 = vsel %vm413, %v391, 0
      %v538 = vsel %vm413, %v392, 0
      %v541 = vsel %vm413, %v393, 0
      %v544 = vsel %vm413, %v394, 0
      %v547 = vsel %vm413, %v395, 0
      %549 = vmatprep.subr.mxu0 0.0
      %550 = vmatpush1.msra.mxu0 %v396
      %551 = vmatprep.subr.mxu0 0.0
      %552 = vmatpush1.msra.mxu0 %v397
      %553 = vmatprep.subr.mxu0 0.0
      %554 = vmatpush1.msra.mxu0 %v398
      %555 = vmatprep.subr.mxu0 0.0
      %556 = vmatpush1.msra.mxu0 %v399
      %557 = vmatprep.subr.mxu0 0.0
      %558 = vmatpush1.msra.mxu0 %v400
      %559 = vmatprep.subr.mxu0 0.0
      %560 = vmatpush1.msra.mxu0 %v401
      %561 = vmatprep.subr.mxu0 0.0
      %562 = vmatpush1.msra.mxu0 %v402
      %563 = vmatprep.subr.mxu0 0.0
      %564 = vmatpush1.msra.mxu0 %v403
      %565 = vmatprep.subr.mxu0 0.0
      %566 = vmatpush1.msra.mxu0 %v404
      %567 = vmatprep.subr.mxu0 0.0
      %568 = vmatpush1.msra.mxu0 %v405
      %569 = vmatprep.subr.mxu0 0.0
      %570 = vmatpush1.msra.mxu0 0.0
      %571 = vmatprep.subr.mxu0 0.0
      %572 = vmatpush1.msra.mxu0 0.0
      %573 = vmatprep.subr.mxu0 0.0
      %574 = vmatpush1.msra.mxu0 0.0
      %575 = vmatprep.subr.mxu0 0.0
      %576 = vmatpush1.msra.mxu0 0.0
      %577 = vmatprep.subr.mxu0 0.0
      %578 = vmatpush1.msra.mxu0 0.0
      %579 = vmatprep.subr.mxu0 0.0
      %580 = vmatpush1.msra.mxu0 0.0
      %581 = vmatprep.subr.mxu0 0.0
      %582 = vmatpush1.msra.mxu0 0.0
      %583 = vmatprep.subr.mxu0 0.0
      %584 = vmatpush1.msra.mxu0 0.0
      %585 = vmatprep.subr.mxu0 0.0
      %586 = vmatpush1.msra.mxu0 0.0
      %587 = vmatprep.subr.mxu0 0.0
      %588 = vmatpush1.msra.mxu0 0.0
      %589 = vmatprep.subr.mxu0 0.0
      %590 = vmatpush1.msra.mxu0 0.0
      %591 = vmatprep.subr.mxu0 0.0
      %592 = vmatpush1.msra.mxu0 0.0
      %593 = vmatprep.subr.mxu0 0.0
      %594 = vmatpush1.msra.mxu0 0.0
      %595 = vmatprep.subr.mxu0 0.0
      %596 = vmatpush1.msra.mxu0 0.0
      %597 = vmatprep.subr.mxu0 0.0
      %598 = vmatpush1.msra.mxu0 0.0
      %599 = vmatprep.subr.mxu0 0.0
      %600 = vmatpush1.msra.mxu0 0.0
      %601 = vmatprep.subr.mxu0 0.0
      %602 = vmatpush1.msra.mxu0 0.0
      %603 = vmatprep.subr.mxu0 0.0
      %604 = vmatpush1.msra.mxu0 0.0
      %605 = vmatprep.subr.mxu0 0.0
      %606 = vmatpush1.msra.mxu0 0.0
      %607 = vmatprep.subr.mxu0 0.0
      %608 = vmatpush1.msra.mxu0 0.0
      %609 = vmatprep.subr.mxu0 0.0
      %610 = vmatpush1.msra.mxu0 0.0
      %611 = vmatprep.subr.mxu0 0.0
      %612 = vmatpush1.msra.mxu0 0.0
      %613 = vmatprep.mubr.f32.mxu0 0.0
      %614 = vmatmul.mubr.f32.gmra.mrb[0].mxu0 %v415
      %v615 = vpop.f32.mrb[0].mxu0
      %v616 = vadd.f32 %v411, %v615
      %v617 = vpop.f32.mrb[0].mxu0
      %618 = vmatprep.mubr.f32.mxu0 0.0
      %619 = vmatmul.mubr.f32.gmra.mrb[0].mxu0 %v418
      %v620 = vpop.f32.mrb[0].mxu0
      %v621 = vadd.f32 %v411, %v620
      %v622 = vpop.f32.mrb[0].mxu0
      %623 = vmatprep.mubr.f32.mxu0 0.0
      %624 = vmatmul.mubr.f32.gmra.mrb[0].mxu0 %v421
      %v625 = vpop.f32.mrb[0].mxu0
      %v626 = vadd.f32 %v411, %v625
      %v627 = vpop.f32.mrb[0].mxu0
      %628 = vmatprep.mubr.f32.mxu0 0.0
      %629 = vmatmul.mubr.f32.gmra.mrb[0].mxu0 %v424
      %v630 = vpop.f32.mrb[0].mxu0
      %v631 = vadd.f32 %v411, %v630
      %v632 = vpop.f32.mrb[0].mxu0
      %633 = vmatprep.mubr.f32.mxu0 0.0
      %634 = vmatmul.mubr.f32.gmra.mrb[0].mxu0 %v427
      %v635 = vpop.f32.mrb[0].mxu0
      %v636 = vadd.f32 %v411, %v635
      %v637 = vpop.f32.mrb[0].mxu0
      %638 = vmatprep.mubr.f32.mxu0 0.0
      %639 = vmatmul.mubr.f32.gmra.mrb[0].mxu0 %v430
      %v640 = vpop.f32.mrb[0].mxu0
      %v641 = vadd.f32 %v411, %v640
      %v642 = vpop.f32.mrb[0].mxu0
      %643 = vmatprep.mubr.f32.mxu0 0.0
      %644 = vmatmul.mubr.f32.gmra.mrb[0].mxu0 %v433
      %v645 = vpop.f32.mrb[0].mxu0
      %v646 = vadd.f32 %v411, %v645
      %v647 = vpop.f32.mrb[0].mxu0
      %648 = vmatprep.mubr.f32.mxu0 0.0
      %649 = vmatmul.mubr.f32.gmra.mrb[0].mxu0 %v436
      %v650 = vpop.f32.mrb[0].mxu0
      %v651 = vadd.f32 %v411, %v650
      %v652 = vpop.f32.mrb[0].mxu0
      %653 = vmatprep.mubr.f32.mxu0 0.0
      %654 = vmatmul.mubr.f32.gmra.mrb[0].mxu0 %v439
      %v655 = vpop.f32.mrb[0].mxu0
      %v656 = vadd.f32 %v411, %v655
      %v657 = vpop.f32.mrb[0].mxu0
      %658 = vmatprep.mubr.f32.mxu0 0.0
      %659 = vmatmul.mubr.f32.gmra.mrb[0].mxu0 %v442
      %v660 = vpop.f32.mrb[0].mxu0
      %v661 = vadd.f32 %v411, %v660
      %v662 = vpop.f32.mrb[0].mxu0
      %663 = vmatprep.mubr.f32.mxu0 0.0
      %664 = vmatmul.mubr.f32.gmra.mrb[0].mxu0 %v445
      %v665 = vpop.f32.mrb[0].mxu0
      %v666 = vadd.f32 %v411, %v665
      %v667 = vpop.f32.mrb[0].mxu0
      %668 = vmatprep.mubr.f32.mxu0 0.0
      %669 = vmatmul.mubr.f32.gmra.mrb[0].mxu0 %v448
      %v670 = vpop.f32.mrb[0].mxu0
      %v671 = vadd.f32 %v411, %v670
      %v672 = vpop.f32.mrb[0].mxu0
      %673 = vmatprep.mubr.f32.mxu0 0.0
      %674 = vmatmul.mubr.f32.gmra.mrb[0].mxu0 %v451
      %v675 = vpop.f32.mrb[0].mxu0
      %v676 = vadd.f32 %v411, %v675
      %v677 = vpop.f32.mrb[0].mxu0
      %678 = vmatprep.mubr.f32.mxu0 0.0
      %679 = vmatmul.mubr.f32.gmra.mrb[0].mxu0 %v454
      %v680 = vpop.f32.mrb[0].mxu0
      %v681 = vadd.f32 %v411, %v680
      %v682 = vpop.f32.mrb[0].mxu0
      %683 = vmatprep.mubr.f32.mxu0 0.0
      %684 = vmatmul.mubr.f32.gmra.mrb[0].mxu0 %v457
      %v685 = vpop.f32.mrb[0].mxu0
      %v686 = vadd.f32 %v411, %v685
      %v687 = vpop.f32.mrb[0].mxu0
      %688 = vmatprep.mubr.f32.mxu0 0.0
      %689 = vmatmul.mubr.f32.gmra.mrb[0].mxu0 %v460
      %v690 = vpop.f32.mrb[0].mxu0
      %v691 = vadd.f32 %v411, %v690
      %v692 = vpop.f32.mrb[0].mxu0
      %693 = vmatprep.mubr.f32.mxu0 0.0
      %694 = vmatmul.mubr.f32.gmra.mrb[0].mxu0 %v463
      %v695 = vpop.f32.mrb[0].mxu0
      %v696 = vadd.f32 %v411, %v695
      %v697 = vpop.f32.mrb[0].mxu0
      %698 = vmatprep.mubr.f32.mxu0 0.0
      %699 = vmatmul.mubr.f32.gmra.mrb[0].mxu0 %v466
      %v700 = vpop.f32.mrb[0].mxu0
      %v701 = vadd.f32 %v411, %v700
      %v702 = vpop.f32.mrb[0].mxu0
      %703 = vmatprep.mubr.f32.mxu0 0.0
      %704 = vmatmul.mubr.f32.gmra.mrb[0].mxu0 %v469
      %v705 = vpop.f32.mrb[0].mxu0
      %v706 = vadd.f32 %v411, %v705
      %v707 = vpop.f32.mrb[0].mxu0
      %708 = vmatprep.mubr.f32.mxu0 0.0
      %709 = vmatmul.mubr.f32.gmra.mrb[0].mxu0 %v472
      %v710 = vpop.f32.mrb[0].mxu0
      %v711 = vadd.f32 %v411, %v710
      %v712 = vpop.f32.mrb[0].mxu0
      %713 = vmatprep.mubr.f32.mxu0 0.0
      %714 = vmatmul.mubr.f32.gmra.mrb[0].mxu0 %v475
      %v715 = vpop.f32.mrb[0].mxu0
      %v716 = vadd.f32 %v411, %v715
      %v717 = vpop.f32.mrb[0].mxu0
      %718 = vmatprep.mubr.f32.mxu0 0.0
      %719 = vmatmul.mubr.f32.gmra.mrb[0].mxu0 %v478
      %v720 = vpop.f32.mrb[0].mxu0
      %v721 = vadd.f32 %v411, %v720
      %v722 = vpop.f32.mrb[0].mxu0
      %723 = vmatprep.mubr.f32.mxu0 0.0
      %724 = vmatmul.mubr.f32.gmra.mrb[0].mxu0 %v481
      %v725 = vpop.f32.mrb[0].mxu0
      %v726 = vadd.f32 %v411, %v725
      %v727 = vpop.f32.mrb[0].mxu0
      %728 = vmatprep.mubr.f32.mxu0 0.0
      %729 = vmatmul.mubr.f32.gmra.mrb[0].mxu0 %v484
      %v730 = vpop.f32.mrb[0].mxu0
      %v731 = vadd.f32 %v411, %v730
      %v732 = vpop.f32.mrb[0].mxu0
      %733 = vmatprep.mubr.f32.mxu0 0.0
      %734 = vmatmul.mubr.f32.gmra.mrb[0].mxu0 %v487
      %v735 = vpop.f32.mrb[0].mxu0
      %v736 = vadd.f32 %v411, %v735
      %v737 = vpop.f32.mrb[0].mxu0
      %738 = vmatprep.mubr.f32.mxu0 0.0
      %739 = vmatmul.mubr.f32.gmra.mrb[0].mxu0 %v490
      %v740 = vpop.f32.mrb[0].mxu0
      %v741 = vadd.f32 %v411, %v740
      %v742 = vpop.f32.mrb[0].mxu0
      %743 = vmatprep.mubr.f32.mxu0 0.0
      %744 = vmatmul.mubr.f32.gmra.mrb[0].mxu0 %v493
      %v745 = vpop.f32.mrb[0].mxu0
      %v746 = vadd.f32 %v411, %v745
      %v747 = vpop.f32.mrb[0].mxu0
      %748 = vmatprep.mubr.f32.mxu0 0.0
      %749 = vmatmul.mubr.f32.gmra.mrb[0].mxu0 %v496
      %v750 = vpop.f32.mrb[0].mxu0
      %v751 = vadd.f32 %v411, %v750
      %v752 = vpop.f32.mrb[0].mxu0
      %753 = vmatprep.mubr.f32.mxu0 0.0
      %754 = vmatmul.mubr.f32.gmra.mrb[0].mxu0 %v499
      %v755 = vpop.f32.mrb[0].mxu0
      %v756 = vadd.f32 %v411, %v755
      %v757 = vpop.f32.mrb[0].mxu0
      %758 = vmatprep.mubr.f32.mxu0 0.0
      %759 = vmatmul.mubr.f32.gmra.mrb[0].mxu0 %v502
      %v760 = vpop.f32.mrb[0].mxu0
      %v761 = vadd.f32 %v411, %v760
      %v762 = vpop.f32.mrb[0].mxu0
      %763 = vmatprep.mubr.f32.mxu0 0.0
      %764 = vmatmul.mubr.f32.gmra.mrb[0].mxu0 %v505
      %v765 = vpop.f32.mrb[0].mxu0
      %v766 = vadd.f32 %v411, %v765
      %v767 = vpop.f32.mrb[0].mxu0
      %768 = vmatprep.mubr.f32.mxu0 0.0
      %769 = vmatmul.mubr.f32.gmra.mrb[0].mxu0 %v508
      %v770 = vpop.f32.mrb[0].mxu0
      %v771 = vadd.f32 %v411, %v770
      %v772 = vpop.f32.mrb[0].mxu0
      %773 = vmatprep.mubr.f32.mxu0 0.0
      %774 = vmatmul.mubr.f32.gmra.mrb[0].mxu0 %v511
      %v775 = vpop.f32.mrb[0].mxu0
      %v776 = vadd.f32 %v411, %v775
      %v777 = vpop.f32.mrb[0].mxu0
      %778 = vmatprep.mubr.f32.mxu0 0.0
      %779 = vmatmul.mubr.f32.gmra.mrb[0].mxu0 %v514
      %v780 = vpop.f32.mrb[0].mxu0
      %v781 = vadd.f32 %v411, %v780
      %v782 = vpop.f32.mrb[0].mxu0
      %783 = vmatprep.mubr.f32.mxu0 0.0
      %784 = vmatmul.mubr.f32.gmra.mrb[0].mxu0 %v517
      %v785 = vpop.f32.mrb[0].mxu0
      %v786 = vadd.f32 %v411, %v785
      %v787 = vpop.f32.mrb[0].mxu0
      %788 = vmatprep.mubr.f32.mxu0 0.0
      %789 = vmatmul.mubr.f32.gmra.mrb[0].mxu0 %v520
      %v790 = vpop.f32.mrb[0].mxu0
      %v791 = vadd.f32 %v411, %v790
      %v792 = vpop.f32.mrb[0].mxu0
      %793 = vmatprep.mubr.f32.mxu0 0.0
      %794 = vmatmul.mubr.f32.gmra.mrb[0].mxu0 %v523
      %v795 = vpop.f32.mrb[0].mxu0
      %v796 = vadd.f32 %v411, %v795
      %v797 = vpop.f32.mrb[0].mxu0
      %798 = vmatprep.mubr.f32.mxu0 0.0
      %799 = vmatmul.mubr.f32.gmra.mrb[0].mxu0 %v526
      %v800 = vpop.f32.mrb[0].mxu0
      %v801 = vadd.f32 %v411, %v800
      %v802 = vpop.f32.mrb[0].mxu0
      %803 = vmatprep.mubr.f32.mxu0 0.0
      %804 = vmatmul.mubr.f32.gmra.mrb[0].mxu0 %v529
      %v805 = vpop.f32.mrb[0].mxu0
      %v806 = vadd.f32 %v411, %v805
      %v807 = vpop.f32.mrb[0].mxu0
      %808 = vmatprep.mubr.f32.mxu0 0.0
      %809 = vmatmul.mubr.f32.gmra.mrb[0].mxu0 %v532
      %v810 = vpop.f32.mrb[0].mxu0
      %v811 = vadd.f32 %v411, %v810
      %v812 = vpop.f32.mrb[0].mxu0
      %813 = vmatprep.mubr.f32.mxu0 0.0
      %814 = vmatmul.mubr.f32.gmra.mrb[0].mxu0 %v535
      %v815 = vpop.f32.mrb[0].mxu0
      %v816 = vadd.f32 %v411, %v815
      %v817 = vpop.f32.mrb[0].mxu0
      %818 = vmatprep.mubr.f32.mxu0 0.0
      %819 = vmatmul.mubr.f32.gmra.mrb[0].mxu0 %v538
      %v820 = vpop.f32.mrb[0].mxu0
      %v821 = vadd.f32 %v411, %v820
      %v822 = vpop.f32.mrb[0].mxu0
      %823 = vmatprep.mubr.f32.mxu0 0.0
      %824 = vmatmul.mubr.f32.gmra.mrb[0].mxu0 %v541
      %v825 = vpop.f32.mrb[0].mxu0
      %v826 = vadd.f32 %v411, %v825
      %v827 = vpop.f32.mrb[0].mxu0
      %828 = vmatprep.mubr.f32.mxu0 0.0
      %829 = vmatmul.mubr.f32.gmra.mrb[0].mxu0 %v544
      %v830 = vpop.f32.mrb[0].mxu0
      %v831 = vadd.f32 %v411, %v830
      %v832 = vpop.f32.mrb[0].mxu0
      %833 = vmatprep.mubr.f32.mxu0 0.0
      %834 = vmatmul.mubr.f32.gmra.mrb[0].mxu0 %v547
      %v835 = vpop.f32.mrb[0].mxu0
      %v836 = vadd.f32 %v411, %v835
      %v837 = vpop.f32.mrb[0].mxu0
      %838 = vdwg.mxu0
      %v839 = vtanh.pop %v616
      %v840 = vtanh.pop %v621
      %v841 = vtanh.pop %v626
      %v842 = vtanh.pop %v631
      %v843 = vtanh.pop %v636
      %v844 = vtanh.pop %v641
      %v845 = vtanh.pop %v646
      %v846 = vtanh.pop %v651
      %v847 = vtanh.pop %v656
      %v848 = vtanh.pop %v661
      %v849 = vtanh.pop %v666
      %v850 = vtanh.pop %v671
      %v851 = vtanh.pop %v676
      %v852 = vtanh.pop %v681
      %v853 = vtanh.pop %v686
      %v854 = vtanh.pop %v691
      %v855 = vtanh.pop %v696
      %v856 = vtanh.pop %v701
      %v857 = vtanh.pop %v706
      %v858 = vtanh.pop %v711
      %v859 = vtanh.pop %v716
      %v860 = vtanh.pop %v721
      %v861 = vtanh.pop %v726
      %v862 = vtanh.pop %v731
      %v863 = vtanh.pop %v736
      %v864 = vtanh.pop %v741
      %v865 = vtanh.pop %v746
      %v866 = vtanh.pop %v751
      %v867 = vtanh.pop %v756
      %v868 = vtanh.pop %v761
      %v869 = vtanh.pop %v766
      %v870 = vtanh.pop %v771
      %v871 = vtanh.pop %v776
      %v872 = vtanh.pop %v781
      %v873 = vtanh.pop %v786
      %v874 = vtanh.pop %v791
      %v875 = vtanh.pop %v796
      %v876 = vtanh.pop %v801
      %v877 = vtanh.pop %v806
      %v878 = vtanh.pop %v811
      %v879 = vtanh.pop %v816
      %v880 = vtanh.pop %v821
      %v881 = vtanh.pop %v826
      %v882 = vtanh.pop %v831
      %v883 = vtanh.pop %v836
      %885 = vset.pattern.permute.xlu0 0
      %886 = vperm.xlu0 %885, %v306
      %v887 = vpop.permute.xlu0 %886
      %890 = vset.pattern.permute.xlu0 0
      %891 = vperm.xlu0 %890, %v307
      %v892 = vpop.permute.xlu0 %891
      %895 = vset.pattern.permute.xlu0 0
      %896 = vperm.xlu0 %895, %v308
      %v897 = vpop.permute.xlu0 %896
      %900 = vset.pattern.permute.xlu0 0
      %901 = vperm.xlu0 %900, %v309
      %v902 = vpop.permute.xlu0 %901
      %905 = vset.pattern.permute.xlu0 0
      %906 = vperm.xlu0 %905, %v310
      %v907 = vpop.permute.xlu0 %906
      %910 = vset.pattern.permute.xlu0 0
      %911 = vperm.xlu0 %910, %v311
      %v912 = vpop.permute.xlu0 %911
      %915 = vset.pattern.permute.xlu0 0
      %916 = vperm.xlu0 %915, %v312
      %v917 = vpop.permute.xlu0 %916
      %920 = vset.pattern.permute.xlu0 0
      %921 = vperm.xlu0 %920, %v313
      %v922 = vpop.permute.xlu0 %921
      %925 = vset.pattern.permute.xlu0 0
      %926 = vperm.xlu0 %925, %v314
      %v927 = vpop.permute.xlu0 %926
      %930 = vset.pattern.permute.xlu0 0
      %931 = vperm.xlu0 %930, %v315
      %v932 = vpop.permute.xlu0 %931
      %935 = vset.pattern.permute.xlu0 0
      %936 = vperm.xlu0 %935, %v316
      %v937 = vpop.permute.xlu0 %936
      %940 = vset.pattern.permute.xlu0 0
      %941 = vperm.xlu0 %940, %v317
      %v942 = vpop.permute.xlu0 %941
      %945 = vset.pattern.permute.xlu0 0
      %946 = vperm.xlu0 %945, %v318
      %v947 = vpop.permute.xlu0 %946
      %950 = vset.pattern.permute.xlu0 0
      %951 = vperm.xlu0 %950, %v319
      %v952 = vpop.permute.xlu0 %951
      %955 = vset.pattern.permute.xlu0 0
      %956 = vperm.xlu0 %955, %v320
      %v957 = vpop.permute.xlu0 %956
      %960 = vset.pattern.permute.xlu0 0
      %961 = vperm.xlu0 %960, %v321
      %v962 = vpop.permute.xlu0 %961
      %965 = vset.pattern.permute.xlu0 0
      %966 = vperm.xlu0 %965, %v322
      %v967 = vpop.permute.xlu0 %966
      %970 = vset.pattern.permute.xlu0 0
      %971 = vperm.xlu0 %970, %v323
      %v972 = vpop.permute.xlu0 %971
      %975 = vset.pattern.permute.xlu0 0
      %976 = vperm.xlu0 %975, %v324
      %v977 = vpop.permute.xlu0 %976
      %980 = vset.pattern.permute.xlu0 0
      %981 = vperm.xlu0 %980, %v325
      %v982 = vpop.permute.xlu0 %981
      %985 = vset.pattern.permute.xlu0 0
      %986 = vperm.xlu0 %985, %v326
      %v987 = vpop.permute.xlu0 %986
      %990 = vset.pattern.permute.xlu0 0
      %991 = vperm.xlu0 %990, %v327
      %v992 = vpop.permute.xlu0 %991
      %995 = vset.pattern.permute.xlu0 0
      %996 = vperm.xlu0 %995, %v328
      %v997 = vpop.permute.xlu0 %996
      %1000 = vset.pattern.permute.xlu0 0
      %1001 = vperm.xlu0 %1000, %v329
      %v1002 = vpop.permute.xlu0 %1001
      %1005 = vset.pattern.permute.xlu0 0
      %1006 = vperm.xlu0 %1005, %v330
      %v1007 = vpop.permute.xlu0 %1006
      %1010 = vset.pattern.permute.xlu0 0
      %1011 = vperm.xlu0 %1010, %v331
      %v1012 = vpop.permute.xlu0 %1011
      %1015 = vset.pattern.permute.xlu0 0
      %1016 = vperm.xlu0 %1015, %v332
      %v1017 = vpop.permute.xlu0 %1016
      %1020 = vset.pattern.permute.xlu0 0
      %1021 = vperm.xlu0 %1020, %v333
      %v1022 = vpop.permute.xlu0 %1021
      %1025 = vset.pattern.permute.xlu0 0
      %1026 = vperm.xlu0 %1025, %v334
      %v1027 = vpop.permute.xlu0 %1026
      %1030 = vset.pattern.permute.xlu0 0
      %1031 = vperm.xlu0 %1030, %v335
      %v1032 = vpop.permute.xlu0 %1031
      %1035 = vset.pattern.permute.xlu0 0
      %1036 = vperm.xlu0 %1035, %v336
      %v1037 = vpop.permute.xlu0 %1036
      %1040 = vset.pattern.permute.xlu0 0
      %1041 = vperm.xlu0 %1040, %v337
      %v1042 = vpop.permute.xlu0 %1041
      %1045 = vset.pattern.permute.xlu0 0
      %1046 = vperm.xlu0 %1045, %v338
      %v1047 = vpop.permute.xlu0 %1046
      %1050 = vset.pattern.permute.xlu0 0
      %1051 = vperm.xlu0 %1050, %v339
      %v1052 = vpop.permute.xlu0 %1051
      %1055 = vset.pattern.permute.xlu0 0
      %1056 = vperm.xlu0 %1055, %v340
      %v1057 = vpop.permute.xlu0 %1056
      %1060 = vset.pattern.permute.xlu0 0
      %1061 = vperm.xlu0 %1060, %v341
      %v1062 = vpop.permute.xlu0 %1061
      %1065 = vset.pattern.permute.xlu0 0
      %1066 = vperm.xlu0 %1065, %v342
      %v1067 = vpop.permute.xlu0 %1066
      %1070 = vset.pattern.permute.xlu0 0
      %1071 = vperm.xlu0 %1070, %v343
      %v1072 = vpop.permute.xlu0 %1071
      %1075 = vset.pattern.permute.xlu0 0
      %1076 = vperm.xlu0 %1075, %v344
      %v1077 = vpop.permute.xlu0 %1076
      %1080 = vset.pattern.permute.xlu0 0
      %1081 = vperm.xlu0 %1080, %v345
      %v1082 = vpop.permute.xlu0 %1081
      %1085 = vset.pattern.permute.xlu0 0
      %1086 = vperm.xlu0 %1085, %v346
      %v1087 = vpop.permute.xlu0 %1086
      %1090 = vset.pattern.permute.xlu0 0
      %1091 = vperm.xlu0 %1090, %v347
      %v1092 = vpop.permute.xlu0 %1091
      %1095 = vset.pattern.permute.xlu0 0
      %1096 = vperm.xlu0 %1095, %v348
      %v1097 = vpop.permute.xlu0 %1096
      %1100 = vset.pattern.permute.xlu0 0
      %1101 = vperm.xlu0 %1100, %v349
      %v1102 = vpop.permute.xlu0 %1101
      %1105 = vset.pattern.permute.xlu0 0
      %1106 = vperm.xlu0 %1105, %v350
      %v1107 = vpop.permute.xlu0 %1106
      %v1109 = vmul.f32 %v839, %v887
      %v1110 = vmul.f32 %v840, %v892
      %v1111 = vmul.f32 %v841, %v897
      %v1112 = vmul.f32 %v842, %v902
      %v1113 = vmul.f32 %v843, %v907
      %v1114 = vmul.f32 %v844, %v912
      %v1115 = vmul.f32 %v845, %v917
      %v1116 = vmul.f32 %v846, %v922
      %v1117 = vmul.f32 %v847, %v927
      %v1118 = vmul.f32 %v848, %v932
      %v1119 = vmul.f32 %v849, %v937
      %v1120 = vmul.f32 %v850, %v942
      %v1121 = vmul.f32 %v851, %v947
      %v1122 = vmul.f32 %v852, %v952
      %v1123 = vmul.f32 %v853, %v957
      %v1124 = vmul.f32 %v854, %v962
      %v1125 = vmul.f32 %v855, %v967
      %v1126 = vmul.f32 %v856, %v972
      %v1127 = vmul.f32 %v857, %v977
      %v1128 = vmul.f32 %v858, %v982
      %v1129 = vmul.f32 %v859, %v987
      %v1130 = vmul.f32 %v860, %v992
      %v1131 = vmul.f32 %v861, %v997
      %v1132 = vmul.f32 %v862, %v1002
      %v1133 = vmul.f32 %v863, %v1007
      %v1134 = vmul.f32 %v864, %v1012
      %v1135 = vmul.f32 %v865, %v1017
      %v1136 = vmul.f32 %v866, %v1022
      %v1137 = vmul.f32 %v867, %v1027
      %v1138 = vmul.f32 %v868, %v1032
      %v1139 = vmul.f32 %v869, %v1037
      %v1140 = vmul.f32 %v870, %v1042
      %v1141 = vmul.f32 %v871, %v1047
      %v1142 = vmul.f32 %v872, %v1052
      %v1143 = vmul.f32 %v873, %v1057
      %v1144 = vmul.f32 %v874, %v1062
      %v1145 = vmul.f32 %v875, %v1067
      %v1146 = vmul.f32 %v876, %v1072
      %v1147 = vmul.f32 %v877, %v1077
      %v1148 = vmul.f32 %v878, %v1082
      %v1149 = vmul.f32 %v879, %v1087
      %v1150 = vmul.f32 %v880, %v1092
      %v1151 = vmul.f32 %v881, %v1097
      %v1152 = vmul.f32 %v882, %v1102
      %v1153 = vmul.f32 %v883, %v1107
      %v1154 = vld [vmem:[%s4] sm:$0xff]
      %v1155 = vld [vmem:[%s4 + $0x8] sm:$0xff]
      %v1156 = vld [vmem:[%s4 + $0x10] sm:$0xff]
      %v1157 = vld [vmem:[%s4 + $0x18] sm:$0xff]
      %v1158 = vld [vmem:[%s4 + $0x20] sm:$0xff]
      %v1159 = vld [vmem:[%s4 + $0x28] sm:$0xff]
      %v1160 = vld [vmem:[%s4 + $0x30] sm:$0xff]
      %v1161 = vld [vmem:[%s4 + $0x38] sm:$0xff]
      %v1162 = vld [vmem:[%s4 + $0x40] sm:$0xff]
      %v1163 = vld [vmem:[%s4 + $0x48] sm:$0xff]
      %v1164 = vld [vmem:[%s4 + $0x50] sm:$0xff]
      %v1165 = vld [vmem:[%s4 + $0x58] sm:$0xff]
      %v1166 = vld [vmem:[%s4 + $0x60] sm:$0xff]
      %v1167 = vld [vmem:[%s4 + $0x68] sm:$0xff]
      %v1168 = vld [vmem:[%s4 + $0x70] sm:$0xff]
      %v1169 = vld [vmem:[%s4 + $0x78] sm:$0xff]
      %v1170 = vld [vmem:[%s4 + $0x80] sm:$0xff]
      %v1171 = vld [vmem:[%s4 + $0x88] sm:$0xff]
      %v1172 = vld [vmem:[%s4 + $0x90] sm:$0xff]
      %v1173 = vld [vmem:[%s4 + $0x98] sm:$0xff]
      %v1174 = vld [vmem:[%s4 + $0xa0] sm:$0xff]
      %v1175 = vld [vmem:[%s4 + $0xa8] sm:$0xff]
      %v1176 = vld [vmem:[%s4 + $0xb0] sm:$0xff]
      %v1177 = vld [vmem:[%s4 + $0xb8] sm:$0xff]
      %v1178 = vld [vmem:[%s4 + $0xc0] sm:$0xff]
      %v1179 = vld [vmem:[%s4 + $0xc8] sm:$0xff]
      %v1180 = vld [vmem:[%s4 + $0xd0] sm:$0xff]
      %v1181 = vld [vmem:[%s4 + $0xd8] sm:$0xff]
      %v1182 = vld [vmem:[%s4 + $0xe0] sm:$0xff]
      %v1183 = vld [vmem:[%s4 + $0xe8] sm:$0xff]
      %v1184 = vld [vmem:[%s4 + $0xf0] sm:$0xff]
      %v1185 = vld [vmem:[%s4 + $0xf8] sm:$0xff]
      %v1186 = vld [vmem:[%s4 + $0x100] sm:$0xff]
      %v1187 = vld [vmem:[%s4 + $0x108] sm:$0xff]
      %v1188 = vld [vmem:[%s4 + $0x110] sm:$0xff]
      %v1189 = vld [vmem:[%s4 + $0x118] sm:$0xff]
      %v1190 = vld [vmem:[%s4 + $0x120] sm:$0xff]
      %v1191 = vld [vmem:[%s4 + $0x128] sm:$0xff]
      %v1192 = vld [vmem:[%s4 + $0x130] sm:$0xff]
      %v1193 = vld [vmem:[%s4 + $0x138] sm:$0xff]
      %v1194 = vld [vmem:[%s4 + $0x140] sm:$0xff]
      %v1195 = vld [vmem:[%s4 + $0x148] sm:$0xff]
      %v1196 = vld [vmem:[%s4 + $0x150] sm:$0xff]
      %v1197 = vld [vmem:[%s4 + $0x158] sm:$0xff]
      %v1198 = vld [vmem:[%s4 + $0x160] sm:$0xff]
      %v1199 = vld [vmem:[%s4 + $0x168] sm:$0xff]
      %v1200 = vld [vmem:[%s4 + $0x170] sm:$0xff]
      %v1201 = vld [vmem:[%s4 + $0x178] sm:$0xff]
      %v1202 = vld [vmem:[%s4 + $0x180] sm:$0xff]
      %v1203 = vld [vmem:[%s4 + $0x188] sm:$0xff]
      %v1204 = vld [vmem:[%s4 + $0x190] sm:$0xff]
      %v1205 = vld [vmem:[%s4 + $0x198] sm:$0xff]
      %v1206 = vld [vmem:[%s4 + $0x1a0] sm:$0xff]
      %v1207 = vld [vmem:[%s4 + $0x1a8] sm:$0xff]
      %v1208 = vld [vmem:[%s4 + $0x1b0] sm:$0xff]
      %v1209 = vld [vmem:[%s4 + $0x1b8] sm:$0xff]
      %v1210 = vld [vmem:[%s4 + $0x1c0] sm:$0xff]
      %v1211 = vld [vmem:[%s4 + $0x1c8] sm:$0xff]
      %v1212 = vld [vmem:[%s4 + $0x1d0] sm:$0xff]
      %v1213 = vld [vmem:[%s4 + $0x1d8] sm:$0xff]
      %v1214 = vld [vmem:[%s4 + $0x1e0] sm:$0xff]
      %v1215 = vld [vmem:[%s4 + $0x1e8] sm:$0xff]
      %v1216 = vld [vmem:[%s4 + $0x1f0] sm:$0xff]
      %v1217 = vld [vmem:[%s4 + $0x1f8] sm:$0xff]
      %v1218 = vld [vmem:[%s4 + $0x200] sm:$0xff]
      %v1219 = vld [vmem:[%s4 + $0x208] sm:$0xff]
      %v1220 = vld [vmem:[%s4 + $0x210] sm:$0xff]
      %v1221 = vld [vmem:[%s4 + $0x218] sm:$0xff]
      %v1222 = vld [vmem:[%s4 + $0x220] sm:$0xff]
      %v1223 = vld [vmem:[%s4 + $0x228] sm:$0xff]
      %v1224 = vld [vmem:[%s4 + $0x230] sm:$0xff]
      %v1225 = vld [vmem:[%s4 + $0x238] sm:$0xff]
      %v1226 = vld [vmem:[%s5] sm:$0x1]
      %vm1271 = vcmask 1046528
      %v1272 = vrot.slane 0.0, 1
      %v1273 = vsel %vm1271, %v1272, %v1272
      %v1274 = vrot.slane %v1109, 1
      %v1275 = vsel %vm1271, %v1272, %v1274
      %v1276 = vrot.slane %v1110, 1
      %v1277 = vsel %vm1271, %v1274, %v1276
      %v1278 = vrot.slane %v1111, 1
      %v1279 = vsel %vm1271, %v1276, %v1278
      %v1280 = vrot.slane %v1112, 1
      %v1281 = vsel %vm1271, %v1278, %v1280
      %v1282 = vrot.slane %v1113, 1
      %v1283 = vsel %vm1271, %v1280, %v1282
      %v1284 = vrot.slane %v1114, 1
      %v1285 = vsel %vm1271, %v1282, %v1284
      %v1286 = vrot.slane %v1115, 1
      %v1287 = vsel %vm1271, %v1284, %v1286
      %v1288 = vrot.slane %v1116, 1
      %v1289 = vsel %vm1271, %v1286, %v1288
      %v1290 = vrot.slane %v1117, 1
      %v1291 = vsel %vm1271, %v1288, %v1290
      %v1292 = vrot.slane %v1118, 1
      %v1293 = vsel %vm1271, %v1290, %v1292
      %v1294 = vrot.slane %v1119, 1
      %v1295 = vsel %vm1271, %v1292, %v1294
      %v1296 = vrot.slane %v1120, 1
      %v1297 = vsel %vm1271, %v1294, %v1296
      %v1298 = vrot.slane %v1121, 1
      %v1299 = vsel %vm1271, %v1296, %v1298
      %v1300 = vrot.slane %v1122, 1
      %v1301 = vsel %vm1271, %v1298, %v1300
      %v1302 = vrot.slane %v1123, 1
      %v1303 = vsel %vm1271, %v1300, %v1302
      %v1304 = vrot.slane %v1124, 1
      %v1305 = vsel %vm1271, %v1302, %v1304
      %v1306 = vrot.slane %v1125, 1
      %v1307 = vsel %vm1271, %v1304, %v1306
      %v1308 = vrot.slane %v1126, 1
      %v1309 = vsel %vm1271, %v1306, %v1308
      %v1310 = vrot.slane %v1127, 1
      %v1311 = vsel %vm1271, %v1308, %v1310
      %v1312 = vrot.slane %v1128, 1
      %v1313 = vsel %vm1271, %v1310, %v1312
      %v1314 = vrot.slane %v1129, 1
      %v1315 = vsel %vm1271, %v1312, %v1314
      %v1316 = vrot.slane %v1130, 1
      %v1317 = vsel %vm1271, %v1314, %v1316
      %v1318 = vrot.slane %v1131, 1
      %v1319 = vsel %vm1271, %v1316, %v1318
      %v1320 = vrot.slane %v1132, 1
      %v1321 = vsel %vm1271, %v1318, %v1320
      %v1322 = vrot.slane %v1133, 1
      %v1323 = vsel %vm1271, %v1320, %v1322
      %v1324 = vrot.slane %v1134, 1
      %v1325 = vsel %vm1271, %v1322, %v1324
      %v1326 = vrot.slane %v1135, 1
      %v1327 = vsel %vm1271, %v1324, %v1326
      %v1328 = vrot.slane %v1136, 1
      %v1329 = vsel %vm1271, %v1326, %v1328
      %v1330 = vrot.slane %v1137, 1
      %v1331 = vsel %vm1271, %v1328, %v1330
      %v1332 = vrot.slane %v1138, 1
      %v1333 = vsel %vm1271, %v1330, %v1332
      %v1334 = vrot.slane %v1139, 1
      %v1335 = vsel %vm1271, %v1332, %v1334
      %v1336 = vrot.slane %v1140, 1
      %v1337 = vsel %vm1271, %v1334, %v1336
      %v1338 = vrot.slane %v1141, 1
      %v1339 = vsel %vm1271, %v1336, %v1338
      %v1340 = vrot.slane %v1142, 1
      %v1341 = vsel %vm1271, %v1338, %v1340
      %v1342 = vrot.slane %v1143, 1
      %v1343 = vsel %vm1271, %v1340, %v1342
      %v1344 = vrot.slane %v1144, 1
      %v1345 = vsel %vm1271, %v1342, %v1344
      %v1346 = vrot.slane %v1145, 1
      %v1347 = vsel %vm1271, %v1344, %v1346
      %v1348 = vrot.slane %v1146, 1
      %v1349 = vsel %vm1271, %v1346, %v1348
      %v1350 = vrot.slane %v1147, 1
      %v1351 = vsel %vm1271, %v1348, %v1350
      %v1352 = vrot.slane %v1148, 1
      %v1353 = vsel %vm1271, %v1350, %v1352
      %v1354 = vrot.slane %v1149, 1
      %v1355 = vsel %vm1271, %v1352, %v1354
      %v1356 = vrot.slane %v1150, 1
      %v1357 = vsel %vm1271, %v1354, %v1356
      %v1358 = vrot.slane %v1151, 1
      %v1359 = vsel %vm1271, %v1356, %v1358
      %1360 = vrot.lane.b32.xlu0 %v1273, 64
      %v1361 = vpop.permute.xlu0 %1360
      %1362 = vrot.lane.b32.xlu0 %v1275, 64
      %v1363 = vpop.permute.xlu0 %1362
      %1364 = vrot.lane.b32.xlu0 %v1277, 64
      %v1365 = vpop.permute.xlu0 %1364
      %1366 = vrot.lane.b32.xlu0 %v1279, 64
      %v1367 = vpop.permute.xlu0 %1366
      %1368 = vrot.lane.b32.xlu0 %v1281, 64
      %v1369 = vpop.permute.xlu0 %1368
      %1370 = vrot.lane.b32.xlu0 %v1283, 64
      %v1371 = vpop.permute.xlu0 %1370
      %1372 = vrot.lane.b32.xlu0 %v1285, 64
      %v1373 = vpop.permute.xlu0 %1372
      %1374 = vrot.lane.b32.xlu0 %v1287, 64
      %v1375 = vpop.permute.xlu0 %1374
      %1376 = vrot.lane.b32.xlu0 %v1289, 64
      %v1377 = vpop.permute.xlu0 %1376
      %1378 = vrot.lane.b32.xlu0 %v1291, 64
      %v1379 = vpop.permute.xlu0 %1378
      %1380 = vrot.lane.b32.xlu0 %v1293, 64
      %v1381 = vpop.permute.xlu0 %1380
      %1382 = vrot.lane.b32.xlu0 %v1295, 64
      %v1383 = vpop.permute.xlu0 %1382
      %1384 = vrot.lane.b32.xlu0 %v1297, 64
      %v1385 = vpop.permute.xlu0 %1384
      %1386 = vrot.lane.b32.xlu0 %v1299, 64
      %v1387 = vpop.permute.xlu0 %1386
      %1388 = vrot.lane.b32.xlu0 %v1301, 64
      %v1389 = vpop.permute.xlu0 %1388
      %1390 = vrot.lane.b32.xlu0 %v1303, 64
      %v1391 = vpop.permute.xlu0 %1390
      %1392 = vrot.lane.b32.xlu0 %v1305, 64
      %v1393 = vpop.permute.xlu0 %1392
      %1394 = vrot.lane.b32.xlu0 %v1307, 64
      %v1395 = vpop.permute.xlu0 %1394
      %1396 = vrot.lane.b32.xlu0 %v1309, 64
      %v1397 = vpop.permute.xlu0 %1396
      %1398 = vrot.lane.b32.xlu0 %v1311, 64
      %v1399 = vpop.permute.xlu0 %1398
      %1400 = vrot.lane.b32.xlu0 %v1313, 64
      %v1401 = vpop.permute.xlu0 %1400
      %1402 = vrot.lane.b32.xlu0 %v1315, 64
      %v1403 = vpop.permute.xlu0 %1402
      %1404 = vrot.lane.b32.xlu0 %v1317, 64
      %v1405 = vpop.permute.xlu0 %1404
      %1406 = vrot.lane.b32.xlu0 %v1319, 64
      %v1407 = vpop.permute.xlu0 %1406
      %1408 = vrot.lane.b32.xlu0 %v1321, 64
      %v1409 = vpop.permute.xlu0 %1408
      %1410 = vrot.lane.b32.xlu0 %v1323, 64
      %v1411 = vpop.permute.xlu0 %1410
      %1412 = vrot.lane.b32.xlu0 %v1325, 64
      %v1413 = vpop.permute.xlu0 %1412
      %1414 = vrot.lane.b32.xlu0 %v1327, 64
      %v1415 = vpop.permute.xlu0 %1414
      %1416 = vrot.lane.b32.xlu0 %v1329, 64
      %v1417 = vpop.permute.xlu0 %1416
      %1418 = vrot.lane.b32.xlu0 %v1331, 64
      %v1419 = vpop.permute.xlu0 %1418
      %1420 = vrot.lane.b32.xlu0 %v1333, 64
      %v1421 = vpop.permute.xlu0 %1420
      %1422 = vrot.lane.b32.xlu0 %v1335, 64
      %v1423 = vpop.permute.xlu0 %1422
      %1424 = vrot.lane.b32.xlu0 %v1337, 64
      %v1425 = vpop.permute.xlu0 %1424
      %1426 = vrot.lane.b32.xlu0 %v1339, 64
      %v1427 = vpop.permute.xlu0 %1426
      %1428 = vrot.lane.b32.xlu0 %v1341, 64
      %v1429 = vpop.permute.xlu0 %1428
      %1430 = vrot.lane.b32.xlu0 %v1343, 64
      %v1431 = vpop.permute.xlu0 %1430
      %1432 = vrot.lane.b32.xlu0 %v1345, 64
      %v1433 = vpop.permute.xlu0 %1432
      %1434 = vrot.lane.b32.xlu0 %v1347, 64
      %v1435 = vpop.permute.xlu0 %1434
      %1436 = vrot.lane.b32.xlu0 %v1349, 64
      %v1437 = vpop.permute.xlu0 %1436
      %1438 = vrot.lane.b32.xlu0 %v1351, 64
      %v1439 = vpop.permute.xlu0 %1438
      %1440 = vrot.lane.b32.xlu0 %v1353, 64
      %v1441 = vpop.permute.xlu0 %1440
      %1442 = vrot.lane.b32.xlu0 %v1355, 64
      %v1443 = vpop.permute.xlu0 %1442
      %1444 = vrot.lane.b32.xlu0 %v1357, 64
      %v1445 = vpop.permute.xlu0 %1444
      %1446 = vrot.lane.b32.xlu0 %v1359, 64
      %v1447 = vpop.permute.xlu0 %1446
      %1448 = vrot.lane.b32.xlu0 %v1358, 64
      %v1449 = vpop.permute.xlu0 %1448
      %vm1495 = vcmask 1045504
      %v1496 = vrot.slane 0.0, 2
      %v1497 = vsel %vm1495, %v1496, %v1496
      %v1498 = vrot.slane %v1109, 2
      %v1499 = vsel %vm1495, %v1496, %v1498
      %v1500 = vrot.slane %v1110, 2
      %v1501 = vsel %vm1495, %v1498, %v1500
      %v1502 = vrot.slane %v1111, 2
      %v1503 = vsel %vm1495, %v1500, %v1502
      %v1504 = vrot.slane %v1112, 2
      %v1505 = vsel %vm1495, %v1502, %v1504
      %v1506 = vrot.slane %v1113, 2
      %v1507 = vsel %vm1495, %v1504, %v1506
      %v1508 = vrot.slane %v1114, 2
      %v1509 = vsel %vm1495, %v1506, %v1508
      %v1510 = vrot.slane %v1115, 2
      %v1511 = vsel %vm1495, %v1508, %v1510
      %v1512 = vrot.slane %v1116, 2
      %v1513 = vsel %vm1495, %v1510, %v1512
      %v1514 = vrot.slane %v1117, 2
      %v1515 = vsel %vm1495, %v1512, %v1514
      %v1516 = vrot.slane %v1118, 2
      %v1517 = vsel %vm1495, %v1514, %v1516
      %v1518 = vrot.slane %v1119, 2
      %v1519 = vsel %vm1495, %v1516, %v1518
      %v1520 = vrot.slane %v1120, 2
      %v1521 = vsel %vm1495, %v1518, %v1520
      %v1522 = vrot.slane %v1121, 2
      %v1523 = vsel %vm1495, %v1520, %v1522
      %v1524 = vrot.slane %v1122, 2
      %v1525 = vsel %vm1495, %v1522, %v1524
      %v1526 = vrot.slane %v1123, 2
      %v1527 = vsel %vm1495, %v1524, %v1526
      %v1528 = vrot.slane %v1124, 2
      %v1529 = vsel %vm1495, %v1526, %v1528
      %v1530 = vrot.slane %v1125, 2
      %v1531 = vsel %vm1495, %v1528, %v1530
      %v1532 = vrot.slane %v1126, 2
      %v1533 = vsel %vm1495, %v1530, %v1532
      %v1534 = vrot.slane %v1127, 2
      %v1535 = vsel %vm1495, %v1532, %v1534
      %v1536 = vrot.slane %v1128, 2
      %v1537 = vsel %vm1495, %v1534, %v1536
      %v1538 = vrot.slane %v1129, 2
      %v1539 = vsel %vm1495, %v1536, %v1538
      %v1540 = vrot.slane %v1130, 2
      %v1541 = vsel %vm1495, %v1538, %v1540
      %v1542 = vrot.slane %v1131, 2
      %v1543 = vsel %vm1495, %v1540, %v1542
      %v1544 = vrot.slane %v1132, 2
      %v1545 = vsel %vm1495, %v1542, %v1544
      %v1546 = vrot.slane %v1133, 2
      %v1547 = vsel %vm1495, %v1544, %v1546
      %v1548 = vrot.slane %v1134, 2
      %v1549 = vsel %vm1495, %v1546, %v1548
      %v1550 = vrot.slane %v1135, 2
      %v1551 = vsel %vm1495, %v1548, %v1550
      %v1552 = vrot.slane %v1136, 2
      %v1553 = vsel %vm1495, %v1550, %v1552
      %v1554 = vrot.slane %v1137, 2
      %v1555 = vsel %vm1495, %v1552, %v1554
      %v1556 = vrot.slane %v1138, 2
      %v1557 = vsel %vm1495, %v1554, %v1556
      %v1558 = vrot.slane %v1139, 2
      %v1559 = vsel %vm1495, %v1556, %v1558
      %v1560 = vrot.slane %v1140, 2
      %v1561 = vsel %vm1495, %v1558, %v1560
      %v1562 = vrot.slane %v1141, 2
      %v1563 = vsel %vm1495, %v1560, %v1562
      %v1564 = vrot.slane %v1142, 2
      %v1565 = vsel %vm1495, %v1562, %v1564
      %v1566 = vrot.slane %v1143, 2
      %v1567 = vsel %vm1495, %v1564, %v1566
      %v1568 = vrot.slane %v1144, 2
      %v1569 = vsel %vm1495, %v1566, %v1568
      %v1570 = vrot.slane %v1145, 2
      %v1571 = vsel %vm1495, %v1568, %v1570
      %v1572 = vrot.slane %v1146, 2
      %v1573 = vsel %vm1495, %v1570, %v1572
      %v1574 = vrot.slane %v1147, 2
      %v1575 = vsel %vm1495, %v1572, %v1574
      %v1576 = vrot.slane %v1148, 2
      %v1577 = vsel %vm1495, %v1574, %v1576
      %v1578 = vrot.slane %v1149, 2
      %v1579 = vsel %vm1495, %v1576, %v1578
      %v1580 = vrot.slane %v1150, 2
      %v1581 = vsel %vm1495, %v1578, %v1580
      %v1582 = vrot.slane %v1151, 2
      %v1583 = vsel %vm1495, %v1580, %v1582
      %vm1584 = vcmask 523264
      %v1585 = vsel %vm1584, 0.0, %v1361
      %v1586 = vsel %vm1584, 0.0, %v1363
      %v1587 = vsel %vm1584, %v1109, %v1365
      %v1588 = vsel %vm1584, %v1110, %v1367
      %v1589 = vsel %vm1584, %v1111, %v1369
      %v1590 = vsel %vm1584, %v1112, %v1371
      %v1591 = vsel %vm1584, %v1113, %v1373
      %v1592 = vsel %vm1584, %v1114, %v1375
      %v1593 = vsel %vm1584, %v1115, %v1377
      %v1594 = vsel %vm1584, %v1116, %v1379
      %v1595 = vsel %vm1584, %v1117, %v1381
      %v1596 = vsel %vm1584, %v1118, %v1383
      %v1597 = vsel %vm1584, %v1119, %v1385
      %v1598 = vsel %vm1584, %v1120, %v1387
      %v1599 = vsel %vm1584, %v1121, %v1389
      %v1600 = vsel %vm1584, %v1122, %v1391
      %v1601 = vsel %vm1584, %v1123, %v1393
      %v1602 = vsel %vm1584, %v1124, %v1395
      %v1603 = vsel %vm1584, %v1125, %v1397
      %v1604 = vsel %vm1584, %v1126, %v1399
      %v1605 = vsel %vm1584, %v1127, %v1401
      %v1606 = vsel %vm1584, %v1128, %v1403
      %v1607 = vsel %vm1584, %v1129, %v1405
      %v1608 = vsel %vm1584, %v1130, %v1407
      %v1609 = vsel %vm1584, %v1131, %v1409
      %v1610 = vsel %vm1584, %v1132, %v1411
      %v1611 = vsel %vm1584, %v1133, %v1413
      %v1612 = vsel %vm1584, %v1134, %v1415
      %v1613 = vsel %vm1584, %v1135, %v1417
      %v1614 = vsel %vm1584, %v1136, %v1419
      %v1615 = vsel %vm1584, %v1137, %v1421
      %v1616 = vsel %vm1584, %v1138, %v1423
      %v1617 = vsel %vm1584, %v1139, %v1425
      %v1618 = vsel %vm1584, %v1140, %v1427
      %v1619 = vsel %vm1584, %v1141, %v1429
      %v1620 = vsel %vm1584, %v1142, %v1431
      %v1621 = vsel %vm1584, %v1143, %v1433
      %v1622 = vsel %vm1584, %v1144, %v1435
      %v1623 = vsel %vm1584, %v1145, %v1437
      %v1624 = vsel %vm1584, %v1146, %v1439
      %v1625 = vsel %vm1584, %v1147, %v1441
      %v1626 = vsel %vm1584, %v1148, %v1443
      %v1627 = vsel %vm1584, %v1149, %v1445
      %v1628 = vsel %vm1584, %v1150, %v1447
      %v1629 = vsel %vm1584, %v1151, %v1449
      %v1632 = vrot.slane %v1152, 1
      %v1633 = vsel %vm1271, %v1358, %v1632
      %v1634 = vrot.slane %v1153, 1
      %v1635 = vsel %vm1271, %v1632, %v1634
      %1636 = vrot.lane.b32.xlu0 %v1274, 64
      %v1637 = vpop.permute.xlu0 %1636
      %1638 = vrot.lane.b32.xlu0 %v1633, 64
      %v1639 = vpop.permute.xlu0 %1638
      %1640 = vrot.lane.b32.xlu0 %v1635, 64
      %v1641 = vpop.permute.xlu0 %1640
      %1642 = vrot.lane.b32.xlu0 %v1634, 64
      %v1643 = vpop.permute.xlu0 %1642
      %v1648 = vrot.slane %v1152, 2
      %v1649 = vsel %vm1495, %v1582, %v1648
      %v1650 = vrot.slane %v1153, 2
      %v1651 = vsel %vm1495, %v1648, %v1650
      %v1652 = vsel %vm1495, %v1650, %v1496
      %v1653 = vsel %vm1584, 0.0, %v1637
      %v1654 = vsel %vm1584, %v1151, %v1639
      %v1655 = vsel %vm1584, %v1152, %v1641
      %v1656 = vsel %vm1584, %v1153, %v1643
      %vm1703 = vcmask 1040384
      %v1704 = vrot.slane %v1653, 7
      %v1705 = vrot.slane %v1587, 7
      %v1706 = vsel %vm1703, %v1704, %v1705
      %v1707 = vrot.slane %v1498, 7
      %v1708 = vrot.slane %v1501, 7
      %v1709 = vsel %vm1703, %v1707, %v1708
      %v1710 = vrot.slane %v1588, 7
      %v1711 = vsel %vm1703, %v1705, %v1710
      %v1712 = vrot.slane %v1503, 7
      %v1713 = vsel %vm1703, %v1708, %v1712
      %v1714 = vrot.slane %v1589, 7
      %v1715 = vsel %vm1703, %v1710, %v1714
      %v1716 = vrot.slane %v1505, 7
      %v1717 = vsel %vm1703, %v1712, %v1716
      %v1718 = vrot.slane %v1590, 7
      %v1719 = vsel %vm1703, %v1714, %v1718
      %v1720 = vrot.slane %v1507, 7
      %v1721 = vsel %vm1703, %v1716, %v1720
      %v1722 = vrot.slane %v1591, 7
      %v1723 = vsel %vm1703, %v1718, %v1722
      %v1724 = vrot.slane %v1509, 7
      %v1725 = vsel %vm1703, %v1720, %v1724
      %v1726 = vrot.slane %v1592, 7
      %v1727 = vsel %vm1703, %v1722, %v1726
      %v1728 = vrot.slane %v1511, 7
      %v1729 = vsel %vm1703, %v1724, %v1728
      %v1730 = vrot.slane %v1593, 7
      %v1731 = vsel %vm1703, %v1726, %v1730
      %v1732 = vrot.slane %v1513, 7
      %v1733 = vsel %vm1703, %v1728, %v1732
      %v1734 = vrot.slane %v1594, 7
      %v1735 = vsel %vm1703, %v1730, %v1734
      %v1736 = vrot.slane %v1515, 7
      %v1737 = vsel %vm1703, %v1732, %v1736
      %v1738 = vrot.slane %v1595, 7
      %v1739 = vsel %vm1703, %v1734, %v1738
      %v1740 = vrot.slane %v1517, 7
      %v1741 = vsel %vm1703, %v1736, %v1740
      %v1742 = vrot.slane %v1596, 7
      %v1743 = vsel %vm1703, %v1738, %v1742
      %v1744 = vrot.slane %v1519, 7
      %v1745 = vsel %vm1703, %v1740, %v1744
      %v1746 = vrot.slane %v1597, 7
      %v1747 = vsel %vm1703, %v1742, %v1746
      %v1748 = vrot.slane %v1521, 7
      %v1749 = vsel %vm1703, %v1744, %v1748
      %v1750 = vrot.slane %v1598, 7
      %v1751 = vsel %vm1703, %v1746, %v1750
      %v1752 = vrot.slane %v1523, 7
      %v1753 = vsel %vm1703, %v1748, %v1752
      %v1754 = vrot.slane %v1599, 7
      %v1755 = vsel %vm1703, %v1750, %v1754
      %v1756 = vrot.slane %v1525, 7
      %v1757 = vsel %vm1703, %v1752, %v1756
      %v1758 = vrot.slane %v1600, 7
      %v1759 = vsel %vm1703, %v1754, %v1758
      %v1760 = vrot.slane %v1527, 7
      %v1761 = vsel %vm1703, %v1756, %v1760
      %v1762 = vrot.slane %v1601, 7
      %v1763 = vsel %vm1703, %v1758, %v1762
      %v1764 = vrot.slane %v1529, 7
      %v1765 = vsel %vm1703, %v1760, %v1764
      %v1766 = vrot.slane %v1602, 7
      %v1767 = vsel %vm1703, %v1762, %v1766
      %v1768 = vrot.slane %v1531, 7
      %v1769 = vsel %vm1703, %v1764, %v1768
      %v1770 = vrot.slane %v1603, 7
      %v1771 = vsel %vm1703, %v1766, %v1770
      %v1772 = vrot.slane %v1533, 7
      %v1773 = vsel %vm1703, %v1768, %v1772
      %v1774 = vrot.slane %v1604, 7
      %v1775 = vsel %vm1703, %v1770, %v1774
      %v1776 = vrot.slane %v1535, 7
      %v1777 = vsel %vm1703, %v1772, %v1776
      %v1778 = vrot.slane %v1605, 7
      %v1779 = vsel %vm1703, %v1774, %v1778
      %v1780 = vrot.slane %v1537, 7
      %v1781 = vsel %vm1703, %v1776, %v1780
      %v1782 = vrot.slane %v1606, 7
      %v1783 = vsel %vm1703, %v1778, %v1782
      %v1784 = vrot.slane %v1539, 7
      %v1785 = vsel %vm1703, %v1780, %v1784
      %v1786 = vrot.slane %v1607, 7
      %v1787 = vsel %vm1703, %v1782, %v1786
      %v1788 = vrot.slane %v1541, 7
      %v1789 = vsel %vm1703, %v1784, %v1788
      %v1790 = vrot.slane %v1608, 7
      %v1791 = vsel %vm1703, %v1786, %v1790
      %v1792 = vrot.slane %v1543, 7
      %v1793 = vsel %vm1703, %v1788, %v1792
      %v1794 = vrot.slane %v1609, 7
      %v1795 = vsel %vm1703, %v1790, %v1794
      %v1796 = vrot.slane %v1545, 7
      %v1797 = vsel %vm1703, %v1792, %v1796
      %v1798 = vrot.slane %v1610, 7
      %v1799 = vsel %vm1703, %v1794, %v1798
      %v1800 = vrot.slane %v1547, 7
      %v1801 = vsel %vm1703, %v1796, %v1800
      %v1802 = vrot.slane %v1611, 7
      %v1803 = vsel %vm1703, %v1798, %v1802
      %v1804 = vrot.slane %v1549, 7
      %v1805 = vsel %vm1703, %v1800, %v1804
      %v1806 = vrot.slane %v1612, 7
      %v1807 = vsel %vm1703, %v1802, %v1806
      %v1808 = vrot.slane %v1551, 7
      %v1809 = vsel %vm1703, %v1804, %v1808
      %v1810 = vrot.slane %v1613, 7
      %v1811 = vsel %vm1703, %v1806, %v1810
      %v1812 = vrot.slane %v1553, 7
      %v1813 = vsel %vm1703, %v1808, %v1812
      %v1814 = vrot.slane %v1614, 7
      %v1815 = vsel %vm1703, %v1810, %v1814
      %v1816 = vrot.slane %v1555, 7
      %v1817 = vsel %vm1703, %v1812, %v1816
      %v1818 = vrot.slane %v1615, 7
      %v1819 = vsel %vm1703, %v1814, %v1818
      %v1820 = vrot.slane %v1557, 7
      %v1821 = vsel %vm1703, %v1816, %v1820
      %v1822 = vrot.slane %v1616, 7
      %v1823 = vsel %vm1703, %v1818, %v1822
      %v1824 = vrot.slane %v1559, 7
      %v1825 = vsel %vm1703, %v1820, %v1824
      %v1826 = vrot.slane %v1617, 7
      %v1827 = vsel %vm1703, %v1822, %v1826
      %v1828 = vrot.slane %v1561, 7
      %v1829 = vsel %vm1703, %v1824, %v1828
      %v1830 = vrot.slane %v1618, 7
      %v1831 = vsel %vm1703, %v1826, %v1830
      %v1832 = vrot.slane %v1563, 7
      %v1833 = vsel %vm1703, %v1828, %v1832
      %v1834 = vrot.slane %v1619, 7
      %v1835 = vsel %vm1703, %v1830, %v1834
      %v1836 = vrot.slane %v1565, 7
      %v1837 = vsel %vm1703, %v1832, %v1836
      %v1838 = vrot.slane %v1620, 7
      %v1839 = vsel %vm1703, %v1834, %v1838
      %v1840 = vrot.slane %v1567, 7
      %v1841 = vsel %vm1703, %v1836, %v1840
      %v1842 = vrot.slane %v1621, 7
      %v1843 = vsel %vm1703, %v1838, %v1842
      %v1844 = vrot.slane %v1569, 7
      %v1845 = vsel %vm1703, %v1840, %v1844
      %v1846 = vrot.slane %v1622, 7
      %v1847 = vsel %vm1703, %v1842, %v1846
      %v1848 = vrot.slane %v1571, 7
      %v1849 = vsel %vm1703, %v1844, %v1848
      %v1850 = vrot.slane %v1623, 7
      %v1851 = vsel %vm1703, %v1846, %v1850
      %v1852 = vrot.slane %v1573, 7
      %v1853 = vsel %vm1703, %v1848, %v1852
      %v1854 = vrot.slane %v1624, 7
      %v1855 = vsel %vm1703, %v1850, %v1854
      %v1856 = vrot.slane %v1575, 7
      %v1857 = vsel %vm1703, %v1852, %v1856
      %v1858 = vrot.slane %v1625, 7
      %v1859 = vsel %vm1703, %v1854, %v1858
      %v1860 = vrot.slane %v1577, 7
      %v1861 = vsel %vm1703, %v1856, %v1860
      %v1862 = vrot.slane %v1626, 7
      %v1863 = vsel %vm1703, %v1858, %v1862
      %v1864 = vrot.slane %v1579, 7
      %v1865 = vsel %vm1703, %v1860, %v1864
      %v1866 = vrot.slane %v1627, 7
      %v1867 = vsel %vm1703, %v1862, %v1866
      %v1868 = vrot.slane %v1581, 7
      %v1869 = vsel %vm1703, %v1864, %v1868
      %v1870 = vrot.slane %v1628, 7
      %v1871 = vsel %vm1703, %v1866, %v1870
      %v1872 = vrot.slane %v1583, 7
      %v1873 = vsel %vm1703, %v1868, %v1872
      %v1874 = vrot.slane %v1654, 7
      %v1875 = vsel %vm1703, %v1870, %v1874
      %v1876 = vrot.slane %v1649, 7
      %v1877 = vsel %vm1703, %v1872, %v1876
      %v1878 = vrot.slane %v1655, 7
      %v1879 = vsel %vm1703, %v1874, %v1878
      %v1880 = vrot.slane %v1651, 7
      %v1881 = vsel %vm1703, %v1876, %v1880
      %v1882 = vrot.slane %v1656, 7
      %v1883 = vsel %vm1703, %v1878, %v1882
      %v1884 = vrot.slane %v1652, 7
      %v1885 = vsel %vm1703, %v1880, %v1884
      %v1931 = vsel %vm1584, %v1709, 0
      %v1933 = vsel %vm1584, %v1713, 0
      %v1935 = vsel %vm1584, %v1717, 0
      %v1937 = vsel %vm1584, %v1721, 0
      %v1939 = vsel %vm1584, %v1725, 0
      %v1941 = vsel %vm1584, %v1729, 0
      %v1943 = vsel %vm1584, %v1733, 0
      %v1945 = vsel %vm1584, %v1737, 0
      %v1947 = vsel %vm1584, %v1741, 0
      %v1949 = vsel %vm1584, %v1745, 0
      %v1951 = vsel %vm1584, %v1749, 0
      %v1953 = vsel %vm1584, %v1753, 0
      %v1955 = vsel %vm1584, %v1757, 0
      %v1957 = vsel %vm1584, %v1761, 0
      %v1959 = vsel %vm1584, %v1765, 0
      %v1961 = vsel %vm1584, %v1769, 0
      %v1963 = vsel %vm1584, %v1773, 0
      %v1965 = vsel %vm1584, %v1777, 0
      %v1967 = vsel %vm1584, %v1781, 0
      %v1969 = vsel %vm1584, %v1785, 0
      %v1971 = vsel %vm1584, %v1789, 0
      %v1973 = vsel %vm1584, %v1793, 0
      %v1975 = vsel %vm1584, %v1797, 0
      %v1977 = vsel %vm1584, %v1801, 0
      %v1979 = vsel %vm1584, %v1805, 0
      %v1981 = vsel %vm1584, %v1809, 0
      %v1983 = vsel %vm1584, %v1813, 0
      %v1985 = vsel %vm1584, %v1817, 0
      %v1987 = vsel %vm1584, %v1821, 0
      %v1989 = vsel %vm1584, %v1825, 0
      %v1991 = vsel %vm1584, %v1829, 0
      %v1993 = vsel %vm1584, %v1833, 0
      %v1995 = vsel %vm1584, %v1837, 0
      %v1997 = vsel %vm1584, %v1841, 0
      %v1999 = vsel %vm1584, %v1845, 0
      %v2001 = vsel %vm1584, %v1849, 0
      %v2003 = vsel %vm1584, %v1853, 0
      %v2005 = vsel %vm1584, %v1857, 0
      %v2007 = vsel %vm1584, %v1861, 0
      %v2009 = vsel %vm1584, %v1865, 0
      %v2011 = vsel %vm1584, %v1869, 0
      %v2013 = vsel %vm1584, %v1873, 0
      %v2015 = vsel %vm1584, %v1877, 0
      %v2017 = vsel %vm1584, %v1881, 0
      %v2019 = vsel %vm1584, %v1885, 0
      %2021 = vmatprep.subr.mxu0 0.0
      %2022 = vmatpush1.msra.mxu0 %v1178
      %2023 = vmatprep.subr.mxu0 0.0
      %2024 = vmatpush1.msra.mxu0 %v1179
      %2025 = vmatprep.subr.mxu0 0.0
      %2026 = vmatpush1.msra.mxu0 %v1180
      %2027 = vmatprep.subr.mxu0 0.0
      %2028 = vmatpush1.msra.mxu0 %v1181
      %2029 = vmatprep.subr.mxu0 0.0
      %2030 = vmatpush1.msra.mxu0 %v1182
      %2031 = vmatprep.subr.mxu0 0.0
      %2032 = vmatpush1.msra.mxu0 %v1183
      %2033 = vmatprep.subr.mxu0 0.0
      %2034 = vmatpush1.msra.mxu0 %v1184
      %2035 = vmatprep.subr.mxu0 0.0
      %2036 = vmatpush1.msra.mxu0 %v1185
      %2037 = vmatprep.subr.mxu0 0.0
      %2038 = vmatpush1.msra.mxu0 %v1186
      %2039 = vmatprep.subr.mxu0 0.0
      %2040 = vmatpush1.msra.mxu0 %v1187
      %2041 = vmatprep.subr.mxu0 0.0
      %2042 = vmatpush1.msra.mxu0 %v1188
      %2043 = vmatprep.subr.mxu0 0.0
      %2044 = vmatpush1.msra.mxu0 %v1189
      %2045 = vmatprep.subr.mxu0 0.0
      %2046 = vmatpush1.msra.mxu0 %v1190
      %2047 = vmatprep.subr.mxu0 0.0
      %2048 = vmatpush1.msra.mxu0 %v1191
      %2049 = vmatprep.subr.mxu0 0.0
      %2050 = vmatpush1.msra.mxu0 %v1192
      %2051 = vmatprep.subr.mxu0 0.0
      %2052 = vmatpush1.msra.mxu0 %v1193
      %2053 = vmatprep.subr.mxu0 0.0
      %2054 = vmatpush1.msra.mxu0 %v1194
      %2055 = vmatprep.subr.mxu0 0.0
      %2056 = vmatpush1.msra.mxu0 %v1195
      %2057 = vmatprep.subr.mxu0 0.0
      %2058 = vmatpush1.msra.mxu0 %v1196
      %2059 = vmatprep.subr.mxu0 0.0
      %2060 = vmatpush1.msra.mxu0 %v1197
      %2061 = vmatprep.subr.mxu0 0.0
      %2062 = vmatpush1.msra.mxu0 %v1198
      %2063 = vmatprep.subr.mxu0 0.0
      %2064 = vmatpush1.msra.mxu0 %v1199
      %2065 = vmatprep.subr.mxu0 0.0
      %2066 = vmatpush1.msra.mxu0 %v1200
      %2067 = vmatprep.subr.mxu0 0.0
      %2068 = vmatpush1.msra.mxu0 %v1201
      %2069 = vmatprep.subr.mxu0 0.0
      %2070 = vmatpush1.msra.mxu0 0.0
      %2071 = vmatprep.subr.mxu0 0.0
      %2072 = vmatpush1.msra.mxu0 0.0
      %2073 = vmatprep.subr.mxu0 0.0
      %2074 = vmatpush1.msra.mxu0 0.0
      %2075 = vmatprep.subr.mxu0 0.0
      %2076 = vmatpush1.msra.mxu0 0.0
      %2077 = vmatprep.subr.mxu0 0.0
      %2078 = vmatpush1.msra.mxu0 0.0
      %2079 = vmatprep.subr.mxu0 0.0
      %2080 = vmatpush1.msra.mxu0 0.0
      %2081 = vmatprep.subr.mxu0 0.0
      %2082 = vmatpush1.msra.mxu0 0.0
      %2083 = vmatprep.subr.mxu0 0.0
      %2084 = vmatpush1.msra.mxu0 0.0
      %2085 = vmatprep.mubr.f32.mxu0 %v1931
      %2086 = vmatmul.mubr.f32.gmra.mrb[0].mxu0 %v1706
      %v2087 = vpop.f32.mrb[0].mxu0
      %v2088 = vadd.f32 0.0, %v2087
      %v2089 = vpop.f32.mrb[0].mxu0
      %2090 = vmatprep.mubr.f32.mxu0 %v1933
      %2091 = vmatmul.mubr.f32.gmra.mrb[0].mxu0 %v1711
      %v2092 = vpop.f32.mrb[0].mxu0
      %v2093 = vadd.f32 0.0, %v2092
      %v2094 = vpop.f32.mrb[0].mxu0
      %2095 = vmatprep.mubr.f32.mxu0 %v1935
      %2096 = vmatmul.mubr.f32.gmra.mrb[0].mxu0 %v1715
      %v2097 = vpop.f32.mrb[0].mxu0
      %v2098 = vadd.f32 0.0, %v2097
      %v2099 = vpop.f32.mrb[0].mxu0
      %2100 = vmatprep.mubr.f32.mxu0 %v1937
      %2101 = vmatmul.mubr.f32.gmra.mrb[0].mxu0 %v1719
      %v2102 = vpop.f32.mrb[0].mxu0
      %v2103 = vadd.f32 0.0, %v2102
      %v2104 = vpop.f32.mrb[0].mxu0
      %2105 = vmatprep.mubr.f32.mxu0 %v1939
      %2106 = vmatmul.mubr.f32.gmra.mrb[0].mxu0 %v1723
      %v2107 = vpop.f32.mrb[0].mxu0
      %v2108 = vadd.f32 0.0, %v2107
      %v2109 = vpop.f32.mrb[0].mxu0
      %2110 = vmatprep.mubr.f32.mxu0 %v1941
      %2111 = vmatmul.mubr.f32.gmra.mrb[0].mxu0 %v1727
      %v2112 = vpop.f32.mrb[0].mxu0
      %v2113 = vadd.f32 0.0, %v2112
      %v2114 = vpop.f32.mrb[0].mxu0
      %2115 = vmatprep.mubr.f32.mxu0 %v1943
      %2116 = vmatmul.mubr.f32.gmra.mrb[0].mxu0 %v1731
      %v2117 = vpop.f32.mrb[0].mxu0
      %v2118 = vadd.f32 0.0, %v2117
      %v2119 = vpop.f32.mrb[0].mxu0
      %2120 = vmatprep.mubr.f32.mxu0 %v1945
      %2121 = vmatmul.mubr.f32.gmra.mrb[0].mxu0 %v1735
      %v2122 = vpop.f32.mrb[0].mxu0
      %v2123 = vadd.f32 0.0, %v2122
      %v2124 = vpop.f32.mrb[0].mxu0
      %2125 = vmatprep.mubr.f32.mxu0 %v1947
      %2126 = vmatmul.mubr.f32.gmra.mrb[0].mxu0 %v1739
      %v2127 = vpop.f32.mrb[0].mxu0
      %v2128 = vadd.f32 0.0, %v2127
      %v2129 = vpop.f32.mrb[0].mxu0
      %2130 = vmatprep.mubr.f32.mxu0 %v1949
      %2131 = vmatmul.mubr.f32.gmra.mrb[0].mxu0 %v1743
      %v2132 = vpop.f32.mrb[0].mxu0
      %v2133 = vadd.f32 0.0, %v2132
      %v2134 = vpop.f32.mrb[0].mxu0
      %2135 = vmatprep.mubr.f32.mxu0 %v1951
      %2136 = vmatmul.mubr.f32.gmra.mrb[0].mxu0 %v1747
      %v2137 = vpop.f32.mrb[0].mxu0
      %v2138 = vadd.f32 0.0, %v2137
      %v2139 = vpop.f32.mrb[0].mxu0
      %2140 = vmatprep.mubr.f32.mxu0 %v1953
      %2141 = vmatmul.mubr.f32.gmra.mrb[0].mxu0 %v1751
      %v2142 = vpop.f32.mrb[0].mxu0
      %v2143 = vadd.f32 0.0, %v2142
      %v2144 = vpop.f32.mrb[0].mxu0
      %2145 = vmatprep.mubr.f32.mxu0 %v1955
      %2146 = vmatmul.mubr.f32.gmra.mrb[0].mxu0 %v1755
      %v2147 = vpop.f32.mrb[0].mxu0
      %v2148 = vadd.f32 0.0, %v2147
      %v2149 = vpop.f32.mrb[0].mxu0
      %2150 = vmatprep.mubr.f32.mxu0 %v1957
      %2151 = vmatmul.mubr.f32.gmra.mrb[0].mxu0 %v1759
      %v2152 = vpop.f32.mrb[0].mxu0
      %v2153 = vadd.f32 0.0, %v2152
      %v2154 = vpop.f32.mrb[0].mxu0
      %2155 = vmatprep.mubr.f32.mxu0 %v1959
      %2156 = vmatmul.mubr.f32.gmra.mrb[0].mxu0 %v1763
      %v2157 = vpop.f32.mrb[0].mxu0
      %v2158 = vadd.f32 0.0, %v2157
      %v2159 = vpop.f32.mrb[0].mxu0
      %2160 = vmatprep.mubr.f32.mxu0 %v1961
      %2161 = vmatmul.mubr.f32.gmra.mrb[0].mxu0 %v1767
      %v2162 = vpop.f32.mrb[0].mxu0
      %v2163 = vadd.f32 0.0, %v2162
      %v2164 = vpop.f32.mrb[0].mxu0
      %2165 = vmatprep.mubr.f32.mxu0 %v1963
      %2166 = vmatmul.mubr.f32.gmra.mrb[0].mxu0 %v1771
      %v2167 = vpop.f32.mrb[0].mxu0
      %v2168 = vadd.f32 0.0, %v2167
      %v2169 = vpop.f32.mrb[0].mxu0
      %2170 = vmatprep.mubr.f32.mxu0 %v1965
      %2171 = vmatmul.mubr.f32.gmra.mrb[0].mxu0 %v1775
      %v2172 = vpop.f32.mrb[0].mxu0
      %v2173 = vadd.f32 0.0, %v2172
      %v2174 = vpop.f32.mrb[0].mxu0
      %2175 = vmatprep.mubr.f32.mxu0 %v1967
      %2176 = vmatmul.mubr.f32.gmra.mrb[0].mxu0 %v1779
      %v2177 = vpop.f32.mrb[0].mxu0
      %v2178 = vadd.f32 0.0, %v2177
      %v2179 = vpop.f32.mrb[0].mxu0
      %2180 = vmatprep.mubr.f32.mxu0 %v1969
      %2181 = vmatmul.mubr.f32.gmra.mrb[0].mxu0 %v1783
      %v2182 = vpop.f32.mrb[0].mxu0
      %v2183 = vadd.f32 0.0, %v2182
      %v2184 = vpop.f32.mrb[0].mxu0
      %2185 = vmatprep.mubr.f32.mxu0 %v1971
      %2186 = vmatmul.mubr.f32.gmra.mrb[0].mxu0 %v1787
      %v2187 = vpop.f32.mrb[0].mxu0
      %v2188 = vadd.f32 0.0, %v2187
      %v2189 = vpop.f32.mrb[0].mxu0
      %2190 = vmatprep.mubr.f32.mxu0 %v1973
      %2191 = vmatmul.mubr.f32.gmra.mrb[0].mxu0 %v1791
      %v2192 = vpop.f32.mrb[0].mxu0
      %v2193 = vadd.f32 0.0, %v2192
      %v2194 = vpop.f32.mrb[0].mxu0
      %2195 = vmatprep.mubr.f32.mxu0 %v1975
      %2196 = vmatmul.mubr.f32.gmra.mrb[0].mxu0 %v1795
      %v2197 = vpop.f32.mrb[0].mxu0
      %v2198 = vadd.f32 0.0, %v2197
      %v2199 = vpop.f32.mrb[0].mxu0
      %2200 = vmatprep.mubr.f32.mxu0 %v1977
      %2201 = vmatmul.mubr.f32.gmra.mrb[0].mxu0 %v1799
      %v2202 = vpop.f32.mrb[0].mxu0
      %v2203 = vadd.f32 0.0, %v2202
      %v2204 = vpop.f32.mrb[0].mxu0
      %2205 = vmatprep.mubr.f32.mxu0 %v1979
      %2206 = vmatmul.mubr.f32.gmra.mrb[0].mxu0 %v1803
      %v2207 = vpop.f32.mrb[0].mxu0
      %v2208 = vadd.f32 0.0, %v2207
      %v2209 = vpop.f32.mrb[0].mxu0
      %2210 = vmatprep.mubr.f32.mxu0 %v1981
      %2211 = vmatmul.mubr.f32.gmra.mrb[0].mxu0 %v1807
      %v2212 = vpop.f32.mrb[0].mxu0
      %v2213 = vadd.f32 0.0, %v2212
      %v2214 = vpop.f32.mrb[0].mxu0
      %2215 = vmatprep.mubr.f32.mxu0 %v1983
      %2216 = vmatmul.mubr.f32.gmra.mrb[0].mxu0 %v1811
      %v2217 = vpop.f32.mrb[0].mxu0
      %v2218 = vadd.f32 0.0, %v2217
      %v2219 = vpop.f32.mrb[0].mxu0
      %2220 = vmatprep.mubr.f32.mxu0 %v1985
      %2221 = vmatmul.mubr.f32.gmra.mrb[0].mxu0 %v1815
      %v2222 = vpop.f32.mrb[0].mxu0
      %v2223 = vadd.f32 0.0, %v2222
      %v2224 = vpop.f32.mrb[0].mxu0
      %2225 = vmatprep.mubr.f32.mxu0 %v1987
      %2226 = vmatmul.mubr.f32.gmra.mrb[0].mxu0 %v1819
      %v2227 = vpop.f32.mrb[0].mxu0
      %v2228 = vadd.f32 0.0, %v2227
      %v2229 = vpop.f32.mrb[0].mxu0
      %2230 = vmatprep.mubr.f32.mxu0 %v1989
      %2231 = vmatmul.mubr.f32.gmra.mrb[0].mxu0 %v1823
      %v2232 = vpop.f32.mrb[0].mxu0
      %v2233 = vadd.f32 0.0, %v2232
      %v2234 = vpop.f32.mrb[0].mxu0
      %2235 = vmatprep.mubr.f32.mxu0 %v1991
      %2236 = vmatmul.mubr.f32.gmra.mrb[0].mxu0 %v1827
      %v2237 = vpop.f32.mrb[0].mxu0
      %v2238 = vadd.f32 0.0, %v2237
      %v2239 = vpop.f32.mrb[0].mxu0
      %2240 = vmatprep.mubr.f32.mxu0 %v1993
      %2241 = vmatmul.mubr.f32.gmra.mrb[0].mxu0 %v1831
      %v2242 = vpop.f32.mrb[0].mxu0
      %v2243 = vadd.f32 0.0, %v2242
      %v2244 = vpop.f32.mrb[0].mxu0
      %2245 = vmatprep.mubr.f32.mxu0 %v1995
      %2246 = vmatmul.mubr.f32.gmra.mrb[0].mxu0 %v1835
      %v2247 = vpop.f32.mrb[0].mxu0
      %v2248 = vadd.f32 0.0, %v2247
      %v2249 = vpop.f32.mrb[0].mxu0
      %2250 = vmatprep.mubr.f32.mxu0 %v1997
      %2251 = vmatmul.mubr.f32.gmra.mrb[0].mxu0 %v1839
      %v2252 = vpop.f32.mrb[0].mxu0
      %v2253 = vadd.f32 0.0, %v2252
      %v2254 = vpop.f32.mrb[0].mxu0
      %2255 = vmatprep.mubr.f32.mxu0 %v1999
      %2256 = vmatmul.mubr.f32.gmra.mrb[0].mxu0 %v1843
      %v2257 = vpop.f32.mrb[0].mxu0
      %v2258 = vadd.f32 0.0, %v2257
      %v2259 = vpop.f32.mrb[0].mxu0
      %2260 = vmatprep.mubr.f32.mxu0 %v2001
      %2261 = vmatmul.mubr.f32.gmra.mrb[0].mxu0 %v1847
      %v2262 = vpop.f32.mrb[0].mxu0
      %v2263 = vadd.f32 0.0, %v2262
      %v2264 = vpop.f32.mrb[0].mxu0
      %2265 = vmatprep.mubr.f32.mxu0 %v2003
      %2266 = vmatmul.mubr.f32.gmra.mrb[0].mxu0 %v1851
      %v2267 = vpop.f32.mrb[0].mxu0
      %v2268 = vadd.f32 0.0, %v2267
      %v2269 = vpop.f32.mrb[0].mxu0
      %2270 = vmatprep.mubr.f32.mxu0 %v2005
      %2271 = vmatmul.mubr.f32.gmra.mrb[0].mxu0 %v1855
      %v2272 = vpop.f32.mrb[0].mxu0
      %v2273 = vadd.f32 0.0, %v2272
      %v2274 = vpop.f32.mrb[0].mxu0
      %2275 = vmatprep.mubr.f32.mxu0 %v2007
      %2276 = vmatmul.mubr.f32.gmra.mrb[0].mxu0 %v1859
      %v2277 = vpop.f32.mrb[0].mxu0
      %v2278 = vadd.f32 0.0, %v2277
      %v2279 = vpop.f32.mrb[0].mxu0
      %2280 = vmatprep.mubr.f32.mxu0 %v2009
      %2281 = vmatmul.mubr.f32.gmra.mrb[0].mxu0 %v1863
      %v2282 = vpop.f32.mrb[0].mxu0
      %v2283 = vadd.f32 0.0, %v2282
      %v2284 = vpop.f32.mrb[0].mxu0
      %2285 = vmatprep.mubr.f32.mxu0 %v2011
      %2286 = vmatmul.mubr.f32.gmra.mrb[0].mxu0 %v1867
      %v2287 = vpop.f32.mrb[0].mxu0
      %v2288 = vadd.f32 0.0, %v2287
      %v2289 = vpop.f32.mrb[0].mxu0
      %2290 = vmatprep.mubr.f32.mxu0 %v2013
      %2291 = vmatmul.mubr.f32.gmra.mrb[0].mxu0 %v1871
      %v2292 = vpop.f32.mrb[0].mxu0
      %v2293 = vadd.f32 0.0, %v2292
      %v2294 = vpop.f32.mrb[0].mxu0
      %2295 = vmatprep.mubr.f32.mxu0 %v2015
      %2296 = vmatmul.mubr.f32.gmra.mrb[0].mxu0 %v1875
      %v2297 = vpop.f32.mrb[0].mxu0
      %v2298 = vadd.f32 0.0, %v2297
      %v2299 = vpop.f32.mrb[0].mxu0
      %2300 = vmatprep.mubr.f32.mxu0 %v2017
      %2301 = vmatmul.mubr.f32.gmra.mrb[0].mxu0 %v1879
      %v2302 = vpop.f32.mrb[0].mxu0
      %v2303 = vadd.f32 0.0, %v2302
      %v2304 = vpop.f32.mrb[0].mxu0
      %2305 = vmatprep.mubr.f32.mxu0 %v2019
      %2306 = vmatmul.mubr.f32.gmra.mrb[0].mxu0 %v1883
      %v2307 = vpop.f32.mrb[0].mxu0
      %v2308 = vadd.f32 0.0, %v2307
      %v2309 = vpop.f32.mrb[0].mxu0
      %2310 = vdwg.mxu0
      %vm2314 = vcmask 1042432
      %v2315 = vrot.slane %v1585, 5
      %v2316 = vsel %vm2314, %v2315, %v2315
      %v2317 = vrot.slane %v1497, 5
      %v2318 = vsel %vm2314, %v2317, %v2317
      %v2319 = vrot.slane %v1586, 5
      %v2320 = vsel %vm2314, %v2315, %v2319
      %v2321 = vrot.slane %v1499, 5
      %v2322 = vsel %vm2314, %v2317, %v2321
      %v2323 = vrot.slane %v1587, 5
      %v2324 = vsel %vm2314, %v2319, %v2323
      %v2325 = vrot.slane %v1501, 5
      %v2326 = vsel %vm2314, %v2321, %v2325
      %v2327 = vrot.slane %v1588, 5
      %v2328 = vsel %vm2314, %v2323, %v2327
      %v2329 = vrot.slane %v1503, 5
      %v2330 = vsel %vm2314, %v2325, %v2329
      %v2331 = vrot.slane %v1589, 5
      %v2332 = vsel %vm2314, %v2327, %v2331
      %v2333 = vrot.slane %v1505, 5
      %v2334 = vsel %vm2314, %v2329, %v2333
      %v2335 = vrot.slane %v1590, 5
      %v2336 = vsel %vm2314, %v2331, %v2335
      %v2337 = vrot.slane %v1507, 5
      %v2338 = vsel %vm2314, %v2333, %v2337
      %v2339 = vrot.slane %v1591, 5
      %v2340 = vsel %vm2314, %v2335, %v2339
      %v2341 = vrot.slane %v1509, 5
      %v2342 = vsel %vm2314, %v2337, %v2341
      %v2343 = vrot.slane %v1592, 5
      %v2344 = vsel %vm2314, %v2339, %v2343
      %v2345 = vrot.slane %v1511, 5
      %v2346 = vsel %vm2314, %v2341, %v2345
      %v2347 = vrot.slane %v1593, 5
      %v2348 = vsel %vm2314, %v2343, %v2347
      %v2349 = vrot.slane %v1513, 5
      %v2350 = vsel %vm2314, %v2345, %v2349
      %v2351 = vrot.slane %v1594, 5
      %v2352 = vsel %vm2314, %v2347, %v2351
      %v2353 = vrot.slane %v1515, 5
      %v2354 = vsel %vm2314, %v2349, %v2353
      %v2355 = vrot.slane %v1595, 5
      %v2356 = vsel %vm2314, %v2351, %v2355
      %v2357 = vrot.slane %v1517, 5
      %v2358 = vsel %vm2314, %v2353, %v2357
      %v2359 = vrot.slane %v1596, 5
      %v2360 = vsel %vm2314, %v2355, %v2359
      %v2361 = vrot.slane %v1519, 5
      %v2362 = vsel %vm2314, %v2357, %v2361
      %v2363 = vrot.slane %v1597, 5
      %v2364 = vsel %vm2314, %v2359, %v2363
      %v2365 = vrot.slane %v1521, 5
      %v2366 = vsel %vm2314, %v2361, %v2365
      %v2367 = vrot.slane %v1598, 5
      %v2368 = vsel %vm2314, %v2363, %v2367
      %v2369 = vrot.slane %v1523, 5
      %v2370 = vsel %vm2314, %v2365, %v2369
      %v2371 = vrot.slane %v1599, 5
      %v2372 = vsel %vm2314, %v2367, %v2371
      %v2373 = vrot.slane %v1525, 5
      %v2374 = vsel %vm2314, %v2369, %v2373
      %v2375 = vrot.slane %v1600, 5
      %v2376 = vsel %vm2314, %v2371, %v2375
      %v2377 = vrot.slane %v1527, 5
      %v2378 = vsel %vm2314, %v2373, %v2377
      %v2379 = vrot.slane %v1601, 5
      %v2380 = vsel %vm2314, %v2375, %v2379
      %v2381 = vrot.slane %v1529, 5
      %v2382 = vsel %vm2314, %v2377, %v2381
      %v2383 = vrot.slane %v1602, 5
      %v2384 = vsel %vm2314, %v2379, %v2383
      %v2385 = vrot.slane %v1531, 5
      %v2386 = vsel %vm2314, %v2381, %v2385
      %v2387 = vrot.slane %v1603, 5
      %v2388 = vsel %vm2314, %v2383, %v2387
      %v2389 = vrot.slane %v1533, 5
      %v2390 = vsel %vm2314, %v2385, %v2389
      %v2391 = vrot.slane %v1604, 5
      %v2392 = vsel %vm2314, %v2387, %v2391
      %v2393 = vrot.slane %v1535, 5
      %v2394 = vsel %vm2314, %v2389, %v2393
      %v2395 = vrot.slane %v1605, 5
      %v2396 = vsel %vm2314, %v2391, %v2395
      %v2397 = vrot.slane %v1537, 5
      %v2398 = vsel %vm2314, %v2393, %v2397
      %v2399 = vrot.slane %v1606, 5
      %v2400 = vsel %vm2314, %v2395, %v2399
      %v2401 = vrot.slane %v1539, 5
      %v2402 = vsel %vm2314, %v2397, %v2401
      %v2403 = vrot.slane %v1607, 5
      %v2404 = vsel %vm2314, %v2399, %v2403
      %v2405 = vrot.slane %v1541, 5
      %v2406 = vsel %vm2314, %v2401, %v2405
      %v2407 = vrot.slane %v1608, 5
      %v2408 = vsel %vm2314, %v2403, %v2407
      %v2409 = vrot.slane %v1543, 5
      %v2410 = vsel %vm2314, %v2405, %v2409
      %v2411 = vrot.slane %v1609, 5
      %v2412 = vsel %vm2314, %v2407, %v2411
      %v2413 = vrot.slane %v1545, 5
      %v2414 = vsel %vm2314, %v2409, %v2413
      %v2415 = vrot.slane %v1610, 5
      %v2416 = vsel %vm2314, %v2411, %v2415
      %v2417 = vrot.slane %v1547, 5
      %v2418 = vsel %vm2314, %v2413, %v2417
      %v2419 = vrot.slane %v1611, 5
      %v2420 = vsel %vm2314, %v2415, %v2419
      %v2421 = vrot.slane %v1549, 5
      %v2422 = vsel %vm2314, %v2417, %v2421
      %v2423 = vrot.slane %v1612, 5
      %v2424 = vsel %vm2314, %v2419, %v2423
      %v2425 = vrot.slane %v1551, 5
      %v2426 = vsel %vm2314, %v2421, %v2425
      %v2427 = vrot.slane %v1613, 5
      %v2428 = vsel %vm2314, %v2423, %v2427
      %v2429 = vrot.slane %v1553, 5
      %v2430 = vsel %vm2314, %v2425, %v2429
      %v2431 = vrot.slane %v1614, 5
      %v2432 = vsel %vm2314, %v2427, %v2431
      %v2433 = vrot.slane %v1555, 5
      %v2434 = vsel %vm2314, %v2429, %v2433
      %v2435 = vrot.slane %v1615, 5
      %v2436 = vsel %vm2314, %v2431, %v2435
      %v2437 = vrot.slane %v1557, 5
      %v2438 = vsel %vm2314, %v2433, %v2437
      %v2439 = vrot.slane %v1616, 5
      %v2440 = vsel %vm2314, %v2435, %v2439
      %v2441 = vrot.slane %v1559, 5
      %v2442 = vsel %vm2314, %v2437, %v2441
      %v2443 = vrot.slane %v1617, 5
      %v2444 = vsel %vm2314, %v2439, %v2443
      %v2445 = vrot.slane %v1561, 5
      %v2446 = vsel %vm2314, %v2441, %v2445
      %v2447 = vrot.slane %v1618, 5
      %v2448 = vsel %vm2314, %v2443, %v2447
      %v2449 = vrot.slane %v1563, 5
      %v2450 = vsel %vm2314, %v2445, %v2449
      %v2451 = vrot.slane %v1619, 5
      %v2452 = vsel %vm2314, %v2447, %v2451
      %v2453 = vrot.slane %v1565, 5
      %v2454 = vsel %vm2314, %v2449, %v2453
      %v2455 = vrot.slane %v1620, 5
      %v2456 = vsel %vm2314, %v2451, %v2455
      %v2457 = vrot.slane %v1567, 5
      %v2458 = vsel %vm2314, %v2453, %v2457
      %v2459 = vrot.slane %v1621, 5
      %v2460 = vsel %vm2314, %v2455, %v2459
      %v2461 = vrot.slane %v1569, 5
      %v2462 = vsel %vm2314, %v2457, %v2461
      %v2463 = vrot.slane %v1622, 5
      %v2464 = vsel %vm2314, %v2459, %v2463
      %v2465 = vrot.slane %v1571, 5
      %v2466 = vsel %vm2314, %v2461, %v2465
      %v2467 = vrot.slane %v1623, 5
      %v2468 = vsel %vm2314, %v2463, %v2467
      %v2469 = vrot.slane %v1573, 5
      %v2470 = vsel %vm2314, %v2465, %v2469
      %v2471 = vrot.slane %v1624, 5
      %v2472 = vsel %vm2314, %v2467, %v2471
      %v2473 = vrot.slane %v1575, 5
      %v2474 = vsel %vm2314, %v2469, %v2473
      %v2475 = vrot.slane %v1625, 5
      %v2476 = vsel %vm2314, %v2471, %v2475
      %v2477 = vrot.slane %v1577, 5
      %v2478 = vsel %vm2314, %v2473, %v2477
      %v2479 = vrot.slane %v1626, 5
      %v2480 = vsel %vm2314, %v2475, %v2479
      %v2481 = vrot.slane %v1579, 5
      %v2482 = vsel %vm2314, %v2477, %v2481
      %v2483 = vrot.slane %v1627, 5
      %v2484 = vsel %vm2314, %v2479, %v2483
      %v2485 = vrot.slane %v1581, 5
      %v2486 = vsel %vm2314, %v2481, %v2485
      %v2487 = vrot.slane %v1628, 5
      %v2488 = vsel %vm2314, %v2483, %v2487
      %v2489 = vrot.slane %v1583, 5
      %v2490 = vsel %vm2314, %v2485, %v2489
      %v2491 = vrot.slane %v1629, 5
      %v2492 = vsel %vm2314, %v2487, %v2491
      %v2493 = vrot.slane %v1582, 5
      %v2494 = vsel %vm2314, %v2489, %v2493
      %v2540 = vsel %vm1584, %v2318, 0
      %v2542 = vsel %vm1584, %v2322, 0
      %v2544 = vsel %vm1584, %v2326, 0
      %v2546 = vsel %vm1584, %v2330, 0
      %v2548 = vsel %vm1584, %v2334, 0
      %v2550 = vsel %vm1584, %v2338, 0
      %v2552 = vsel %vm1584, %v2342, 0
      %v2554 = vsel %vm1584, %v2346, 0
      %v2556 = vsel %vm1584, %v2350, 0
      %v2558 = vsel %vm1584, %v2354, 0
      %v2560 = vsel %vm1584, %v2358, 0
      %v2562 = vsel %vm1584, %v2362, 0
      %v2564 = vsel %vm1584, %v2366, 0
      %v2566 = vsel %vm1584, %v2370, 0
      %v2568 = vsel %vm1584, %v2374, 0
      %v2570 = vsel %vm1584, %v2378, 0
      %v2572 = vsel %vm1584, %v2382, 0
      %v2574 = vsel %vm1584, %v2386, 0
      %v2576 = vsel %vm1584, %v2390, 0
      %v2578 = vsel %vm1584, %v2394, 0
      %v2580 = vsel %vm1584, %v2398, 0
      %v2582 = vsel %vm1584, %v2402, 0
      %v2584 = vsel %vm1584, %v2406, 0
      %v2586 = vsel %vm1584, %v2410, 0
      %v2588 = vsel %vm1584, %v2414, 0
      %v2590 = vsel %vm1584, %v2418, 0
      %v2592 = vsel %vm1584, %v2422, 0
      %v2594 = vsel %vm1584, %v2426, 0
      %v2596 = vsel %vm1584, %v2430, 0
      %v2598 = vsel %vm1584, %v2434, 0
      %v2600 = vsel %vm1584, %v2438, 0
      %v2602 = vsel %vm1584, %v2442, 0
      %v2604 = vsel %vm1584, %v2446, 0
      %v2606 = vsel %vm1584, %v2450, 0
      %v2608 = vsel %vm1584, %v2454, 0
      %v2610 = vsel %vm1584, %v2458, 0
      %v2612 = vsel %vm1584, %v2462, 0
      %v2614 = vsel %vm1584, %v2466, 0
      %v2616 = vsel %vm1584, %v2470, 0
      %v2618 = vsel %vm1584, %v2474, 0
      %v2620 = vsel %vm1584, %v2478, 0
      %v2622 = vsel %vm1584, %v2482, 0
      %v2624 = vsel %vm1584, %v2486, 0
      %v2626 = vsel %vm1584, %v2490, 0
      %v2628 = vsel %vm1584, %v2494, 0
      %2630 = vmatprep.subr.mxu0 0.0
      %2631 = vmatpush1.msra.mxu0 %v1154
      %2632 = vmatprep.subr.mxu0 0.0
      %2633 = vmatpush1.msra.mxu0 %v1155
      %2634 = vmatprep.subr.mxu0 0.0
      %2635 = vmatpush1.msra.mxu0 %v1156
      %2636 = vmatprep.subr.mxu0 0.0
      %2637 = vmatpush1.msra.mxu0 %v1157
      %2638 = vmatprep.subr.mxu0 0.0
      %2639 = vmatpush1.msra.mxu0 %v1158
      %2640 = vmatprep.subr.mxu0 0.0
      %2641 = vmatpush1.msra.mxu0 %v1159
      %2642 = vmatprep.subr.mxu0 0.0
      %2643 = vmatpush1.msra.mxu0 %v1160
      %2644 = vmatprep.subr.mxu0 0.0
      %2645 = vmatpush1.msra.mxu0 %v1161
      %2646 = vmatprep.subr.mxu0 0.0
      %2647 = vmatpush1.msra.mxu0 %v1162
      %2648 = vmatprep.subr.mxu0 0.0
      %2649 = vmatpush1.msra.mxu0 %v1163
      %2650 = vmatprep.subr.mxu0 0.0
      %2651 = vmatpush1.msra.mxu0 %v1164
      %2652 = vmatprep.subr.mxu0 0.0
      %2653 = vmatpush1.msra.mxu0 %v1165
      %2654 = vmatprep.subr.mxu0 0.0
      %2655 = vmatpush1.msra.mxu0 %v1166
      %2656 = vmatprep.subr.mxu0 0.0
      %2657 = vmatpush1.msra.mxu0 %v1167
      %2658 = vmatprep.subr.mxu0 0.0
      %2659 = vmatpush1.msra.mxu0 %v1168
      %2660 = vmatprep.subr.mxu0 0.0
      %2661 = vmatpush1.msra.mxu0 %v1169
      %2662 = vmatprep.subr.mxu0 0.0
      %2663 = vmatpush1.msra.mxu0 %v1170
      %2664 = vmatprep.subr.mxu0 0.0
      %2665 = vmatpush1.msra.mxu0 %v1171
      %2666 = vmatprep.subr.mxu0 0.0
      %2667 = vmatpush1.msra.mxu0 %v1172
      %2668 = vmatprep.subr.mxu0 0.0
      %2669 = vmatpush1.msra.mxu0 %v1173
      %2670 = vmatprep.subr.mxu0 0.0
      %2671 = vmatpush1.msra.mxu0 %v1174
      %2672 = vmatprep.subr.mxu0 0.0
      %2673 = vmatpush1.msra.mxu0 %v1175
      %2674 = vmatprep.subr.mxu0 0.0
      %2675 = vmatpush1.msra.mxu0 %v1176
      %2676 = vmatprep.subr.mxu0 0.0
      %2677 = vmatpush1.msra.mxu0 %v1177
      %2678 = vmatprep.subr.mxu0 0.0
      %2679 = vmatpush1.msra.mxu0 0.0
      %2680 = vmatprep.subr.mxu0 0.0
      %2681 = vmatpush1.msra.mxu0 0.0
      %2682 = vmatprep.subr.mxu0 0.0
      %2683 = vmatpush1.msra.mxu0 0.0
      %2684 = vmatprep.subr.mxu0 0.0
      %2685 = vmatpush1.msra.mxu0 0.0
      %2686 = vmatprep.subr.mxu0 0.0
      %2687 = vmatpush1.msra.mxu0 0.0
      %2688 = vmatprep.subr.mxu0 0.0
      %2689 = vmatpush1.msra.mxu0 0.0
      %2690 = vmatprep.subr.mxu0 0.0
      %2691 = vmatpush1.msra.mxu0 0.0
      %2692 = vmatprep.subr.mxu0 0.0
      %2693 = vmatpush1.msra.mxu0 0.0
      %2694 = vmatprep.mubr.f32.mxu0 %v2540
      %2695 = vmatmul.mubr.f32.gmra.mrb[0].mxu0 %v2316
      %v2696 = vpop.f32.mrb[0].mxu0
      %v2697 = vadd.f32 %v2088, %v2696
      %v2698 = vpop.f32.mrb[0].mxu0
      %2699 = vmatprep.mubr.f32.mxu0 %v2542
      %2700 = vmatmul.mubr.f32.gmra.mrb[0].mxu0 %v2320
      %v2701 = vpop.f32.mrb[0].mxu0
      %v2702 = vadd.f32 %v2093, %v2701
      %v2703 = vpop.f32.mrb[0].mxu0
      %2704 = vmatprep.mubr.f32.mxu0 %v2544
      %2705 = vmatmul.mubr.f32.gmra.mrb[0].mxu0 %v2324
      %v2706 = vpop.f32.mrb[0].mxu0
      %v2707 = vadd.f32 %v2098, %v2706
      %v2708 = vpop.f32.mrb[0].mxu0
      %2709 = vmatprep.mubr.f32.mxu0 %v2546
      %2710 = vmatmul.mubr.f32.gmra.mrb[0].mxu0 %v2328
      %v2711 = vpop.f32.mrb[0].mxu0
      %v2712 = vadd.f32 %v2103, %v2711
      %v2713 = vpop.f32.mrb[0].mxu0
      %2714 = vmatprep.mubr.f32.mxu0 %v2548
      %2715 = vmatmul.mubr.f32.gmra.mrb[0].mxu0 %v2332
      %v2716 = vpop.f32.mrb[0].mxu0
      %v2717 = vadd.f32 %v2108, %v2716
      %v2718 = vpop.f32.mrb[0].mxu0
      %2719 = vmatprep.mubr.f32.mxu0 %v2550
      %2720 = vmatmul.mubr.f32.gmra.mrb[0].mxu0 %v2336
      %v2721 = vpop.f32.mrb[0].mxu0
      %v2722 = vadd.f32 %v2113, %v2721
      %v2723 = vpop.f32.mrb[0].mxu0
      %2724 = vmatprep.mubr.f32.mxu0 %v2552
      %2725 = vmatmul.mubr.f32.gmra.mrb[0].mxu0 %v2340
      %v2726 = vpop.f32.mrb[0].mxu0
      %v2727 = vadd.f32 %v2118, %v2726
      %v2728 = vpop.f32.mrb[0].mxu0
      %2729 = vmatprep.mubr.f32.mxu0 %v2554
      %2730 = vmatmul.mubr.f32.gmra.mrb[0].mxu0 %v2344
      %v2731 = vpop.f32.mrb[0].mxu0
      %v2732 = vadd.f32 %v2123, %v2731
      %v2733 = vpop.f32.mrb[0].mxu0
      %2734 = vmatprep.mubr.f32.mxu0 %v2556
      %2735 = vmatmul.mubr.f32.gmra.mrb[0].mxu0 %v2348
      %v2736 = vpop.f32.mrb[0].mxu0
      %v2737 = vadd.f32 %v2128, %v2736
      %v2738 = vpop.f32.mrb[0].mxu0
      %2739 = vmatprep.mubr.f32.mxu0 %v2558
      %2740 = vmatmul.mubr.f32.gmra.mrb[0].mxu0 %v2352
      %v2741 = vpop.f32.mrb[0].mxu0
      %v2742 = vadd.f32 %v2133, %v2741
      %v2743 = vpop.f32.mrb[0].mxu0
      %2744 = vmatprep.mubr.f32.mxu0 %v2560
      %2745 = vmatmul.mubr.f32.gmra.mrb[0].mxu0 %v2356
      %v2746 = vpop.f32.mrb[0].mxu0
      %v2747 = vadd.f32 %v2138, %v2746
      %v2748 = vpop.f32.mrb[0].mxu0
      %2749 = vmatprep.mubr.f32.mxu0 %v2562
      %2750 = vmatmul.mubr.f32.gmra.mrb[0].mxu0 %v2360
      %v2751 = vpop.f32.mrb[0].mxu0
      %v2752 = vadd.f32 %v2143, %v2751
      %v2753 = vpop.f32.mrb[0].mxu0
      %2754 = vmatprep.mubr.f32.mxu0 %v2564
      %2755 = vmatmul.mubr.f32.gmra.mrb[0].mxu0 %v2364
      %v2756 = vpop.f32.mrb[0].mxu0
      %v2757 = vadd.f32 %v2148, %v2756
      %v2758 = vpop.f32.mrb[0].mxu0
      %2759 = vmatprep.mubr.f32.mxu0 %v2566
      %2760 = vmatmul.mubr.f32.gmra.mrb[0].mxu0 %v2368
      %v2761 = vpop.f32.mrb[0].mxu0
      %v2762 = vadd.f32 %v2153, %v2761
      %v2763 = vpop.f32.mrb[0].mxu0
      %2764 = vmatprep.mubr.f32.mxu0 %v2568
      %2765 = vmatmul.mubr.f32.gmra.mrb[0].mxu0 %v2372
      %v2766 = vpop.f32.mrb[0].mxu0
      %v2767 = vadd.f32 %v2158, %v2766
      %v2768 = vpop.f32.mrb[0].mxu0
      %2769 = vmatprep.mubr.f32.mxu0 %v2570
      %2770 = vmatmul.mubr.f32.gmra.mrb[0].mxu0 %v2376
      %v2771 = vpop.f32.mrb[0].mxu0
      %v2772 = vadd.f32 %v2163, %v2771
      %v2773 = vpop.f32.mrb[0].mxu0
      %2774 = vmatprep.mubr.f32.mxu0 %v2572
      %2775 = vmatmul.mubr.f32.gmra.mrb[0].mxu0 %v2380
      %v2776 = vpop.f32.mrb[0].mxu0
      %v2777 = vadd.f32 %v2168, %v2776
      %v2778 = vpop.f32.mrb[0].mxu0
      %2779 = vmatprep.mubr.f32.mxu0 %v2574
      %2780 = vmatmul.mubr.f32.gmra.mrb[0].mxu0 %v2384
      %v2781 = vpop.f32.mrb[0].mxu0
      %v2782 = vadd.f32 %v2173, %v2781
      %v2783 = vpop.f32.mrb[0].mxu0
      %2784 = vmatprep.mubr.f32.mxu0 %v2576
      %2785 = vmatmul.mubr.f32.gmra.mrb[0].mxu0 %v2388
      %v2786 = vpop.f32.mrb[0].mxu0
      %v2787 = vadd.f32 %v2178, %v2786
      %v2788 = vpop.f32.mrb[0].mxu0
      %2789 = vmatprep.mubr.f32.mxu0 %v2578
      %2790 = vmatmul.mubr.f32.gmra.mrb[0].mxu0 %v2392
      %v2791 = vpop.f32.mrb[0].mxu0
      %v2792 = vadd.f32 %v2183, %v2791
      %v2793 = vpop.f32.mrb[0].mxu0
      %2794 = vmatprep.mubr.f32.mxu0 %v2580
      %2795 = vmatmul.mubr.f32.gmra.mrb[0].mxu0 %v2396
      %v2796 = vpop.f32.mrb[0].mxu0
      %v2797 = vadd.f32 %v2188, %v2796
      %v2798 = vpop.f32.mrb[0].mxu0
      %2799 = vmatprep.mubr.f32.mxu0 %v2582
      %2800 = vmatmul.mubr.f32.gmra.mrb[0].mxu0 %v2400
      %v2801 = vpop.f32.mrb[0].mxu0
      %v2802 = vadd.f32 %v2193, %v2801
      %v2803 = vpop.f32.mrb[0].mxu0
      %2804 = vmatprep.mubr.f32.mxu0 %v2584
      %2805 = vmatmul.mubr.f32.gmra.mrb[0].mxu0 %v2404
      %v2806 = vpop.f32.mrb[0].mxu0
      %v2807 = vadd.f32 %v2198, %v2806
      %v2808 = vpop.f32.mrb[0].mxu0
      %2809 = vmatprep.mubr.f32.mxu0 %v2586
      %2810 = vmatmul.mubr.f32.gmra.mrb[0].mxu0 %v2408
      %v2811 = vpop.f32.mrb[0].mxu0
      %v2812 = vadd.f32 %v2203, %v2811
      %v2813 = vpop.f32.mrb[0].mxu0
      %2814 = vmatprep.mubr.f32.mxu0 %v2588
      %2815 = vmatmul.mubr.f32.gmra.mrb[0].mxu0 %v2412
      %v2816 = vpop.f32.mrb[0].mxu0
      %v2817 = vadd.f32 %v2208, %v2816
      %v2818 = vpop.f32.mrb[0].mxu0
      %2819 = vmatprep.mubr.f32.mxu0 %v2590
      %2820 = vmatmul.mubr.f32.gmra.mrb[0].mxu0 %v2416
      %v2821 = vpop.f32.mrb[0].mxu0
      %v2822 = vadd.f32 %v2213, %v2821
      %v2823 = vpop.f32.mrb[0].mxu0
      %2824 = vmatprep.mubr.f32.mxu0 %v2592
      %2825 = vmatmul.mubr.f32.gmra.mrb[0].mxu0 %v2420
      %v2826 = vpop.f32.mrb[0].mxu0
      %v2827 = vadd.f32 %v2218, %v2826
      %v2828 = vpop.f32.mrb[0].mxu0
      %2829 = vmatprep.mubr.f32.mxu0 %v2594
      %2830 = vmatmul.mubr.f32.gmra.mrb[0].mxu0 %v2424
      %v2831 = vpop.f32.mrb[0].mxu0
      %v2832 = vadd.f32 %v2223, %v2831
      %v2833 = vpop.f32.mrb[0].mxu0
      %2834 = vmatprep.mubr.f32.mxu0 %v2596
      %2835 = vmatmul.mubr.f32.gmra.mrb[0].mxu0 %v2428
      %v2836 = vpop.f32.mrb[0].mxu0
      %v2837 = vadd.f32 %v2228, %v2836
      %v2838 = vpop.f32.mrb[0].mxu0
      %2839 = vmatprep.mubr.f32.mxu0 %v2598
      %2840 = vmatmul.mubr.f32.gmra.mrb[0].mxu0 %v2432
      %v2841 = vpop.f32.mrb[0].mxu0
      %v2842 = vadd.f32 %v2233, %v2841
      %v2843 = vpop.f32.mrb[0].mxu0
      %2844 = vmatprep.mubr.f32.mxu0 %v2600
      %2845 = vmatmul.mubr.f32.gmra.mrb[0].mxu0 %v2436
      %v2846 = vpop.f32.mrb[0].mxu0
      %v2847 = vadd.f32 %v2238, %v2846
      %v2848 = vpop.f32.mrb[0].mxu0
      %2849 = vmatprep.mubr.f32.mxu0 %v2602
      %2850 = vmatmul.mubr.f32.gmra.mrb[0].mxu0 %v2440
      %v2851 = vpop.f32.mrb[0].mxu0
      %v2852 = vadd.f32 %v2243, %v2851
      %v2853 = vpop.f32.mrb[0].mxu0
      %2854 = vmatprep.mubr.f32.mxu0 %v2604
      %2855 = vmatmul.mubr.f32.gmra.mrb[0].mxu0 %v2444
      %v2856 = vpop.f32.mrb[0].mxu0
      %v2857 = vadd.f32 %v2248, %v2856
      %v2858 = vpop.f32.mrb[0].mxu0
      %2859 = vmatprep.mubr.f32.mxu0 %v2606
      %2860 = vmatmul.mubr.f32.gmra.mrb[0].mxu0 %v2448
      %v2861 = vpop.f32.mrb[0].mxu0
      %v2862 = vadd.f32 %v2253, %v2861
      %v2863 = vpop.f32.mrb[0].mxu0
      %2864 = vmatprep.mubr.f32.mxu0 %v2608
      %2865 = vmatmul.mubr.f32.gmra.mrb[0].mxu0 %v2452
      %v2866 = vpop.f32.mrb[0].mxu0
      %v2867 = vadd.f32 %v2258, %v2866
      %v2868 = vpop.f32.mrb[0].mxu0
      %2869 = vmatprep.mubr.f32.mxu0 %v2610
      %2870 = vmatmul.mubr.f32.gmra.mrb[0].mxu0 %v2456
      %v2871 = vpop.f32.mrb[0].mxu0
      %v2872 = vadd.f32 %v2263, %v2871
      %v2873 = vpop.f32.mrb[0].mxu0
      %2874 = vmatprep.mubr.f32.mxu0 %v2612
      %2875 = vmatmul.mubr.f32.gmra.mrb[0].mxu0 %v2460
      %v2876 = vpop.f32.mrb[0].mxu0
      %v2877 = vadd.f32 %v2268, %v2876
      %v2878 = vpop.f32.mrb[0].mxu0
      %2879 = vmatprep.mubr.f32.mxu0 %v2614
      %2880 = vmatmul.mubr.f32.gmra.mrb[0].mxu0 %v2464
      %v2881 = vpop.f32.mrb[0].mxu0
      %v2882 = vadd.f32 %v2273, %v2881
      %v2883 = vpop.f32.mrb[0].mxu0
      %2884 = vmatprep.mubr.f32.mxu0 %v2616
      %2885 = vmatmul.mubr.f32.gmra.mrb[0].mxu0 %v2468
      %v2886 = vpop.f32.mrb[0].mxu0
      %v2887 = vadd.f32 %v2278, %v2886
      %v2888 = vpop.f32.mrb[0].mxu0
      %2889 = vmatprep.mubr.f32.mxu0 %v2618
      %2890 = vmatmul.mubr.f32.gmra.mrb[0].mxu0 %v2472
      %v2891 = vpop.f32.mrb[0].mxu0
      %v2892 = vadd.f32 %v2283, %v2891
      %v2893 = vpop.f32.mrb[0].mxu0
      %2894 = vmatprep.mubr.f32.mxu0 %v2620
      %2895 = vmatmul.mubr.f32.gmra.mrb[0].mxu0 %v2476
      %v2896 = vpop.f32.mrb[0].mxu0
      %v2897 = vadd.f32 %v2288, %v2896
      %v2898 = vpop.f32.mrb[0].mxu0
      %2899 = vmatprep.mubr.f32.mxu0 %v2622
      %2900 = vmatmul.mubr.f32.gmra.mrb[0].mxu0 %v2480
      %v2901 = vpop.f32.mrb[0].mxu0
      %v2902 = vadd.f32 %v2293, %v2901
      %v2903 = vpop.f32.mrb[0].mxu0
      %2904 = vmatprep.mubr.f32.mxu0 %v2624
      %2905 = vmatmul.mubr.f32.gmra.mrb[0].mxu0 %v2484
      %v2906 = vpop.f32.mrb[0].mxu0
      %v2907 = vadd.f32 %v2298, %v2906
      %v2908 = vpop.f32.mrb[0].mxu0
      %2909 = vmatprep.mubr.f32.mxu0 %v2626
      %2910 = vmatmul.mubr.f32.gmra.mrb[0].mxu0 %v2488
      %v2911 = vpop.f32.mrb[0].mxu0
      %v2912 = vadd.f32 %v2303, %v2911
      %v2913 = vpop.f32.mrb[0].mxu0
      %2914 = vmatprep.mubr.f32.mxu0 %v2628
      %2915 = vmatmul.mubr.f32.gmra.mrb[0].mxu0 %v2492
      %v2916 = vpop.f32.mrb[0].mxu0
      %v2917 = vadd.f32 %v2308, %v2916
      %v2918 = vpop.f32.mrb[0].mxu0
      %2919 = vdwg.mxu0
      %v2920 = vsel %vm1271, %v1634, %v1272
      %2921 = vrot.lane.b32.xlu0 %v2920, 64
      %v2922 = vpop.permute.xlu0 %2921
      %2923 = vrot.lane.b32.xlu0 %v1272, 64
      %v2924 = vpop.permute.xlu0 %2923
      %v2927 = vsel %vm1584, %v1153, %v2922
      %v2928 = vsel %vm1584, 0.0, %v2924
      %v2931 = vrot.slane %v1589, 1
      %v2932 = vrot.slane %v1590, 1
      %v2933 = vsel %vm1271, %v2931, %v2932
      %v2934 = vrot.slane %v1505, 1
      %v2935 = vrot.slane %v1507, 1
      %v2936 = vsel %vm1271, %v2934, %v2935
      %v2937 = vrot.slane %v1591, 1
      %v2938 = vsel %vm1271, %v2932, %v2937
      %v2939 = vrot.slane %v1509, 1
      %v2940 = vsel %vm1271, %v2935, %v2939
      %v2941 = vrot.slane %v1592, 1
      %v2942 = vsel %vm1271, %v2937, %v2941
      %v2943 = vrot.slane %v1511, 1
      %v2944 = vsel %vm1271, %v2939, %v2943
      %v2945 = vrot.slane %v1593, 1
      %v2946 = vsel %vm1271, %v2941, %v2945
      %v2947 = vrot.slane %v1513, 1
      %v2948 = vsel %vm1271, %v2943, %v2947
      %v2949 = vrot.slane %v1594, 1
      %v2950 = vsel %vm1271, %v2945, %v2949
      %v2951 = vrot.slane %v1515, 1
      %v2952 = vsel %vm1271, %v2947, %v2951
      %v2953 = vrot.slane %v1595, 1
      %v2954 = vsel %vm1271, %v2949, %v2953
      %v2955 = vrot.slane %v1517, 1
      %v2956 = vsel %vm1271, %v2951, %v2955
      %v2957 = vrot.slane %v1596, 1
      %v2958 = vsel %vm1271, %v2953, %v2957
      %v2959 = vrot.slane %v1519, 1
      %v2960 = vsel %vm1271, %v2955, %v2959
      %v2961 = vrot.slane %v1597, 1
      %v2962 = vsel %vm1271, %v2957, %v2961
      %v2963 = vrot.slane %v1521, 1
      %v2964 = vsel %vm1271, %v2959, %v2963
      %v2965 = vrot.slane %v1598, 1
      %v2966 = vsel %vm1271, %v2961, %v2965
      %v2967 = vrot.slane %v1523, 1
      %v2968 = vsel %vm1271, %v2963, %v2967
      %v2969 = vrot.slane %v1599, 1
      %v2970 = vsel %vm1271, %v2965, %v2969
      %v2971 = vrot.slane %v1525, 1
      %v2972 = vsel %vm1271, %v2967, %v2971
      %v2973 = vrot.slane %v1600, 1
      %v2974 = vsel %vm1271, %v2969, %v2973
      %v2975 = vrot.slane %v1527, 1
      %v2976 = vsel %vm1271, %v2971, %v2975
      %v2977 = vrot.slane %v1601, 1
      %v2978 = vsel %vm1271, %v2973, %v2977
      %v2979 = vrot.slane %v1529, 1
      %v2980 = vsel %vm1271, %v2975, %v2979
      %v2981 = vrot.slane %v1602, 1
      %v2982 = vsel %vm1271, %v2977, %v2981
      %v2983 = vrot.slane %v1531, 1
      %v2984 = vsel %vm1271, %v2979, %v2983
      %v2985 = vrot.slane %v1603, 1
      %v2986 = vsel %vm1271, %v2981, %v2985
      %v2987 = vrot.slane %v1533, 1
      %v2988 = vsel %vm1271, %v2983, %v2987
      %v2989 = vrot.slane %v1604, 1
      %v2990 = vsel %vm1271, %v2985, %v2989
      %v2991 = vrot.slane %v1535, 1
      %v2992 = vsel %vm1271, %v2987, %v2991
      %v2993 = vrot.slane %v1605, 1
      %v2994 = vsel %vm1271, %v2989, %v2993
      %v2995 = vrot.slane %v1537, 1
      %v2996 = vsel %vm1271, %v2991, %v2995
      %v2997 = vrot.slane %v1606, 1
      %v2998 = vsel %vm1271, %v2993, %v2997
      %v2999 = vrot.slane %v1539, 1
      %v3000 = vsel %vm1271, %v2995, %v2999
      %v3001 = vrot.slane %v1607, 1
      %v3002 = vsel %vm1271, %v2997, %v3001
      %v3003 = vrot.slane %v1541, 1
      %v3004 = vsel %vm1271, %v2999, %v3003
      %v3005 = vrot.slane %v1608, 1
      %v3006 = vsel %vm1271, %v3001, %v3005
      %v3007 = vrot.slane %v1543, 1
      %v3008 = vsel %vm1271, %v3003, %v3007
      %v3009 = vrot.slane %v1609, 1
      %v3010 = vsel %vm1271, %v3005, %v3009
      %v3011 = vrot.slane %v1545, 1
      %v3012 = vsel %vm1271, %v3007, %v3011
      %v3013 = vrot.slane %v1610, 1
      %v3014 = vsel %vm1271, %v3009, %v3013
      %v3015 = vrot.slane %v1547, 1
      %v3016 = vsel %vm1271, %v3011, %v3015
      %v3017 = vrot.slane %v1611, 1
      %v3018 = vsel %vm1271, %v3013, %v3017
      %v3019 = vrot.slane %v1549, 1
      %v3020 = vsel %vm1271, %v3015, %v3019
      %v3021 = vrot.slane %v1612, 1
      %v3022 = vsel %vm1271, %v3017, %v3021
      %v3023 = vrot.slane %v1551, 1
      %v3024 = vsel %vm1271, %v3019, %v3023
      %v3025 = vrot.slane %v1613, 1
      %v3026 = vsel %vm1271, %v3021, %v3025
      %v3027 = vrot.slane %v1553, 1
      %v3028 = vsel %vm1271, %v3023, %v3027
      %v3029 = vrot.slane %v1614, 1
      %v3030 = vsel %vm1271, %v3025, %v3029
      %v3031 = vrot.slane %v1555, 1
      %v3032 = vsel %vm1271, %v3027, %v3031
      %v3033 = vrot.slane %v1615, 1
      %v3034 = vsel %vm1271, %v3029, %v3033
      %v3035 = vrot.slane %v1557, 1
      %v3036 = vsel %vm1271, %v3031, %v3035
      %v3037 = vrot.slane %v1616, 1
      %v3038 = vsel %vm1271, %v3033, %v3037
      %v3039 = vrot.slane %v1559, 1
      %v3040 = vsel %vm1271, %v3035, %v3039
      %v3041 = vrot.slane %v1617, 1
      %v3042 = vsel %vm1271, %v3037, %v3041
      %v3043 = vrot.slane %v1561, 1
      %v3044 = vsel %vm1271, %v3039, %v3043
      %v3045 = vrot.slane %v1618, 1
      %v3046 = vsel %vm1271, %v3041, %v3045
      %v3047 = vrot.slane %v1563, 1
      %v3048 = vsel %vm1271, %v3043, %v3047
      %v3049 = vrot.slane %v1619, 1
      %v3050 = vsel %vm1271, %v3045, %v3049
      %v3051 = vrot.slane %v1565, 1
      %v3052 = vsel %vm1271, %v3047, %v3051
      %v3053 = vrot.slane %v1620, 1
      %v3054 = vsel %vm1271, %v3049, %v3053
      %v3055 = vrot.slane %v1567, 1
      %v3056 = vsel %vm1271, %v3051, %v3055
      %v3057 = vrot.slane %v1621, 1
      %v3058 = vsel %vm1271, %v3053, %v3057
      %v3059 = vrot.slane %v1569, 1
      %v3060 = vsel %vm1271, %v3055, %v3059
      %v3061 = vrot.slane %v1622, 1
      %v3062 = vsel %vm1271, %v3057, %v3061
      %v3063 = vrot.slane %v1571, 1
      %v3064 = vsel %vm1271, %v3059, %v3063
      %v3065 = vrot.slane %v1623, 1
      %v3066 = vsel %vm1271, %v3061, %v3065
      %v3067 = vrot.slane %v1573, 1
      %v3068 = vsel %vm1271, %v3063, %v3067
      %v3069 = vrot.slane %v1624, 1
      %v3070 = vsel %vm1271, %v3065, %v3069
      %v3071 = vrot.slane %v1575, 1
      %v3072 = vsel %vm1271, %v3067, %v3071
      %v3073 = vrot.slane %v1625, 1
      %v3074 = vsel %vm1271, %v3069, %v3073
      %v3075 = vrot.slane %v1577, 1
      %v3076 = vsel %vm1271, %v3071, %v3075
      %v3077 = vrot.slane %v1626, 1
      %v3078 = vsel %vm1271, %v3073, %v3077
      %v3079 = vrot.slane %v1579, 1
      %v3080 = vsel %vm1271, %v3075, %v3079
      %v3081 = vrot.slane %v1627, 1
      %v3082 = vsel %vm1271, %v3077, %v3081
      %v3083 = vrot.slane %v1581, 1
      %v3084 = vsel %vm1271, %v3079, %v3083
      %v3085 = vrot.slane %v1628, 1
      %v3086 = vsel %vm1271, %v3081, %v3085
      %v3087 = vrot.slane %v1583, 1
      %v3088 = vsel %vm1271, %v3083, %v3087
      %v3089 = vrot.slane %v1654, 1
      %v3090 = vsel %vm1271, %v3085, %v3089
      %v3091 = vrot.slane %v1649, 1
      %v3092 = vsel %vm1271, %v3087, %v3091
      %v3093 = vrot.slane %v1655, 1
      %v3094 = vsel %vm1271, %v3089, %v3093
      %v3095 = vrot.slane %v1651, 1
      %v3096 = vsel %vm1271, %v3091, %v3095
      %v3097 = vrot.slane %v2927, 1
      %v3098 = vsel %vm1271, %v3093, %v3097
      %v3099 = vrot.slane %v1652, 1
      %v3100 = vsel %vm1271, %v3095, %v3099
      %v3101 = vrot.slane %v1585, 1
      %v3102 = vsel %vm1271, %v3097, %v3101
      %v3103 = vrot.slane %v1497, 1
      %v3104 = vsel %vm1271, %v3099, %v3103
      %v3105 = vsel %vm1271, %v3101, %v3101
      %v3106 = vsel %vm1271, %v3103, %v3103
      %v3107 = vrot.slane %v2928, 1
      %v3108 = vsel %vm1271, %v3101, %v3107
      %v3109 = vrot.slane %v1496, 1
      %v3110 = vsel %vm1271, %v3103, %v3109
      %v3156 = vsel %vm1584, %v2936, 0
      %v3158 = vsel %vm1584, %v2940, 0
      %v3160 = vsel %vm1584, %v2944, 0
      %v3162 = vsel %vm1584, %v2948, 0
      %v3164 = vsel %vm1584, %v2952, 0
      %v3166 = vsel %vm1584, %v2956, 0
      %v3168 = vsel %vm1584, %v2960, 0
      %v3170 = vsel %vm1584, %v2964, 0
      %v3172 = vsel %vm1584, %v2968, 0
      %v3174 = vsel %vm1584, %v2972, 0
      %v3176 = vsel %vm1584, %v2976, 0
      %v3178 = vsel %vm1584, %v2980, 0
      %v3180 = vsel %vm1584, %v2984, 0
      %v3182 = vsel %vm1584, %v2988, 0
      %v3184 = vsel %vm1584, %v2992, 0
      %v3186 = vsel %vm1584, %v2996, 0
      %v3188 = vsel %vm1584, %v3000, 0
      %v3190 = vsel %vm1584, %v3004, 0
      %v3192 = vsel %vm1584, %v3008, 0
      %v3194 = vsel %vm1584, %v3012, 0
      %v3196 = vsel %vm1584, %v3016, 0
      %v3198 = vsel %vm1584, %v3020, 0
      %v3200 = vsel %vm1584, %v3024, 0
      %v3202 = vsel %vm1584, %v3028, 0
      %v3204 = vsel %vm1584, %v3032, 0
      %v3206 = vsel %vm1584, %v3036, 0
      %v3208 = vsel %vm1584, %v3040, 0
      %v3210 = vsel %vm1584, %v3044, 0
      %v3212 = vsel %vm1584, %v3048, 0
      %v3214 = vsel %vm1584, %v3052, 0
      %v3216 = vsel %vm1584, %v3056, 0
      %v3218 = vsel %vm1584, %v3060, 0
      %v3220 = vsel %vm1584, %v3064, 0
      %v3222 = vsel %vm1584, %v3068, 0
      %v3224 = vsel %vm1584, %v3072, 0
      %v3226 = vsel %vm1584, %v3076, 0
      %v3228 = vsel %vm1584, %v3080, 0
      %v3230 = vsel %vm1584, %v3084, 0
      %v3232 = vsel %vm1584, %v3088, 0
      %v3234 = vsel %vm1584, %v3092, 0
      %v3236 = vsel %vm1584, %v3096, 0
      %v3238 = vsel %vm1584, %v3100, 0
      %v3240 = vsel %vm1584, %v3104, 0
      %v3242 = vsel %vm1584, %v3106, 0
      %v3244 = vsel %vm1584, %v3110, 0
      %3246 = vmatprep.subr.mxu0 0.0
      %3247 = vmatpush1.msra.mxu0 %v1202
      %3248 = vmatprep.subr.mxu0 0.0
      %3249 = vmatpush1.msra.mxu0 %v1203
      %3250 = vmatprep.subr.mxu0 0.0
      %3251 = vmatpush1.msra.mxu0 %v1204
      %3252 = vmatprep.subr.mxu0 0.0
      %3253 = vmatpush1.msra.mxu0 %v1205
      %3254 = vmatprep.subr.mxu0 0.0
      %3255 = vmatpush1.msra.mxu0 %v1206
      %3256 = vmatprep.subr.mxu0 0.0
      %3257 = vmatpush1.msra.mxu0 %v1207
      %3258 = vmatprep.subr.mxu0 0.0
      %3259 = vmatpush1.msra.mxu0 %v1208
      %3260 = vmatprep.subr.mxu0 0.0
      %3261 = vmatpush1.msra.mxu0 %v1209
      %3262 = vmatprep.subr.mxu0 0.0
      %3263 = vmatpush1.msra.mxu0 %v1210
      %3264 = vmatprep.subr.mxu0 0.0
      %3265 = vmatpush1.msra.mxu0 %v1211
      %3266 = vmatprep.subr.mxu0 0.0
      %3267 = vmatpush1.msra.mxu0 %v1212
      %3268 = vmatprep.subr.mxu0 0.0
      %3269 = vmatpush1.msra.mxu0 %v1213
      %3270 = vmatprep.subr.mxu0 0.0
      %3271 = vmatpush1.msra.mxu0 %v1214
      %3272 = vmatprep.subr.mxu0 0.0
      %3273 = vmatpush1.msra.mxu0 %v1215
      %3274 = vmatprep.subr.mxu0 0.0
      %3275 = vmatpush1.msra.mxu0 %v1216
      %3276 = vmatprep.subr.mxu0 0.0
      %3277 = vmatpush1.msra.mxu0 %v1217
      %3278 = vmatprep.subr.mxu0 0.0
      %3279 = vmatpush1.msra.mxu0 %v1218
      %3280 = vmatprep.subr.mxu0 0.0
      %3281 = vmatpush1.msra.mxu0 %v1219
      %3282 = vmatprep.subr.mxu0 0.0
      %3283 = vmatpush1.msra.mxu0 %v1220
      %3284 = vmatprep.subr.mxu0 0.0
      %3285 = vmatpush1.msra.mxu0 %v1221
      %3286 = vmatprep.subr.mxu0 0.0
      %3287 = vmatpush1.msra.mxu0 %v1222
      %3288 = vmatprep.subr.mxu0 0.0
      %3289 = vmatpush1.msra.mxu0 %v1223
      %3290 = vmatprep.subr.mxu0 0.0
      %3291 = vmatpush1.msra.mxu0 %v1224
      %3292 = vmatprep.subr.mxu0 0.0
      %3293 = vmatpush1.msra.mxu0 %v1225
      %3294 = vmatprep.subr.mxu0 0.0
      %3295 = vmatpush1.msra.mxu0 0.0
      %3296 = vmatprep.subr.mxu0 0.0
      %3297 = vmatpush1.msra.mxu0 0.0
      %3298 = vmatprep.subr.mxu0 0.0
      %3299 = vmatpush1.msra.mxu0 0.0
      %3300 = vmatprep.subr.mxu0 0.0
      %3301 = vmatpush1.msra.mxu0 0.0
      %3302 = vmatprep.subr.mxu0 0.0
      %3303 = vmatpush1.msra.mxu0 0.0
      %3304 = vmatprep.subr.mxu0 0.0
      %3305 = vmatpush1.msra.mxu0 0.0
      %3306 = vmatprep.subr.mxu0 0.0
      %3307 = vmatpush1.msra.mxu0 0.0
      %3308 = vmatprep.subr.mxu0 0.0
      %3309 = vmatpush1.msra.mxu0 0.0
      %3310 = vmatprep.mubr.f32.mxu0 %v3156
      %3311 = vmatmul.mubr.f32.gmra.mrb[0].mxu0 %v2933
      %v3312 = vpop.f32.mrb[0].mxu0
      %v3313 = vadd.f32 0.0, %v3312
      %v3314 = vpop.f32.mrb[0].mxu0
      %3315 = vmatprep.mubr.f32.mxu0 %v3158
      %3316 = vmatmul.mubr.f32.gmra.mrb[0].mxu0 %v2938
      %v3317 = vpop.f32.mrb[0].mxu0
      %v3318 = vadd.f32 0.0, %v3317
      %v3319 = vpop.f32.mrb[0].mxu0
      %3320 = vmatprep.mubr.f32.mxu0 %v3160
      %3321 = vmatmul.mubr.f32.gmra.mrb[0].mxu0 %v2942
      %v3322 = vpop.f32.mrb[0].mxu0
      %v3323 = vadd.f32 0.0, %v3322
      %v3324 = vpop.f32.mrb[0].mxu0
      %3325 = vmatprep.mubr.f32.mxu0 %v3162
      %3326 = vmatmul.mubr.f32.gmra.mrb[0].mxu0 %v2946
      %v3327 = vpop.f32.mrb[0].mxu0
      %v3328 = vadd.f32 0.0, %v3327
      %v3329 = vpop.f32.mrb[0].mxu0
      %3330 = vmatprep.mubr.f32.mxu0 %v3164
      %3331 = vmatmul.mubr.f32.gmra.mrb[0].mxu0 %v2950
      %v3332 = vpop.f32.mrb[0].mxu0
      %v3333 = vadd.f32 0.0, %v3332
      %v3334 = vpop.f32.mrb[0].mxu0
      %3335 = vmatprep.mubr.f32.mxu0 %v3166
      %3336 = vmatmul.mubr.f32.gmra.mrb[0].mxu0 %v2954
      %v3337 = vpop.f32.mrb[0].mxu0
      %v3338 = vadd.f32 0.0, %v3337
      %v3339 = vpop.f32.mrb[0].mxu0
      %3340 = vmatprep.mubr.f32.mxu0 %v3168
      %3341 = vmatmul.mubr.f32.gmra.mrb[0].mxu0 %v2958
      %v3342 = vpop.f32.mrb[0].mxu0
      %v3343 = vadd.f32 0.0, %v3342
      %v3344 = vpop.f32.mrb[0].mxu0
      %3345 = vmatprep.mubr.f32.mxu0 %v3170
      %3346 = vmatmul.mubr.f32.gmra.mrb[0].mxu0 %v2962
      %v3347 = vpop.f32.mrb[0].mxu0
      %v3348 = vadd.f32 0.0, %v3347
      %v3349 = vpop.f32.mrb[0].mxu0
      %3350 = vmatprep.mubr.f32.mxu0 %v3172
      %3351 = vmatmul.mubr.f32.gmra.mrb[0].mxu0 %v2966
      %v3352 = vpop.f32.mrb[0].mxu0
      %v3353 = vadd.f32 0.0, %v3352
      %v3354 = vpop.f32.mrb[0].mxu0
      %3355 = vmatprep.mubr.f32.mxu0 %v3174
      %3356 = vmatmul.mubr.f32.gmra.mrb[0].mxu0 %v2970
      %v3357 = vpop.f32.mrb[0].mxu0
      %v3358 = vadd.f32 0.0, %v3357
      %v3359 = vpop.f32.mrb[0].mxu0
      %3360 = vmatprep.mubr.f32.mxu0 %v3176
      %3361 = vmatmul.mubr.f32.gmra.mrb[0].mxu0 %v2974
      %v3362 = vpop.f32.mrb[0].mxu0
      %v3363 = vadd.f32 0.0, %v3362
      %v3364 = vpop.f32.mrb[0].mxu0
      %3365 = vmatprep.mubr.f32.mxu0 %v3178
      %3366 = vmatmul.mubr.f32.gmra.mrb[0].mxu0 %v2978
      %v3367 = vpop.f32.mrb[0].mxu0
      %v3368 = vadd.f32 0.0, %v3367
      %v3369 = vpop.f32.mrb[0].mxu0
      %3370 = vmatprep.mubr.f32.mxu0 %v3180
      %3371 = vmatmul.mubr.f32.gmra.mrb[0].mxu0 %v2982
      %v3372 = vpop.f32.mrb[0].mxu0
      %v3373 = vadd.f32 0.0, %v3372
      %v3374 = vpop.f32.mrb[0].mxu0
      %3375 = vmatprep.mubr.f32.mxu0 %v3182
      %3376 = vmatmul.mubr.f32.gmra.mrb[0].mxu0 %v2986
      %v3377 = vpop.f32.mrb[0].mxu0
      %v3378 = vadd.f32 0.0, %v3377
      %v3379 = vpop.f32.mrb[0].mxu0
      %3380 = vmatprep.mubr.f32.mxu0 %v3184
      %3381 = vmatmul.mubr.f32.gmra.mrb[0].mxu0 %v2990
      %v3382 = vpop.f32.mrb[0].mxu0
      %v3383 = vadd.f32 0.0, %v3382
      %v3384 = vpop.f32.mrb[0].mxu0
      %3385 = vmatprep.mubr.f32.mxu0 %v3186
      %3386 = vmatmul.mubr.f32.gmra.mrb[0].mxu0 %v2994
      %v3387 = vpop.f32.mrb[0].mxu0
      %v3388 = vadd.f32 0.0, %v3387
      %v3389 = vpop.f32.mrb[0].mxu0
      %3390 = vmatprep.mubr.f32.mxu0 %v3188
      %3391 = vmatmul.mubr.f32.gmra.mrb[0].mxu0 %v2998
      %v3392 = vpop.f32.mrb[0].mxu0
      %v3393 = vadd.f32 0.0, %v3392
      %v3394 = vpop.f32.mrb[0].mxu0
      %3395 = vmatprep.mubr.f32.mxu0 %v3190
      %3396 = vmatmul.mubr.f32.gmra.mrb[0].mxu0 %v3002
      %v3397 = vpop.f32.mrb[0].mxu0
      %v3398 = vadd.f32 0.0, %v3397
      %v3399 = vpop.f32.mrb[0].mxu0
      %3400 = vmatprep.mubr.f32.mxu0 %v3192
      %3401 = vmatmul.mubr.f32.gmra.mrb[0].mxu0 %v3006
      %v3402 = vpop.f32.mrb[0].mxu0
      %v3403 = vadd.f32 0.0, %v3402
      %v3404 = vpop.f32.mrb[0].mxu0
      %3405 = vmatprep.mubr.f32.mxu0 %v3194
      %3406 = vmatmul.mubr.f32.gmra.mrb[0].mxu0 %v3010
      %v3407 = vpop.f32.mrb[0].mxu0
      %v3408 = vadd.f32 0.0, %v3407
      %v3409 = vpop.f32.mrb[0].mxu0
      %3410 = vmatprep.mubr.f32.mxu0 %v3196
      %3411 = vmatmul.mubr.f32.gmra.mrb[0].mxu0 %v3014
      %v3412 = vpop.f32.mrb[0].mxu0
      %v3413 = vadd.f32 0.0, %v3412
      %v3414 = vpop.f32.mrb[0].mxu0
      %3415 = vmatprep.mubr.f32.mxu0 %v3198
      %3416 = vmatmul.mubr.f32.gmra.mrb[0].mxu0 %v3018
      %v3417 = vpop.f32.mrb[0].mxu0
      %v3418 = vadd.f32 0.0, %v3417
      %v3419 = vpop.f32.mrb[0].mxu0
      %3420 = vmatprep.mubr.f32.mxu0 %v3200
      %3421 = vmatmul.mubr.f32.gmra.mrb[0].mxu0 %v3022
      %v3422 = vpop.f32.mrb[0].mxu0
      %v3423 = vadd.f32 0.0, %v3422
      %v3424 = vpop.f32.mrb[0].mxu0
      %3425 = vmatprep.mubr.f32.mxu0 %v3202
      %3426 = vmatmul.mubr.f32.gmra.mrb[0].mxu0 %v3026
      %v3427 = vpop.f32.mrb[0].mxu0
      %v3428 = vadd.f32 0.0, %v3427
      %v3429 = vpop.f32.mrb[0].mxu0
      %3430 = vmatprep.mubr.f32.mxu0 %v3204
      %3431 = vmatmul.mubr.f32.gmra.mrb[0].mxu0 %v3030
      %v3432 = vpop.f32.mrb[0].mxu0
      %v3433 = vadd.f32 0.0, %v3432
      %v3434 = vpop.f32.mrb[0].mxu0
      %3435 = vmatprep.mubr.f32.mxu0 %v3206
      %3436 = vmatmul.mubr.f32.gmra.mrb[0].mxu0 %v3034
      %v3437 = vpop.f32.mrb[0].mxu0
      %v3438 = vadd.f32 0.0, %v3437
      %v3439 = vpop.f32.mrb[0].mxu0
      %3440 = vmatprep.mubr.f32.mxu0 %v3208
      %3441 = vmatmul.mubr.f32.gmra.mrb[0].mxu0 %v3038
      %v3442 = vpop.f32.mrb[0].mxu0
      %v3443 = vadd.f32 0.0, %v3442
      %v3444 = vpop.f32.mrb[0].mxu0
      %3445 = vmatprep.mubr.f32.mxu0 %v3210
      %3446 = vmatmul.mubr.f32.gmra.mrb[0].mxu0 %v3042
      %v3447 = vpop.f32.mrb[0].mxu0
      %v3448 = vadd.f32 0.0, %v3447
      %v3449 = vpop.f32.mrb[0].mxu0
      %3450 = vmatprep.mubr.f32.mxu0 %v3212
      %3451 = vmatmul.mubr.f32.gmra.mrb[0].mxu0 %v3046
      %v3452 = vpop.f32.mrb[0].mxu0
      %v3453 = vadd.f32 0.0, %v3452
      %v3454 = vpop.f32.mrb[0].mxu0
      %3455 = vmatprep.mubr.f32.mxu0 %v3214
      %3456 = vmatmul.mubr.f32.gmra.mrb[0].mxu0 %v3050
      %v3457 = vpop.f32.mrb[0].mxu0
      %v3458 = vadd.f32 0.0, %v3457
      %v3459 = vpop.f32.mrb[0].mxu0
      %3460 = vmatprep.mubr.f32.mxu0 %v3216
      %3461 = vmatmul.mubr.f32.gmra.mrb[0].mxu0 %v3054
      %v3462 = vpop.f32.mrb[0].mxu0
      %v3463 = vadd.f32 0.0, %v3462
      %v3464 = vpop.f32.mrb[0].mxu0
      %3465 = vmatprep.mubr.f32.mxu0 %v3218
      %3466 = vmatmul.mubr.f32.gmra.mrb[0].mxu0 %v3058
      %v3467 = vpop.f32.mrb[0].mxu0
      %v3468 = vadd.f32 0.0, %v3467
      %v3469 = vpop.f32.mrb[0].mxu0
      %3470 = vmatprep.mubr.f32.mxu0 %v3220
      %3471 = vmatmul.mubr.f32.gmra.mrb[0].mxu0 %v3062
      %v3472 = vpop.f32.mrb[0].mxu0
      %v3473 = vadd.f32 0.0, %v3472
      %v3474 = vpop.f32.mrb[0].mxu0
      %3475 = vmatprep.mubr.f32.mxu0 %v3222
      %3476 = vmatmul.mubr.f32.gmra.mrb[0].mxu0 %v3066
      %v3477 = vpop.f32.mrb[0].mxu0
      %v3478 = vadd.f32 0.0, %v3477
      %v3479 = vpop.f32.mrb[0].mxu0
      %3480 = vmatprep.mubr.f32.mxu0 %v3224
      %3481 = vmatmul.mubr.f32.gmra.mrb[0].mxu0 %v3070
      %v3482 = vpop.f32.mrb[0].mxu0
      %v3483 = vadd.f32 0.0, %v3482
      %v3484 = vpop.f32.mrb[0].mxu0
      %3485 = vmatprep.mubr.f32.mxu0 %v3226
      %3486 = vmatmul.mubr.f32.gmra.mrb[0].mxu0 %v3074
      %v3487 = vpop.f32.mrb[0].mxu0
      %v3488 = vadd.f32 0.0, %v3487
      %v3489 = vpop.f32.mrb[0].mxu0
      %3490 = vmatprep.mubr.f32.mxu0 %v3228
      %3491 = vmatmul.mubr.f32.gmra.mrb[0].mxu0 %v3078
      %v3492 = vpop.f32.mrb[0].mxu0
      %v3493 = vadd.f32 0.0, %v3492
      %v3494 = vpop.f32.mrb[0].mxu0
      %3495 = vmatprep.mubr.f32.mxu0 %v3230
      %3496 = vmatmul.mubr.f32.gmra.mrb[0].mxu0 %v3082
      %v3497 = vpop.f32.mrb[0].mxu0
      %v3498 = vadd.f32 0.0, %v3497
      %v3499 = vpop.f32.mrb[0].mxu0
      %3500 = vmatprep.mubr.f32.mxu0 %v3232
      %3501 = vmatmul.mubr.f32.gmra.mrb[0].mxu0 %v3086
      %v3502 = vpop.f32.mrb[0].mxu0
      %v3503 = vadd.f32 0.0, %v3502
      %v3504 = vpop.f32.mrb[0].mxu0
      %3505 = vmatprep.mubr.f32.mxu0 %v3234
      %3506 = vmatmul.mubr.f32.gmra.mrb[0].mxu0 %v3090
      %v3507 = vpop.f32.mrb[0].mxu0
      %v3508 = vadd.f32 0.0, %v3507
      %v3509 = vpop.f32.mrb[0].mxu0
      %3510 = vmatprep.mubr.f32.mxu0 %v3236
      %3511 = vmatmul.mubr.f32.gmra.mrb[0].mxu0 %v3094
      %v3512 = vpop.f32.mrb[0].mxu0
      %v3513 = vadd.f32 0.0, %v3512
      %v3514 = vpop.f32.mrb[0].mxu0
      %3515 = vmatprep.mubr.f32.mxu0 %v3238
      %3516 = vmatmul.mubr.f32.gmra.mrb[0].mxu0 %v3098
      %v3517 = vpop.f32.mrb[0].mxu0
      %v3518 = vadd.f32 0.0, %v3517
      %v3519 = vpop.f32.mrb[0].mxu0
      %3520 = vmatprep.mubr.f32.mxu0 %v3240
      %3521 = vmatmul.mubr.f32.gmra.mrb[0].mxu0 %v3102
      %v3522 = vpop.f32.mrb[0].mxu0
      %v3523 = vadd.f32 0.0, %v3522
      %v3524 = vpop.f32.mrb[0].mxu0
      %3525 = vmatprep.mubr.f32.mxu0 %v3242
      %3526 = vmatmul.mubr.f32.gmra.mrb[0].mxu0 %v3105
      %v3527 = vpop.f32.mrb[0].mxu0
      %v3528 = vadd.f32 0.0, %v3527
      %v3529 = vpop.f32.mrb[0].mxu0
      %3530 = vmatprep.mubr.f32.mxu0 %v3244
      %3531 = vmatmul.mubr.f32.gmra.mrb[0].mxu0 %v3108
      %v3532 = vpop.f32.mrb[0].mxu0
      %v3533 = vadd.f32 0.0, %v3532
      %v3534 = vpop.f32.mrb[0].mxu0
      %3535 = vdwg.mxu0
      %v3536 = vadd.f32 %v2697, %v3313
      %v3537 = vadd.f32 %v2702, %v3318
      %v3538 = vadd.f32 %v2707, %v3323
      %v3539 = vadd.f32 %v2712, %v3328
      %v3540 = vadd.f32 %v2717, %v3333
      %v3541 = vadd.f32 %v2722, %v3338
      %v3542 = vadd.f32 %v2727, %v3343
      %v3543 = vadd.f32 %v2732, %v3348
      %v3544 = vadd.f32 %v2737, %v3353
      %v3545 = vadd.f32 %v2742, %v3358
      %v3546 = vadd.f32 %v2747, %v3363
      %v3547 = vadd.f32 %v2752, %v3368
      %v3548 = vadd.f32 %v2757, %v3373
      %v3549 = vadd.f32 %v2762, %v3378
      %v3550 = vadd.f32 %v2767, %v3383
      %v3551 = vadd.f32 %v2772, %v3388
      %v3552 = vadd.f32 %v2777, %v3393
      %v3553 = vadd.f32 %v2782, %v3398
      %v3554 = vadd.f32 %v2787, %v3403
      %v3555 = vadd.f32 %v2792, %v3408
      %v3556 = vadd.f32 %v2797, %v3413
      %v3557 = vadd.f32 %v2802, %v3418
      %v3558 = vadd.f32 %v2807, %v3423
      %v3559 = vadd.f32 %v2812, %v3428
      %v3560 = vadd.f32 %v2817, %v3433
      %v3561 = vadd.f32 %v2822, %v3438
      %v3562 = vadd.f32 %v2827, %v3443
      %v3563 = vadd.f32 %v2832, %v3448
      %v3564 = vadd.f32 %v2837, %v3453
      %v3565 = vadd.f32 %v2842, %v3458
      %v3566 = vadd.f32 %v2847, %v3463
      %v3567 = vadd.f32 %v2852, %v3468
      %v3568 = vadd.f32 %v2857, %v3473
      %v3569 = vadd.f32 %v2862, %v3478
      %v3570 = vadd.f32 %v2867, %v3483
      %v3571 = vadd.f32 %v2872, %v3488
      %v3572 = vadd.f32 %v2877, %v3493
      %v3573 = vadd.f32 %v2882, %v3498
      %v3574 = vadd.f32 %v2887, %v3503
      %v3575 = vadd.f32 %v2892, %v3508
      %v3576 = vadd.f32 %v2897, %v3513
      %v3577 = vadd.f32 %v2902, %v3518
      %v3578 = vadd.f32 %v2907, %v3523
      %v3579 = vadd.f32 %v2912, %v3528
      %v3580 = vadd.f32 %v2917, %v3533
      %v3582 = vlaneseq
      %v3583 = vshrl.u32 %v3582, 7
      %v3584 = vsub.s32 0, %v3583
      %v3585 = vrot.slane %v1226, %v3584
      %v3587 = vadd.f32 %v3536, %v3585
      %v3588 = vadd.f32 %v3537, %v3585
      %v3589 = vadd.f32 %v3538, %v3585
      %v3590 = vadd.f32 %v3539, %v3585
      %v3591 = vadd.f32 %v3540, %v3585
      %v3592 = vadd.f32 %v3541, %v3585
      %v3593 = vadd.f32 %v3542, %v3585
      %v3594 = vadd.f32 %v3543, %v3585
      %v3595 = vadd.f32 %v3544, %v3585
      %v3596 = vadd.f32 %v3545, %v3585
      %v3597 = vadd.f32 %v3546, %v3585
      %v3598 = vadd.f32 %v3547, %v3585
      %v3599 = vadd.f32 %v3548, %v3585
      %v3600 = vadd.f32 %v3549, %v3585
      %v3601 = vadd.f32 %v3550, %v3585
      %v3602 = vadd.f32 %v3551, %v3585
      %v3603 = vadd.f32 %v3552, %v3585
      %v3604 = vadd.f32 %v3553, %v3585
      %v3605 = vadd.f32 %v3554, %v3585
      %v3606 = vadd.f32 %v3555, %v3585
      %v3607 = vadd.f32 %v3556, %v3585
      %v3608 = vadd.f32 %v3557, %v3585
      %v3609 = vadd.f32 %v3558, %v3585
      %v3610 = vadd.f32 %v3559, %v3585
      %v3611 = vadd.f32 %v3560, %v3585
      %v3612 = vadd.f32 %v3561, %v3585
      %v3613 = vadd.f32 %v3562, %v3585
      %v3614 = vadd.f32 %v3563, %v3585
      %v3615 = vadd.f32 %v3564, %v3585
      %v3616 = vadd.f32 %v3565, %v3585
      %v3617 = vadd.f32 %v3566, %v3585
      %v3618 = vadd.f32 %v3567, %v3585
      %v3619 = vadd.f32 %v3568, %v3585
      %v3620 = vadd.f32 %v3569, %v3585
      %v3621 = vadd.f32 %v3570, %v3585
      %v3622 = vadd.f32 %v3571, %v3585
      %v3623 = vadd.f32 %v3572, %v3585
      %v3624 = vadd.f32 %v3573, %v3585
      %v3625 = vadd.f32 %v3574, %v3585
      %v3626 = vadd.f32 %v3575, %v3585
      %v3627 = vadd.f32 %v3576, %v3585
      %v3628 = vadd.f32 %v3577, %v3585
      %v3629 = vadd.f32 %v3578, %v3585
      %v3630 = vadd.f32 %v3579, %v3585
      %v3631 = vadd.f32 %v3580, %v3585
      %v3632 = vtanh.pop %v3587
      %v3633 = vtanh.pop %v3588
      %v3634 = vtanh.pop %v3589
      %v3635 = vtanh.pop %v3590
      %v3636 = vtanh.pop %v3591
      %v3637 = vtanh.pop %v3592
      %v3638 = vtanh.pop %v3593
      %v3639 = vtanh.pop %v3594
      %v3640 = vtanh.pop %v3595
      %v3641 = vtanh.pop %v3596
      %v3642 = vtanh.pop %v3597
      %v3643 = vtanh.pop %v3598
      %v3644 = vtanh.pop %v3599
      %v3645 = vtanh.pop %v3600
      %v3646 = vtanh.pop %v3601
      %v3647 = vtanh.pop %v3602
      %v3648 = vtanh.pop %v3603
      %v3649 = vtanh.pop %v3604
      %v3650 = vtanh.pop %v3605
      %v3651 = vtanh.pop %v3606
      %v3652 = vtanh.pop %v3607
      %v3653 = vtanh.pop %v3608
      %v3654 = vtanh.pop %v3609
      %v3655 = vtanh.pop %v3610
      %v3656 = vtanh.pop %v3611
      %v3657 = vtanh.pop %v3612
      %v3658 = vtanh.pop %v3613
      %v3659 = vtanh.pop %v3614
      %v3660 = vtanh.pop %v3615
      %v3661 = vtanh.pop %v3616
      %v3662 = vtanh.pop %v3617
      %v3663 = vtanh.pop %v3618
      %v3664 = vtanh.pop %v3619
      %v3665 = vtanh.pop %v3620
      %v3666 = vtanh.pop %v3621
      %v3667 = vtanh.pop %v3622
      %v3668 = vtanh.pop %v3623
      %v3669 = vtanh.pop %v3624
      %v3670 = vtanh.pop %v3625
      %v3671 = vtanh.pop %v3626
      %v3672 = vtanh.pop %v3627
      %v3673 = vtanh.pop %v3628
      %v3674 = vtanh.pop %v3629
      %v3675 = vtanh.pop %v3630
      %v3676 = vtanh.pop %v3631
      %v3677 = vmul.f32 %v3632, %v887
      %v3678 = vmul.f32 %v3633, %v892
      %v3679 = vmul.f32 %v3634, %v897
      %v3680 = vmul.f32 %v3635, %v902
      %v3681 = vmul.f32 %v3636, %v907
      %v3682 = vmul.f32 %v3637, %v912
      %v3683 = vmul.f32 %v3638, %v917
      %v3684 = vmul.f32 %v3639, %v922
      %v3685 = vmul.f32 %v3640, %v927
      %v3686 = vmul.f32 %v3641, %v932
      %v3687 = vmul.f32 %v3642, %v937
      %v3688 = vmul.f32 %v3643, %v942
      %v3689 = vmul.f32 %v3644, %v947
      %v3690 = vmul.f32 %v3645, %v952
      %v3691 = vmul.f32 %v3646, %v957
      %v3692 = vmul.f32 %v3647, %v962
      %v3693 = vmul.f32 %v3648, %v967
      %v3694 = vmul.f32 %v3649, %v972
      %v3695 = vmul.f32 %v3650, %v977
      %v3696 = vmul.f32 %v3651, %v982
      %v3697 = vmul.f32 %v3652, %v987
      %v3698 = vmul.f32 %v3653, %v992
      %v3699 = vmul.f32 %v3654, %v997
      %v3700 = vmul.f32 %v3655, %v1002
      %v3701 = vmul.f32 %v3656, %v1007
      %v3702 = vmul.f32 %v3657, %v1012
      %v3703 = vmul.f32 %v3658, %v1017
      %v3704 = vmul.f32 %v3659, %v1022
      %v3705 = vmul.f32 %v3660, %v1027
      %v3706 = vmul.f32 %v3661, %v1032
      %v3707 = vmul.f32 %v3662, %v1037
      %v3708 = vmul.f32 %v3663, %v1042
      %v3709 = vmul.f32 %v3664, %v1047
      %v3710 = vmul.f32 %v3665, %v1052
      %v3711 = vmul.f32 %v3666, %v1057
      %v3712 = vmul.f32 %v3667, %v1062
      %v3713 = vmul.f32 %v3668, %v1067
      %v3714 = vmul.f32 %v3669, %v1072
      %v3715 = vmul.f32 %v3670, %v1077
      %v3716 = vmul.f32 %v3671, %v1082
      %v3717 = vmul.f32 %v3672, %v1087
      %v3718 = vmul.f32 %v3673, %v1092
      %v3719 = vmul.f32 %v3674, %v1097
      %v3720 = vmul.f32 %v3675, %v1102
      %v3721 = vmul.f32 %v3676, %v1107
      %v3722 = vld [vmem:[%s6] sm:$0xff]
      %v3723 = vld [vmem:[%s6 + $0x8] sm:$0xff]
      %v3724 = vld [vmem:[%s6 + $0x10] sm:$0xff]
      %v3725 = vld [vmem:[%s6 + $0x18] sm:$0xff]
      %v3726 = vld [vmem:[%s6 + $0x20] sm:$0xff]
      %v3727 = vld [vmem:[%s6 + $0x28] sm:$0xff]
      %v3728 = vld [vmem:[%s6 + $0x30] sm:$0xff]
      %v3729 = vld [vmem:[%s6 + $0x38] sm:$0xff]
      %v3730 = vld [vmem:[%s6 + $0x40] sm:$0xff]
      %v3731 = vld [vmem:[%s6 + $0x48] sm:$0xff]
      %v3732 = vld [vmem:[%s6 + $0x50] sm:$0xff]
      %v3733 = vld [vmem:[%s6 + $0x58] sm:$0xff]
      %v3734 = vld [vmem:[%s6 + $0x60] sm:$0xff]
      %v3735 = vld [vmem:[%s6 + $0x68] sm:$0xff]
      %v3736 = vld [vmem:[%s6 + $0x70] sm:$0xff]
      %v3737 = vld [vmem:[%s6 + $0x78] sm:$0xff]
      %v3738 = vld [vmem:[%s6 + $0x80] sm:$0xff]
      %v3739 = vld [vmem:[%s6 + $0x88] sm:$0xff]
      %v3740 = vld [vmem:[%s6 + $0x90] sm:$0xff]
      %v3741 = vld [vmem:[%s6 + $0x98] sm:$0xff]
      %v3742 = vld [vmem:[%s6 + $0xa0] sm:$0xff]
      %v3743 = vld [vmem:[%s6 + $0xa8] sm:$0xff]
      %v3744 = vld [vmem:[%s6 + $0xb0] sm:$0xff]
      %v3745 = vld [vmem:[%s6 + $0xb8] sm:$0xff]
      %v3746 = vld [vmem:[%s6 + $0xc0] sm:$0xff]
      %v3747 = vld [vmem:[%s6 + $0xc8] sm:$0xff]
      %v3748 = vld [vmem:[%s6 + $0xd0] sm:$0xff]
      %v3749 = vld [vmem:[%s6 + $0xd8] sm:$0xff]
      %v3750 = vld [vmem:[%s6 + $0xe0] sm:$0xff]
      %v3751 = vld [vmem:[%s6 + $0xe8] sm:$0xff]
      %v3752 = vld [vmem:[%s6 + $0xf0] sm:$0xff]
      %v3753 = vld [vmem:[%s6 + $0xf8] sm:$0xff]
      %v3754 = vld [vmem:[%s6 + $0x100] sm:$0xff]
      %v3755 = vld [vmem:[%s6 + $0x108] sm:$0xff]
      %v3756 = vld [vmem:[%s6 + $0x110] sm:$0xff]
      %v3757 = vld [vmem:[%s6 + $0x118] sm:$0xff]
      %v3758 = vld [vmem:[%s7] sm:$0x1]
      %v3802 = vrot.slane %v3677, 1
      %v3803 = vsel %vm1271, %v1272, %v3802
      %v3804 = vrot.slane %v3678, 1
      %v3805 = vsel %vm1271, %v3802, %v3804
      %v3806 = vrot.slane %v3679, 1
      %v3807 = vsel %vm1271, %v3804, %v3806
      %v3808 = vrot.slane %v3680, 1
      %v3809 = vsel %vm1271, %v3806, %v3808
      %v3810 = vrot.slane %v3681, 1
      %v3811 = vsel %vm1271, %v3808, %v3810
      %v3812 = vrot.slane %v3682, 1
      %v3813 = vsel %vm1271, %v3810, %v3812
      %v3814 = vrot.slane %v3683, 1
      %v3815 = vsel %vm1271, %v3812, %v3814
      %v3816 = vrot.slane %v3684, 1
      %v3817 = vsel %vm1271, %v3814, %v3816
      %v3818 = vrot.slane %v3685, 1
      %v3819 = vsel %vm1271, %v3816, %v3818
      %v3820 = vrot.slane %v3686, 1
      %v3821 = vsel %vm1271, %v3818, %v3820
      %v3822 = vrot.slane %v3687, 1
      %v3823 = vsel %vm1271, %v3820, %v3822
      %v3824 = vrot.slane %v3688, 1
      %v3825 = vsel %vm1271, %v3822, %v3824
      %v3826 = vrot.slane %v3689, 1
      %v3827 = vsel %vm1271, %v3824, %v3826
      %v3828 = vrot.slane %v3690, 1
      %v3829 = vsel %vm1271, %v3826, %v3828
      %v3830 = vrot.slane %v3691, 1
      %v3831 = vsel %vm1271, %v3828, %v3830
      %v3832 = vrot.slane %v3692, 1
      %v3833 = vsel %vm1271, %v3830, %v3832
      %v3834 = vrot.slane %v3693, 1
      %v3835 = vsel %vm1271, %v3832, %v3834
      %v3836 = vrot.slane %v3694, 1
      %v3837 = vsel %vm1271, %v3834, %v3836
      %v3838 = vrot.slane %v3695, 1
      %v3839 = vsel %vm1271, %v3836, %v3838
      %v3840 = vrot.slane %v3696, 1
      %v3841 = vsel %vm1271, %v3838, %v3840
      %v3842 = vrot.slane %v3697, 1
      %v3843 = vsel %vm1271, %v3840, %v3842
      %v3844 = vrot.slane %v3698, 1
      %v3845 = vsel %vm1271, %v3842, %v3844
      %v3846 = vrot.slane %v3699, 1
      %v3847 = vsel %vm1271, %v3844, %v3846
      %v3848 = vrot.slane %v3700, 1
      %v3849 = vsel %vm1271, %v3846, %v3848
      %v3850 = vrot.slane %v3701, 1
      %v3851 = vsel %vm1271, %v3848, %v3850
      %v3852 = vrot.slane %v3702, 1
      %v3853 = vsel %vm1271, %v3850, %v3852
      %v3854 = vrot.slane %v3703, 1
      %v3855 = vsel %vm1271, %v3852, %v3854
      %v3856 = vrot.slane %v3704, 1
      %v3857 = vsel %vm1271, %v3854, %v3856
      %v3858 = vrot.slane %v3705, 1
      %v3859 = vsel %vm1271, %v3856, %v3858
      %v3860 = vrot.slane %v3706, 1
      %v3861 = vsel %vm1271, %v3858, %v3860
      %v3862 = vrot.slane %v3707, 1
      %v3863 = vsel %vm1271, %v3860, %v3862
      %v3864 = vrot.slane %v3708, 1
      %v3865 = vsel %vm1271, %v3862, %v3864
      %v3866 = vrot.slane %v3709, 1
      %v3867 = vsel %vm1271, %v3864, %v3866
      %v3868 = vrot.slane %v3710, 1
      %v3869 = vsel %vm1271, %v3866, %v3868
      %v3870 = vrot.slane %v3711, 1
      %v3871 = vsel %vm1271, %v3868, %v3870
      %v3872 = vrot.slane %v3712, 1
      %v3873 = vsel %vm1271, %v3870, %v3872
      %v3874 = vrot.slane %v3713, 1
      %v3875 = vsel %vm1271, %v3872, %v3874
      %v3876 = vrot.slane %v3714, 1
      %v3877 = vsel %vm1271, %v3874, %v3876
      %v3878 = vrot.slane %v3715, 1
      %v3879 = vsel %vm1271, %v3876, %v3878
      %v3880 = vrot.slane %v3716, 1
      %v3881 = vsel %vm1271, %v3878, %v3880
      %v3882 = vrot.slane %v3717, 1
      %v3883 = vsel %vm1271, %v3880, %v3882
      %v3884 = vrot.slane %v3718, 1
      %v3885 = vsel %vm1271, %v3882, %v3884
      %v3886 = vrot.slane %v3719, 1
      %v3887 = vsel %vm1271, %v3884, %v3886
      %3888 = vrot.lane.b32.xlu0 %v1273, 32
      %v3889 = vpop.permute.xlu0 %3888
      %3890 = vrot.lane.b32.xlu0 %v3803, 32
      %v3891 = vpop.permute.xlu0 %3890
      %3892 = vrot.lane.b32.xlu0 %v3805, 32
      %v3893 = vpop.permute.xlu0 %3892
      %3894 = vrot.lane.b32.xlu0 %v3807, 32
      %v3895 = vpop.permute.xlu0 %3894
      %3896 = vrot.lane.b32.xlu0 %v3809, 32
      %v3897 = vpop.permute.xlu0 %3896
      %3898 = vrot.lane.b32.xlu0 %v3811, 32
      %v3899 = vpop.permute.xlu0 %3898
      %3900 = vrot.lane.b32.xlu0 %v3813, 32
      %v3901 = vpop.permute.xlu0 %3900
      %3902 = vrot.lane.b32.xlu0 %v3815, 32
      %v3903 = vpop.permute.xlu0 %3902
      %3904 = vrot.lane.b32.xlu0 %v3817, 32
      %v3905 = vpop.permute.xlu0 %3904
      %3906 = vrot.lane.b32.xlu0 %v3819, 32
      %v3907 = vpop.permute.xlu0 %3906
      %3908 = vrot.lane.b32.xlu0 %v3821, 32
      %v3909 = vpop.permute.xlu0 %3908
      %3910 = vrot.lane.b32.xlu0 %v3823, 32
      %v3911 = vpop.permute.xlu0 %3910
      %3912 = vrot.lane.b32.xlu0 %v3825, 32
      %v3913 = vpop.permute.xlu0 %3912
      %3914 = vrot.lane.b32.xlu0 %v3827, 32
      %v3915 = vpop.permute.xlu0 %3914
      %3916 = vrot.lane.b32.xlu0 %v3829, 32
      %v3917 = vpop.permute.xlu0 %3916
      %3918 = vrot.lane.b32.xlu0 %v3831, 32
      %v3919 = vpop.permute.xlu0 %3918
      %3920 = vrot.lane.b32.xlu0 %v3833, 32
      %v3921 = vpop.permute.xlu0 %3920
      %3922 = vrot.lane.b32.xlu0 %v3835, 32
      %v3923 = vpop.permute.xlu0 %3922
      %3924 = vrot.lane.b32.xlu0 %v3837, 32
      %v3925 = vpop.permute.xlu0 %3924
      %3926 = vrot.lane.b32.xlu0 %v3839, 32
      %v3927 = vpop.permute.xlu0 %3926
      %3928 = vrot.lane.b32.xlu0 %v3841, 32
      %v3929 = vpop.permute.xlu0 %3928
      %3930 = vrot.lane.b32.xlu0 %v3843, 32
      %v3931 = vpop.permute.xlu0 %3930
      %3932 = vrot.lane.b32.xlu0 %v3845, 32
      %v3933 = vpop.permute.xlu0 %3932
      %3934 = vrot.lane.b32.xlu0 %v3847, 32
      %v3935 = vpop.permute.xlu0 %3934
      %3936 = vrot.lane.b32.xlu0 %v3849, 32
      %v3937 = vpop.permute.xlu0 %3936
      %3938 = vrot.lane.b32.xlu0 %v3851, 32
      %v3939 = vpop.permute.xlu0 %3938
      %3940 = vrot.lane.b32.xlu0 %v3853, 32
      %v3941 = vpop.permute.xlu0 %3940
      %3942 = vrot.lane.b32.xlu0 %v3855, 32
      %v3943 = vpop.permute.xlu0 %3942
      %3944 = vrot.lane.b32.xlu0 %v3857, 32
      %v3945 = vpop.permute.xlu0 %3944
      %3946 = vrot.lane.b32.xlu0 %v3859, 32
      %v3947 = vpop.permute.xlu0 %3946
      %3948 = vrot.lane.b32.xlu0 %v3861, 32
      %v3949 = vpop.permute.xlu0 %3948
      %3950 = vrot.lane.b32.xlu0 %v3863, 32
      %v3951 = vpop.permute.xlu0 %3950
      %3952 = vrot.lane.b32.xlu0 %v3865, 32
      %v3953 = vpop.permute.xlu0 %3952
      %3954 = vrot.lane.b32.xlu0 %v3867, 32
      %v3955 = vpop.permute.xlu0 %3954
      %3956 = vrot.lane.b32.xlu0 %v3869, 32
      %v3957 = vpop.permute.xlu0 %3956
      %3958 = vrot.lane.b32.xlu0 %v3871, 32
      %v3959 = vpop.permute.xlu0 %3958
      %3960 = vrot.lane.b32.xlu0 %v3873, 32
      %v3961 = vpop.permute.xlu0 %3960
      %3962 = vrot.lane.b32.xlu0 %v3875, 32
      %v3963 = vpop.permute.xlu0 %3962
      %3964 = vrot.lane.b32.xlu0 %v3877, 32
      %v3965 = vpop.permute.xlu0 %3964
      %3966 = vrot.lane.b32.xlu0 %v3879, 32
      %v3967 = vpop.permute.xlu0 %3966
      %3968 = vrot.lane.b32.xlu0 %v3881, 32
      %v3969 = vpop.permute.xlu0 %3968
      %3970 = vrot.lane.b32.xlu0 %v3883, 32
      %v3971 = vpop.permute.xlu0 %3970
      %3972 = vrot.lane.b32.xlu0 %v3885, 32
      %v3973 = vpop.permute.xlu0 %3972
      %3974 = vrot.lane.b32.xlu0 %v3887, 32
      %v3975 = vpop.permute.xlu0 %3974
      %3976 = vrot.lane.b32.xlu0 %v3886, 32
      %v3977 = vpop.permute.xlu0 %3976
      %v4023 = vrot.slane %v3677, 2
      %v4024 = vsel %vm1495, %v1496, %v4023
      %v4025 = vrot.slane %v3678, 2
      %v4026 = vsel %vm1495, %v4023, %v4025
      %v4027 = vrot.slane %v3679, 2
      %v4028 = vsel %vm1495, %v4025, %v4027
      %v4029 = vrot.slane %v3680, 2
      %v4030 = vsel %vm1495, %v4027, %v4029
      %v4031 = vrot.slane %v3681, 2
      %v4032 = vsel %vm1495, %v4029, %v4031
      %v4033 = vrot.slane %v3682, 2
      %v4034 = vsel %vm1495, %v4031, %v4033
      %v4035 = vrot.slane %v3683, 2
      %v4036 = vsel %vm1495, %v4033, %v4035
      %v4037 = vrot.slane %v3684, 2
      %v4038 = vsel %vm1495, %v4035, %v4037
      %v4039 = vrot.slane %v3685, 2
      %v4040 = vsel %vm1495, %v4037, %v4039
      %v4041 = vrot.slane %v3686, 2
      %v4042 = vsel %vm1495, %v4039, %v4041
      %v4043 = vrot.slane %v3687, 2
      %v4044 = vsel %vm1495, %v4041, %v4043
      %v4045 = vrot.slane %v3688, 2
      %v4046 = vsel %vm1495, %v4043, %v4045
      %v4047 = vrot.slane %v3689, 2
      %v4048 = vsel %vm1495, %v4045, %v4047
      %v4049 = vrot.slane %v3690, 2
      %v4050 = vsel %vm1495, %v4047, %v4049
      %v4051 = vrot.slane %v3691, 2
      %v4052 = vsel %vm1495, %v4049, %v4051
      %v4053 = vrot.slane %v3692, 2
      %v4054 = vsel %vm1495, %v4051, %v4053
      %v4055 = vrot.slane %v3693, 2
      %v4056 = vsel %vm1495, %v4053, %v4055
      %v4057 = vrot.slane %v3694, 2
      %v4058 = vsel %vm1495, %v4055, %v4057
      %v4059 = vrot.slane %v3695, 2
      %v4060 = vsel %vm1495, %v4057, %v4059
      %v4061 = vrot.slane %v3696, 2
      %v4062 = vsel %vm1495, %v4059, %v4061
      %v4063 = vrot.slane %v3697, 2
      %v4064 = vsel %vm1495, %v4061, %v4063
      %v4065 = vrot.slane %v3698, 2
      %v4066 = vsel %vm1495, %v4063, %v4065
      %v4067 = vrot.slane %v3699, 2
      %v4068 = vsel %vm1495, %v4065, %v4067
      %v4069 = vrot.slane %v3700, 2
      %v4070 = vsel %vm1495, %v4067, %v4069
      %v4071 = vrot.slane %v3701, 2
      %v4072 = vsel %vm1495, %v4069, %v4071
      %v4073 = vrot.slane %v3702, 2
      %v4074 = vsel %vm1495, %v4071, %v4073
      %v4075 = vrot.slane %v3703, 2
      %v4076 = vsel %vm1495, %v4073, %v4075
      %v4077 = vrot.slane %v3704, 2
      %v4078 = vsel %vm1495, %v4075, %v4077
      %v4079 = vrot.slane %v3705, 2
      %v4080 = vsel %vm1495, %v4077, %v4079
      %v4081 = vrot.slane %v3706, 2
      %v4082 = vsel %vm1495, %v4079, %v4081
      %v4083 = vrot.slane %v3707, 2
      %v4084 = vsel %vm1495, %v4081, %v4083
      %v4085 = vrot.slane %v3708, 2
      %v4086 = vsel %vm1495, %v4083, %v4085
      %v4087 = vrot.slane %v3709, 2
      %v4088 = vsel %vm1495, %v4085, %v4087
      %v4089 = vrot.slane %v3710, 2
      %v4090 = vsel %vm1495, %v4087, %v4089
      %v4091 = vrot.slane %v3711, 2
      %v4092 = vsel %vm1495, %v4089, %v4091
      %v4093 = vrot.slane %v3712, 2
      %v4094 = vsel %vm1495, %v4091, %v4093
      %v4095 = vrot.slane %v3713, 2
      %v4096 = vsel %vm1495, %v4093, %v4095
      %v4097 = vrot.slane %v3714, 2
      %v4098 = vsel %vm1495, %v4095, %v4097
      %v4099 = vrot.slane %v3715, 2
      %v4100 = vsel %vm1495, %v4097, %v4099
      %v4101 = vrot.slane %v3716, 2
      %v4102 = vsel %vm1495, %v4099, %v4101
      %v4103 = vrot.slane %v3717, 2
      %v4104 = vsel %vm1495, %v4101, %v4103
      %v4105 = vrot.slane %v3718, 2
      %v4106 = vsel %vm1495, %v4103, %v4105
      %v4107 = vrot.slane %v3719, 2
      %v4108 = vsel %vm1495, %v4105, %v4107
      %4109 = vrot.lane.b32.xlu0 %v1497, 64
      %v4110 = vpop.permute.xlu0 %4109
      %4111 = vrot.lane.b32.xlu0 %v4024, 64
      %v4112 = vpop.permute.xlu0 %4111
      %4113 = vrot.lane.b32.xlu0 %v4026, 64
      %v4114 = vpop.permute.xlu0 %4113
      %4115 = vrot.lane.b32.xlu0 %v4028, 64
      %v4116 = vpop.permute.xlu0 %4115
      %4117 = vrot.lane.b32.xlu0 %v4030, 64
      %v4118 = vpop.permute.xlu0 %4117
      %4119 = vrot.lane.b32.xlu0 %v4032, 64
      %v4120 = vpop.permute.xlu0 %4119
      %4121 = vrot.lane.b32.xlu0 %v4034, 64
      %v4122 = vpop.permute.xlu0 %4121
      %4123 = vrot.lane.b32.xlu0 %v4036, 64
      %v4124 = vpop.permute.xlu0 %4123
      %4125 = vrot.lane.b32.xlu0 %v4038, 64
      %v4126 = vpop.permute.xlu0 %4125
      %4127 = vrot.lane.b32.xlu0 %v4040, 64
      %v4128 = vpop.permute.xlu0 %4127
      %4129 = vrot.lane.b32.xlu0 %v4042, 64
      %v4130 = vpop.permute.xlu0 %4129
      %4131 = vrot.lane.b32.xlu0 %v4044, 64
      %v4132 = vpop.permute.xlu0 %4131
      %4133 = vrot.lane.b32.xlu0 %v4046, 64
      %v4134 = vpop.permute.xlu0 %4133
      %4135 = vrot.lane.b32.xlu0 %v4048, 64
      %v4136 = vpop.permute.xlu0 %4135
      %4137 = vrot.lane.b32.xlu0 %v4050, 64
      %v4138 = vpop.permute.xlu0 %4137
      %4139 = vrot.lane.b32.xlu0 %v4052, 64
      %v4140 = vpop.permute.xlu0 %4139
      %4141 = vrot.lane.b32.xlu0 %v4054, 64
      %v4142 = vpop.permute.xlu0 %4141
      %4143 = vrot.lane.b32.xlu0 %v4056, 64
      %v4144 = vpop.permute.xlu0 %4143
      %4145 = vrot.lane.b32.xlu0 %v4058, 64
      %v4146 = vpop.permute.xlu0 %4145
      %4147 = vrot.lane.b32.xlu0 %v4060, 64
      %v4148 = vpop.permute.xlu0 %4147
      %4149 = vrot.lane.b32.xlu0 %v4062, 64
      %v4150 = vpop.permute.xlu0 %4149
      %4151 = vrot.lane.b32.xlu0 %v4064, 64
      %v4152 = vpop.permute.xlu0 %4151
      %4153 = vrot.lane.b32.xlu0 %v4066, 64
      %v4154 = vpop.permute.xlu0 %4153
      %4155 = vrot.lane.b32.xlu0 %v4068, 64
      %v4156 = vpop.permute.xlu0 %4155
      %4157 = vrot.lane.b32.xlu0 %v4070, 64
      %v4158 = vpop.permute.xlu0 %4157
      %4159 = vrot.lane.b32.xlu0 %v4072, 64
      %v4160 = vpop.permute.xlu0 %4159
      %4161 = vrot.lane.b32.xlu0 %v4074, 64
      %v4162 = vpop.permute.xlu0 %4161
      %4163 = vrot.lane.b32.xlu0 %v4076, 64
      %v4164 = vpop.permute.xlu0 %4163
      %4165 = vrot.lane.b32.xlu0 %v4078, 64
      %v4166 = vpop.permute.xlu0 %4165
      %4167 = vrot.lane.b32.xlu0 %v4080, 64
      %v4168 = vpop.permute.xlu0 %4167
      %4169 = vrot.lane.b32.xlu0 %v4082, 64
      %v4170 = vpop.permute.xlu0 %4169
      %4171 = vrot.lane.b32.xlu0 %v4084, 64
      %v4172 = vpop.permute.xlu0 %4171
      %4173 = vrot.lane.b32.xlu0 %v4086, 64
      %v4174 = vpop.permute.xlu0 %4173
      %4175 = vrot.lane.b32.xlu0 %v4088, 64
      %v4176 = vpop.permute.xlu0 %4175
      %4177 = vrot.lane.b32.xlu0 %v4090, 64
      %v4178 = vpop.permute.xlu0 %4177
      %4179 = vrot.lane.b32.xlu0 %v4092, 64
      %v4180 = vpop.permute.xlu0 %4179
      %4181 = vrot.lane.b32.xlu0 %v4094, 64
      %v4182 = vpop.permute.xlu0 %4181
      %4183 = vrot.lane.b32.xlu0 %v4096, 64
      %v4184 = vpop.permute.xlu0 %4183
      %4185 = vrot.lane.b32.xlu0 %v4098, 64
      %v4186 = vpop.permute.xlu0 %4185
      %4187 = vrot.lane.b32.xlu0 %v4100, 64
      %v4188 = vpop.permute.xlu0 %4187
      %4189 = vrot.lane.b32.xlu0 %v4102, 64
      %v4190 = vpop.permute.xlu0 %4189
      %4191 = vrot.lane.b32.xlu0 %v4104, 64
      %v4192 = vpop.permute.xlu0 %4191
      %4193 = vrot.lane.b32.xlu0 %v4106, 64
      %v4194 = vpop.permute.xlu0 %4193
      %4195 = vrot.lane.b32.xlu0 %v4108, 64
      %v4196 = vpop.permute.xlu0 %4195
      %4197 = vrot.lane.b32.xlu0 %v4107, 64
      %v4198 = vpop.permute.xlu0 %4197
      %vm4244 = vcmask 261120
      %v4245 = vsel %vm4244, 0.0, %v3889
      %v4246 = vsel %vm4244, 0.0, %v3891
      %v4247 = vsel %vm4244, %v3677, %v3893
      %v4248 = vsel %vm4244, %v3678, %v3895
      %v4249 = vsel %vm4244, %v3679, %v3897
      %v4250 = vsel %vm4244, %v3680, %v3899
      %v4251 = vsel %vm4244, %v3681, %v3901
      %v4252 = vsel %vm4244, %v3682, %v3903
      %v4253 = vsel %vm4244, %v3683, %v3905
      %v4254 = vsel %vm4244, %v3684, %v3907
      %v4255 = vsel %vm4244, %v3685, %v3909
      %v4256 = vsel %vm4244, %v3686, %v3911
      %v4257 = vsel %vm4244, %v3687, %v3913
      %v4258 = vsel %vm4244, %v3688, %v3915
      %v4259 = vsel %vm4244, %v3689, %v3917
      %v4260 = vsel %vm4244, %v3690, %v3919
      %v4261 = vsel %vm4244, %v3691, %v3921
      %v4262 = vsel %vm4244, %v3692, %v3923
      %v4263 = vsel %vm4244, %v3693, %v3925
      %v4264 = vsel %vm4244, %v3694, %v3927
      %v4265 = vsel %vm4244, %v3695, %v3929
      %v4266 = vsel %vm4244, %v3696, %v3931
      %v4267 = vsel %vm4244, %v3697, %v3933
      %v4268 = vsel %vm4244, %v3698, %v3935
      %v4269 = vsel %vm4244, %v3699, %v3937
      %v4270 = vsel %vm4244, %v3700, %v3939
      %v4271 = vsel %vm4244, %v3701, %v3941
      %v4272 = vsel %vm4244, %v3702, %v3943
      %v4273 = vsel %vm4244, %v3703, %v3945
      %v4274 = vsel %vm4244, %v3704, %v3947
      %v4275 = vsel %vm4244, %v3705, %v3949
      %v4276 = vsel %vm4244, %v3706, %v3951
      %v4277 = vsel %vm4244, %v3707, %v3953
      %v4278 = vsel %vm4244, %v3708, %v3955
      %v4279 = vsel %vm4244, %v3709, %v3957
      %v4280 = vsel %vm4244, %v3710, %v3959
      %v4281 = vsel %vm4244, %v3711, %v3961
      %v4282 = vsel %vm4244, %v3712, %v3963
      %v4283 = vsel %vm4244, %v3713, %v3965
      %v4284 = vsel %vm4244, %v3714, %v3967
      %v4285 = vsel %vm4244, %v3715, %v3969
      %v4286 = vsel %vm4244, %v3716, %v3971
      %v4287 = vsel %vm4244, %v3717, %v3973
      %v4288 = vsel %vm4244, %v3718, %v3975
      %v4289 = vsel %vm4244, %v3719, %v3977
      %v4290 = vsel %vm1584, %v4245, %v4110
      %v4291 = vsel %vm1584, %v4246, %v4112
      %v4292 = vsel %vm1584, %v4247, %v4114
      %v4293 = vsel %vm1584, %v4248, %v4116
      %v4294 = vsel %vm1584, %v4249, %v4118
      %v4295 = vsel %vm1584, %v4250, %v4120
      %v4296 = vsel %vm1584, %v4251, %v4122
      %v4297 = vsel %vm1584, %v4252, %v4124
      %v4298 = vsel %vm1584, %v4253, %v4126
      %v4299 = vsel %vm1584, %v4254, %v4128
      %v4300 = vsel %vm1584, %v4255, %v4130
      %v4301 = vsel %vm1584, %v4256, %v4132
      %v4302 = vsel %vm1584, %v4257, %v4134
      %v4303 = vsel %vm1584, %v4258, %v4136
      %v4304 = vsel %vm1584, %v4259, %v4138
      %v4305 = vsel %vm1584, %v4260, %v4140
      %v4306 = vsel %vm1584, %v4261, %v4142
      %v4307 = vsel %vm1584, %v4262, %v4144
      %v4308 = vsel %vm1584, %v4263, %v4146
      %v4309 = vsel %vm1584, %v4264, %v4148
      %v4310 = vsel %vm1584, %v4265, %v4150
      %v4311 = vsel %vm1584, %v4266, %v4152
      %v4312 = vsel %vm1584, %v4267, %v4154
      %v4313 = vsel %vm1584, %v4268, %v4156
      %v4314 = vsel %vm1584, %v4269, %v4158
      %v4315 = vsel %vm1584, %v4270, %v4160
      %v4316 = vsel %vm1584, %v4271, %v4162
      %v4317 = vsel %vm1584, %v4272, %v4164
      %v4318 = vsel %vm1584, %v4273, %v4166
      %v4319 = vsel %vm1584, %v4274, %v4168
      %v4320 = vsel %vm1584, %v4275, %v4170
      %v4321 = vsel %vm1584, %v4276, %v4172
      %v4322 = vsel %vm1584, %v4277, %v4174
      %v4323 = vsel %vm1584, %v4278, %v4176
      %v4324 = vsel %vm1584, %v4279, %v4178
      %v4325 = vsel %vm1584, %v4280, %v4180
      %v4326 = vsel %vm1584, %v4281, %v4182
      %v4327 = vsel %vm1584, %v4282, %v4184
      %v4328 = vsel %vm1584, %v4283, %v4186
      %v4329 = vsel %vm1584, %v4284, %v4188
      %v4330 = vsel %vm1584, %v4285, %v4190
      %v4331 = vsel %vm1584, %v4286, %v4192
      %v4332 = vsel %vm1584, %v4287, %v4194
      %v4333 = vsel %vm1584, %v4288, %v4196
      %v4334 = vsel %vm1584, %v4289, %v4198
      %v4337 = vrot.slane %v3720, 1
      %v4338 = vsel %vm1271, %v3886, %v4337
      %v4339 = vrot.slane %v3721, 1
      %v4340 = vsel %vm1271, %v4337, %v4339
      %4341 = vrot.lane.b32.xlu0 %v3802, 32
      %v4342 = vpop.permute.xlu0 %4341
      %4343 = vrot.lane.b32.xlu0 %v4338, 32
      %v4344 = vpop.permute.xlu0 %4343
      %4345 = vrot.lane.b32.xlu0 %v4340, 32
      %v4346 = vpop.permute.xlu0 %4345
      %4347 = vrot.lane.b32.xlu0 %v4339, 32
      %v4348 = vpop.permute.xlu0 %4347
      %v4353 = vrot.slane %v3720, 2
      %v4354 = vsel %vm1495, %v4107, %v4353
      %v4355 = vrot.slane %v3721, 2
      %v4356 = vsel %vm1495, %v4353, %v4355
      %v4357 = vsel %vm1495, %v4355, %v1496
      %4358 = vrot.lane.b32.xlu0 %v4023, 64
      %v4359 = vpop.permute.xlu0 %4358
      %4360 = vrot.lane.b32.xlu0 %v4354, 64
      %v4361 = vpop.permute.xlu0 %4360
      %4362 = vrot.lane.b32.xlu0 %v4356, 64
      %v4363 = vpop.permute.xlu0 %4362
      %4364 = vrot.lane.b32.xlu0 %v4357, 64
      %v4365 = vpop.permute.xlu0 %4364
      %v4370 = vsel %vm4244, 0.0, %v4342
      %v4371 = vsel %vm4244, %v3719, %v4344
      %v4372 = vsel %vm4244, %v3720, %v4346
      %v4373 = vsel %vm4244, %v3721, %v4348
      %v4374 = vsel %vm1584, %v4370, %v4359
      %v4375 = vsel %vm1584, %v4371, %v4361
      %v4376 = vsel %vm1584, %v4372, %v4363
      %v4377 = vsel %vm1584, %v4373, %v4365
      %v4424 = vrot.slane %v4374, 7
      %v4425 = vrot.slane %v4292, 7
      %v4426 = vsel %vm1703, %v4424, %v4425
      %v4427 = vrot.slane %v4293, 7
      %v4428 = vsel %vm1703, %v4425, %v4427
      %v4429 = vrot.slane %v4294, 7
      %v4430 = vsel %vm1703, %v4427, %v4429
      %v4431 = vrot.slane %v4295, 7
      %v4432 = vsel %vm1703, %v4429, %v4431
      %v4433 = vrot.slane %v4296, 7
      %v4434 = vsel %vm1703, %v4431, %v4433
      %v4435 = vrot.slane %v4297, 7
      %v4436 = vsel %vm1703, %v4433, %v4435
      %v4437 = vrot.slane %v4298, 7
      %v4438 = vsel %vm1703, %v4435, %v4437
      %v4439 = vrot.slane %v4299, 7
      %v4440 = vsel %vm1703, %v4437, %v4439
      %v4441 = vrot.slane %v4300, 7
      %v4442 = vsel %vm1703, %v4439, %v4441
      %v4443 = vrot.slane %v4301, 7
      %v4444 = vsel %vm1703, %v4441, %v4443
      %v4445 = vrot.slane %v4302, 7
      %v4446 = vsel %vm1703, %v4443, %v4445
      %v4447 = vrot.slane %v4303, 7
      %v4448 = vsel %vm1703, %v4445, %v4447
      %v4449 = vrot.slane %v4304, 7
      %v4450 = vsel %vm1703, %v4447, %v4449
      %v4451 = vrot.slane %v4305, 7
      %v4452 = vsel %vm1703, %v4449, %v4451
      %v4453 = vrot.slane %v4306, 7
      %v4454 = vsel %vm1703, %v4451, %v4453
      %v4455 = vrot.slane %v4307, 7
      %v4456 = vsel %vm1703, %v4453, %v4455
      %v4457 = vrot.slane %v4308, 7
      %v4458 = vsel %vm1703, %v4455, %v4457
      %v4459 = vrot.slane %v4309, 7
      %v4460 = vsel %vm1703, %v4457, %v4459
      %v4461 = vrot.slane %v4310, 7
      %v4462 = vsel %vm1703, %v4459, %v4461
      %v4463 = vrot.slane %v4311, 7
      %v4464 = vsel %vm1703, %v4461, %v4463
      %v4465 = vrot.slane %v4312, 7
      %v4466 = vsel %vm1703, %v4463, %v4465
      %v4467 = vrot.slane %v4313, 7
      %v4468 = vsel %vm1703, %v4465, %v4467
      %v4469 = vrot.slane %v4314, 7
      %v4470 = vsel %vm1703, %v4467, %v4469
      %v4471 = vrot.slane %v4315, 7
      %v4472 = vsel %vm1703, %v4469, %v4471
      %v4473 = vrot.slane %v4316, 7
      %v4474 = vsel %vm1703, %v4471, %v4473
      %v4475 = vrot.slane %v4317, 7
      %v4476 = vsel %vm1703, %v4473, %v4475
      %v4477 = vrot.slane %v4318, 7
      %v4478 = vsel %vm1703, %v4475, %v4477
      %v4479 = vrot.slane %v4319, 7
      %v4480 = vsel %vm1703, %v4477, %v4479
      %v4481 = vrot.slane %v4320, 7
      %v4482 = vsel %vm1703, %v4479, %v4481
      %v4483 = vrot.slane %v4321, 7
      %v4484 = vsel %vm1703, %v4481, %v4483
      %v4485 = vrot.slane %v4322, 7
      %v4486 = vsel %vm1703, %v4483, %v4485
      %v4487 = vrot.slane %v4323, 7
      %v4488 = vsel %vm1703, %v4485, %v4487
      %v4489 = vrot.slane %v4324, 7
      %v4490 = vsel %vm1703, %v4487, %v4489
      %v4491 = vrot.slane %v4325, 7
      %v4492 = vsel %vm1703, %v4489, %v4491
      %v4493 = vrot.slane %v4326, 7
      %v4494 = vsel %vm1703, %v4491, %v4493
      %v4495 = vrot.slane %v4327, 7
      %v4496 = vsel %vm1703, %v4493, %v4495
      %v4497 = vrot.slane %v4328, 7
      %v4498 = vsel %vm1703, %v4495, %v4497
      %v4499 = vrot.slane %v4329, 7
      %v4500 = vsel %vm1703, %v4497, %v4499
      %v4501 = vrot.slane %v4330, 7
      %v4502 = vsel %vm1703, %v4499, %v4501
      %v4503 = vrot.slane %v4331, 7
      %v4504 = vsel %vm1703, %v4501, %v4503
      %v4505 = vrot.slane %v4332, 7
      %v4506 = vsel %vm1703, %v4503, %v4505
      %v4507 = vrot.slane %v4333, 7
      %v4508 = vsel %vm1703, %v4505, %v4507
      %v4509 = vrot.slane %v4375, 7
      %v4510 = vsel %vm1703, %v4507, %v4509
      %v4511 = vrot.slane %v4376, 7
      %v4512 = vsel %vm1703, %v4509, %v4511
      %v4513 = vrot.slane %v4377, 7
      %v4514 = vsel %vm1703, %v4511, %v4513
      %vm4515 = vcmask 785408
      %v4516 = vsel %vm4515, %v4426, 0
      %v4518 = vsel %vm4515, %v4428, 0
      %v4520 = vsel %vm4515, %v4430, 0
      %v4522 = vsel %vm4515, %v4432, 0
      %v4524 = vsel %vm4515, %v4434, 0
      %v4526 = vsel %vm4515, %v4436, 0
      %v4528 = vsel %vm4515, %v4438, 0
      %v4530 = vsel %vm4515, %v4440, 0
      %v4532 = vsel %vm4515, %v4442, 0
      %v4534 = vsel %vm4515, %v4444, 0
      %v4536 = vsel %vm4515, %v4446, 0
      %v4538 = vsel %vm4515, %v4448, 0
      %v4540 = vsel %vm4515, %v4450, 0
      %v4542 = vsel %vm4515, %v4452, 0
      %v4544 = vsel %vm4515, %v4454, 0
      %v4546 = vsel %vm4515, %v4456, 0
      %v4548 = vsel %vm4515, %v4458, 0
      %v4550 = vsel %vm4515, %v4460, 0
      %v4552 = vsel %vm4515, %v4462, 0
      %v4554 = vsel %vm4515, %v4464, 0
      %v4556 = vsel %vm4515, %v4466, 0
      %v4558 = vsel %vm4515, %v4468, 0
      %v4560 = vsel %vm4515, %v4470, 0
      %v4562 = vsel %vm4515, %v4472, 0
      %v4564 = vsel %vm4515, %v4474, 0
      %v4566 = vsel %vm4515, %v4476, 0
      %v4568 = vsel %vm4515, %v4478, 0
      %v4570 = vsel %vm4515, %v4480, 0
      %v4572 = vsel %vm4515, %v4482, 0
      %v4574 = vsel %vm4515, %v4484, 0
      %v4576 = vsel %vm4515, %v4486, 0
      %v4578 = vsel %vm4515, %v4488, 0
      %v4580 = vsel %vm4515, %v4490, 0
      %v4582 = vsel %vm4515, %v4492, 0
      %v4584 = vsel %vm4515, %v4494, 0
      %v4586 = vsel %vm4515, %v4496, 0
      %v4588 = vsel %vm4515, %v4498, 0
      %v4590 = vsel %vm4515, %v4500, 0
      %v4592 = vsel %vm4515, %v4502, 0
      %v4594 = vsel %vm4515, %v4504, 0
      %v4596 = vsel %vm4515, %v4506, 0
      %v4598 = vsel %vm4515, %v4508, 0
      %v4600 = vsel %vm4515, %v4510, 0
      %v4602 = vsel %vm4515, %v4512, 0
      %v4604 = vsel %vm4515, %v4514, 0
      %4606 = vmatprep.subr.mxu0 0.0
      %4607 = vmatpush1.msra.mxu0 %v3734
      %4608 = vmatprep.subr.mxu0 0.0
      %4609 = vmatpush1.msra.mxu0 %v3735
      %4610 = vmatprep.subr.mxu0 0.0
      %4611 = vmatpush1.msra.mxu0 %v3736
      %4612 = vmatprep.subr.mxu0 0.0
      %4613 = vmatpush1.msra.mxu0 %v3737
      %4614 = vmatprep.subr.mxu0 0.0
      %4615 = vmatpush1.msra.mxu0 %v3738
      %4616 = vmatprep.subr.mxu0 0.0
      %4617 = vmatpush1.msra.mxu0 %v3739
      %4618 = vmatprep.subr.mxu0 0.0
      %4619 = vmatpush1.msra.mxu0 %v3740
      %4620 = vmatprep.subr.mxu0 0.0
      %4621 = vmatpush1.msra.mxu0 %v3741
      %4622 = vmatprep.subr.mxu0 0.0
      %4623 = vmatpush1.msra.mxu0 %v3742
      %4624 = vmatprep.subr.mxu0 0.0
      %4625 = vmatpush1.msra.mxu0 %v3743
      %4626 = vmatprep.subr.mxu0 0.0
      %4627 = vmatpush1.msra.mxu0 %v3744
      %4628 = vmatprep.subr.mxu0 0.0
      %4629 = vmatpush1.msra.mxu0 %v3745
      %4630 = vmatprep.subr.mxu0 0.0
      %4631 = vmatpush1.msra.mxu0 0.0
      %4632 = vmatprep.subr.mxu0 0.0
      %4633 = vmatpush1.msra.mxu0 0.0
      %4634 = vmatprep.subr.mxu0 0.0
      %4635 = vmatpush1.msra.mxu0 0.0
      %4636 = vmatprep.subr.mxu0 0.0
      %4637 = vmatpush1.msra.mxu0 0.0
      %4638 = vmatprep.subr.mxu0 0.0
      %4639 = vmatpush1.msra.mxu0 0.0
      %4640 = vmatprep.subr.mxu0 0.0
      %4641 = vmatpush1.msra.mxu0 0.0
      %4642 = vmatprep.subr.mxu0 0.0
      %4643 = vmatpush1.msra.mxu0 0.0
      %4644 = vmatprep.subr.mxu0 0.0
      %4645 = vmatpush1.msra.mxu0 0.0
      %4646 = vmatprep.subr.mxu0 0.0
      %4647 = vmatpush1.msra.mxu0 0.0
      %4648 = vmatprep.subr.mxu0 0.0
      %4649 = vmatpush1.msra.mxu0 0.0
      %4650 = vmatprep.subr.mxu0 0.0
      %4651 = vmatpush1.msra.mxu0 0.0
      %4652 = vmatprep.subr.mxu0 0.0
      %4653 = vmatpush1.msra.mxu0 0.0
      %4654 = vmatprep.subr.mxu0 0.0
      %4655 = vmatpush1.msra.mxu0 0.0
      %4656 = vmatprep.subr.mxu0 0.0
      %4657 = vmatpush1.msra.mxu0 0.0
      %4658 = vmatprep.subr.mxu0 0.0
      %4659 = vmatpush1.msra.mxu0 0.0
      %4660 = vmatprep.subr.mxu0 0.0
      %4661 = vmatpush1.msra.mxu0 0.0
      %4662 = vmatprep.subr.mxu0 0.0
      %4663 = vmatpush1.msra.mxu0 0.0
      %4664 = vmatprep.subr.mxu0 0.0
      %4665 = vmatpush1.msra.mxu0 0.0
      %4666 = vmatprep.subr.mxu0 0.0
      %4667 = vmatpush1.msra.mxu0 0.0
      %4668 = vmatprep.subr.mxu0 0.0
      %4669 = vmatpush1.msra.mxu0 0.0
      %4670 = vmatprep.mubr.f32.mxu0 0.0
      %4671 = vmatmul.mubr.f32.gmra.mrb[0].mxu0 %v4516
      %v4672 = vpop.f32.mrb[0].mxu0
      %v4673 = vadd.f32 0.0, %v4672
      %v4674 = vpop.f32.mrb[0].mxu0
      %4675 = vmatprep.mubr.f32.mxu0 0.0
      %4676 = vmatmul.mubr.f32.gmra.mrb[0].mxu0 %v4518
      %v4677 = vpop.f32.mrb[0].mxu0
      %v4678 = vadd.f32 0.0, %v4677
      %v4679 = vpop.f32.mrb[0].mxu0
      %4680 = vmatprep.mubr.f32.mxu0 0.0
      %4681 = vmatmul.mubr.f32.gmra.mrb[0].mxu0 %v4520
      %v4682 = vpop.f32.mrb[0].mxu0
      %v4683 = vadd.f32 0.0, %v4682
      %v4684 = vpop.f32.mrb[0].mxu0
      %4685 = vmatprep.mubr.f32.mxu0 0.0
      %4686 = vmatmul.mubr.f32.gmra.mrb[0].mxu0 %v4522
      %v4687 = vpop.f32.mrb[0].mxu0
      %v4688 = vadd.f32 0.0, %v4687
      %v4689 = vpop.f32.mrb[0].mxu0
      %4690 = vmatprep.mubr.f32.mxu0 0.0
      %4691 = vmatmul.mubr.f32.gmra.mrb[0].mxu0 %v4524
      %v4692 = vpop.f32.mrb[0].mxu0
      %v4693 = vadd.f32 0.0, %v4692
      %v4694 = vpop.f32.mrb[0].mxu0
      %4695 = vmatprep.mubr.f32.mxu0 0.0
      %4696 = vmatmul.mubr.f32.gmra.mrb[0].mxu0 %v4526
      %v4697 = vpop.f32.mrb[0].mxu0
      %v4698 = vadd.f32 0.0, %v4697
      %v4699 = vpop.f32.mrb[0].mxu0
      %4700 = vmatprep.mubr.f32.mxu0 0.0
      %4701 = vmatmul.mubr.f32.gmra.mrb[0].mxu0 %v4528
      %v4702 = vpop.f32.mrb[0].mxu0
      %v4703 = vadd.f32 0.0, %v4702
      %v4704 = vpop.f32.mrb[0].mxu0
      %4705 = vmatprep.mubr.f32.mxu0 0.0
      %4706 = vmatmul.mubr.f32.gmra.mrb[0].mxu0 %v4530
      %v4707 = vpop.f32.mrb[0].mxu0
      %v4708 = vadd.f32 0.0, %v4707
      %v4709 = vpop.f32.mrb[0].mxu0
      %4710 = vmatprep.mubr.f32.mxu0 0.0
      %4711 = vmatmul.mubr.f32.gmra.mrb[0].mxu0 %v4532
      %v4712 = vpop.f32.mrb[0].mxu0
      %v4713 = vadd.f32 0.0, %v4712
      %v4714 = vpop.f32.mrb[0].mxu0
      %4715 = vmatprep.mubr.f32.mxu0 0.0
      %4716 = vmatmul.mubr.f32.gmra.mrb[0].mxu0 %v4534
      %v4717 = vpop.f32.mrb[0].mxu0
      %v4718 = vadd.f32 0.0, %v4717
      %v4719 = vpop.f32.mrb[0].mxu0
      %4720 = vmatprep.mubr.f32.mxu0 0.0
      %4721 = vmatmul.mubr.f32.gmra.mrb[0].mxu0 %v4536
      %v4722 = vpop.f32.mrb[0].mxu0
      %v4723 = vadd.f32 0.0, %v4722
      %v4724 = vpop.f32.mrb[0].mxu0
      %4725 = vmatprep.mubr.f32.mxu0 0.0
      %4726 = vmatmul.mubr.f32.gmra.mrb[0].mxu0 %v4538
      %v4727 = vpop.f32.mrb[0].mxu0
      %v4728 = vadd.f32 0.0, %v4727
      %v4729 = vpop.f32.mrb[0].mxu0
      %4730 = vmatprep.mubr.f32.mxu0 0.0
      %4731 = vmatmul.mubr.f32.gmra.mrb[0].mxu0 %v4540
      %v4732 = vpop.f32.mrb[0].mxu0
      %v4733 = vadd.f32 0.0, %v4732
      %v4734 = vpop.f32.mrb[0].mxu0
      %4735 = vmatprep.mubr.f32.mxu0 0.0
      %4736 = vmatmul.mubr.f32.gmra.mrb[0].mxu0 %v4542
      %v4737 = vpop.f32.mrb[0].mxu0
      %v4738 = vadd.f32 0.0, %v4737
      %v4739 = vpop.f32.mrb[0].mxu0
      %4740 = vmatprep.mubr.f32.mxu0 0.0
      %4741 = vmatmul.mubr.f32.gmra.mrb[0].mxu0 %v4544
      %v4742 = vpop.f32.mrb[0].mxu0
      %v4743 = vadd.f32 0.0, %v4742
      %v4744 = vpop.f32.mrb[0].mxu0
      %4745 = vmatprep.mubr.f32.mxu0 0.0
      %4746 = vmatmul.mubr.f32.gmra.mrb[0].mxu0 %v4546
      %v4747 = vpop.f32.mrb[0].mxu0
      %v4748 = vadd.f32 0.0, %v4747
      %v4749 = vpop.f32.mrb[0].mxu0
      %4750 = vmatprep.mubr.f32.mxu0 0.0
      %4751 = vmatmul.mubr.f32.gmra.mrb[0].mxu0 %v4548
      %v4752 = vpop.f32.mrb[0].mxu0
      %v4753 = vadd.f32 0.0, %v4752
      %v4754 = vpop.f32.mrb[0].mxu0
      %4755 = vmatprep.mubr.f32.mxu0 0.0
      %4756 = vmatmul.mubr.f32.gmra.mrb[0].mxu0 %v4550
      %v4757 = vpop.f32.mrb[0].mxu0
      %v4758 = vadd.f32 0.0, %v4757
      %v4759 = vpop.f32.mrb[0].mxu0
      %4760 = vmatprep.mubr.f32.mxu0 0.0
      %4761 = vmatmul.mubr.f32.gmra.mrb[0].mxu0 %v4552
      %v4762 = vpop.f32.mrb[0].mxu0
      %v4763 = vadd.f32 0.0, %v4762
      %v4764 = vpop.f32.mrb[0].mxu0
      %4765 = vmatprep.mubr.f32.mxu0 0.0
      %4766 = vmatmul.mubr.f32.gmra.mrb[0].mxu0 %v4554
      %v4767 = vpop.f32.mrb[0].mxu0
      %v4768 = vadd.f32 0.0, %v4767
      %v4769 = vpop.f32.mrb[0].mxu0
      %4770 = vmatprep.mubr.f32.mxu0 0.0
      %4771 = vmatmul.mubr.f32.gmra.mrb[0].mxu0 %v4556
      %v4772 = vpop.f32.mrb[0].mxu0
      %v4773 = vadd.f32 0.0, %v4772
      %v4774 = vpop.f32.mrb[0].mxu0
      %4775 = vmatprep.mubr.f32.mxu0 0.0
      %4776 = vmatmul.mubr.f32.gmra.mrb[0].mxu0 %v4558
      %v4777 = vpop.f32.mrb[0].mxu0
      %v4778 = vadd.f32 0.0, %v4777
      %v4779 = vpop.f32.mrb[0].mxu0
      %4780 = vmatprep.mubr.f32.mxu0 0.0
      %4781 = vmatmul.mubr.f32.gmra.mrb[0].mxu0 %v4560
      %v4782 = vpop.f32.mrb[0].mxu0
      %v4783 = vadd.f32 0.0, %v4782
      %v4784 = vpop.f32.mrb[0].mxu0
      %4785 = vmatprep.mubr.f32.mxu0 0.0
      %4786 = vmatmul.mubr.f32.gmra.mrb[0].mxu0 %v4562
      %v4787 = vpop.f32.mrb[0].mxu0
      %v4788 = vadd.f32 0.0, %v4787
      %v4789 = vpop.f32.mrb[0].mxu0
      %4790 = vmatprep.mubr.f32.mxu0 0.0
      %4791 = vmatmul.mubr.f32.gmra.mrb[0].mxu0 %v4564
      %v4792 = vpop.f32.mrb[0].mxu0
      %v4793 = vadd.f32 0.0, %v4792
      %v4794 = vpop.f32.mrb[0].mxu0
      %4795 = vmatprep.mubr.f32.mxu0 0.0
      %4796 = vmatmul.mubr.f32.gmra.mrb[0].mxu0 %v4566
      %v4797 = vpop.f32.mrb[0].mxu0
      %v4798 = vadd.f32 0.0, %v4797
      %v4799 = vpop.f32.mrb[0].mxu0
      %4800 = vmatprep.mubr.f32.mxu0 0.0
      %4801 = vmatmul.mubr.f32.gmra.mrb[0].mxu0 %v4568
      %v4802 = vpop.f32.mrb[0].mxu0
      %v4803 = vadd.f32 0.0, %v4802
      %v4804 = vpop.f32.mrb[0].mxu0
      %4805 = vmatprep.mubr.f32.mxu0 0.0
      %4806 = vmatmul.mubr.f32.gmra.mrb[0].mxu0 %v4570
      %v4807 = vpop.f32.mrb[0].mxu0
      %v4808 = vadd.f32 0.0, %v4807
      %v4809 = vpop.f32.mrb[0].mxu0
      %4810 = vmatprep.mubr.f32.mxu0 0.0
      %4811 = vmatmul.mubr.f32.gmra.mrb[0].mxu0 %v4572
      %v4812 = vpop.f32.mrb[0].mxu0
      %v4813 = vadd.f32 0.0, %v4812
      %v4814 = vpop.f32.mrb[0].mxu0
      %4815 = vmatprep.mubr.f32.mxu0 0.0
      %4816 = vmatmul.mubr.f32.gmra.mrb[0].mxu0 %v4574
      %v4817 = vpop.f32.mrb[0].mxu0
      %v4818 = vadd.f32 0.0, %v4817
      %v4819 = vpop.f32.mrb[0].mxu0
      %4820 = vmatprep.mubr.f32.mxu0 0.0
      %4821 = vmatmul.mubr.f32.gmra.mrb[0].mxu0 %v4576
      %v4822 = vpop.f32.mrb[0].mxu0
      %v4823 = vadd.f32 0.0, %v4822
      %v4824 = vpop.f32.mrb[0].mxu0
      %4825 = vmatprep.mubr.f32.mxu0 0.0
      %4826 = vmatmul.mubr.f32.gmra.mrb[0].mxu0 %v4578
      %v4827 = vpop.f32.mrb[0].mxu0
      %v4828 = vadd.f32 0.0, %v4827
      %v4829 = vpop.f32.mrb[0].mxu0
      %4830 = vmatprep.mubr.f32.mxu0 0.0
      %4831 = vmatmul.mubr.f32.gmra.mrb[0].mxu0 %v4580
      %v4832 = vpop.f32.mrb[0].mxu0
      %v4833 = vadd.f32 0.0, %v4832
      %v4834 = vpop.f32.mrb[0].mxu0
      %4835 = vmatprep.mubr.f32.mxu0 0.0
      %4836 = vmatmul.mubr.f32.gmra.mrb[0].mxu0 %v4582
      %v4837 = vpop.f32.mrb[0].mxu0
      %v4838 = vadd.f32 0.0, %v4837
      %v4839 = vpop.f32.mrb[0].mxu0
      %4840 = vmatprep.mubr.f32.mxu0 0.0
      %4841 = vmatmul.mubr.f32.gmra.mrb[0].mxu0 %v4584
      %v4842 = vpop.f32.mrb[0].mxu0
      %v4843 = vadd.f32 0.0, %v4842
      %v4844 = vpop.f32.mrb[0].mxu0
      %4845 = vmatprep.mubr.f32.mxu0 0.0
      %4846 = vmatmul.mubr.f32.gmra.mrb[0].mxu0 %v4586
      %v4847 = vpop.f32.mrb[0].mxu0
      %v4848 = vadd.f32 0.0, %v4847
      %v4849 = vpop.f32.mrb[0].mxu0
      %4850 = vmatprep.mubr.f32.mxu0 0.0
      %4851 = vmatmul.mubr.f32.gmra.mrb[0].mxu0 %v4588
      %v4852 = vpop.f32.mrb[0].mxu0
      %v4853 = vadd.f32 0.0, %v4852
      %v4854 = vpop.f32.mrb[0].mxu0
      %4855 = vmatprep.mubr.f32.mxu0 0.0
      %4856 = vmatmul.mubr.f32.gmra.mrb[0].mxu0 %v4590
      %v4857 = vpop.f32.mrb[0].mxu0
      %v4858 = vadd.f32 0.0, %v4857
      %v4859 = vpop.f32.mrb[0].mxu0
      %4860 = vmatprep.mubr.f32.mxu0 0.0
      %4861 = vmatmul.mubr.f32.gmra.mrb[0].mxu0 %v4592
      %v4862 = vpop.f32.mrb[0].mxu0
      %v4863 = vadd.f32 0.0, %v4862
      %v4864 = vpop.f32.mrb[0].mxu0
      %4865 = vmatprep.mubr.f32.mxu0 0.0
      %4866 = vmatmul.mubr.f32.gmra.mrb[0].mxu0 %v4594
      %v4867 = vpop.f32.mrb[0].mxu0
      %v4868 = vadd.f32 0.0, %v4867
      %v4869 = vpop.f32.mrb[0].mxu0
      %4870 = vmatprep.mubr.f32.mxu0 0.0
      %4871 = vmatmul.mubr.f32.gmra.mrb[0].mxu0 %v4596
      %v4872 = vpop.f32.mrb[0].mxu0
      %v4873 = vadd.f32 0.0, %v4872
      %v4874 = vpop.f32.mrb[0].mxu0
      %4875 = vmatprep.mubr.f32.mxu0 0.0
      %4876 = vmatmul.mubr.f32.gmra.mrb[0].mxu0 %v4598
      %v4877 = vpop.f32.mrb[0].mxu0
      %v4878 = vadd.f32 0.0, %v4877
      %v4879 = vpop.f32.mrb[0].mxu0
      %4880 = vmatprep.mubr.f32.mxu0 0.0
      %4881 = vmatmul.mubr.f32.gmra.mrb[0].mxu0 %v4600
      %v4882 = vpop.f32.mrb[0].mxu0
      %v4883 = vadd.f32 0.0, %v4882
      %v4884 = vpop.f32.mrb[0].mxu0
      %4885 = vmatprep.mubr.f32.mxu0 0.0
      %4886 = vmatmul.mubr.f32.gmra.mrb[0].mxu0 %v4602
      %v4887 = vpop.f32.mrb[0].mxu0
      %v4888 = vadd.f32 0.0, %v4887
      %v4889 = vpop.f32.mrb[0].mxu0
      %4890 = vmatprep.mubr.f32.mxu0 0.0
      %4891 = vmatmul.mubr.f32.gmra.mrb[0].mxu0 %v4604
      %v4892 = vpop.f32.mrb[0].mxu0
      %v4893 = vadd.f32 0.0, %v4892
      %v4894 = vpop.f32.mrb[0].mxu0
      %4895 = vdwg.mxu0
      %v4899 = vrot.slane %v4290, 5
      %v4900 = vsel %vm2314, %v4899, %v4899
      %v4901 = vrot.slane %v4291, 5
      %v4902 = vsel %vm2314, %v4899, %v4901
      %v4903 = vrot.slane %v4292, 5
      %v4904 = vsel %vm2314, %v4901, %v4903
      %v4905 = vrot.slane %v4293, 5
      %v4906 = vsel %vm2314, %v4903, %v4905
      %v4907 = vrot.slane %v4294, 5
      %v4908 = vsel %vm2314, %v4905, %v4907
      %v4909 = vrot.slane %v4295, 5
      %v4910 = vsel %vm2314, %v4907, %v4909
      %v4911 = vrot.slane %v4296, 5
      %v4912 = vsel %vm2314, %v4909, %v4911
      %v4913 = vrot.slane %v4297, 5
      %v4914 = vsel %vm2314, %v4911, %v4913
      %v4915 = vrot.slane %v4298, 5
      %v4916 = vsel %vm2314, %v4913, %v4915
      %v4917 = vrot.slane %v4299, 5
      %v4918 = vsel %vm2314, %v4915, %v4917
      %v4919 = vrot.slane %v4300, 5
      %v4920 = vsel %vm2314, %v4917, %v4919
      %v4921 = vrot.slane %v4301, 5
      %v4922 = vsel %vm2314, %v4919, %v4921
      %v4923 = vrot.slane %v4302, 5
      %v4924 = vsel %vm2314, %v4921, %v4923
      %v4925 = vrot.slane %v4303, 5
      %v4926 = vsel %vm2314, %v4923, %v4925
      %v4927 = vrot.slane %v4304, 5
      %v4928 = vsel %vm2314, %v4925, %v4927
      %v4929 = vrot.slane %v4305, 5
      %v4930 = vsel %vm2314, %v4927, %v4929
      %v4931 = vrot.slane %v4306, 5
      %v4932 = vsel %vm2314, %v4929, %v4931
      %v4933 = vrot.slane %v4307, 5
      %v4934 = vsel %vm2314, %v4931, %v4933
      %v4935 = vrot.slane %v4308, 5
      %v4936 = vsel %vm2314, %v4933, %v4935
      %v4937 = vrot.slane %v4309, 5
      %v4938 = vsel %vm2314, %v4935, %v4937
      %v4939 = vrot.slane %v4310, 5
      %v4940 = vsel %vm2314, %v4937, %v4939
      %v4941 = vrot.slane %v4311, 5
      %v4942 = vsel %vm2314, %v4939, %v4941
      %v4943 = vrot.slane %v4312, 5
      %v4944 = vsel %vm2314, %v4941, %v4943
      %v4945 = vrot.slane %v4313, 5
      %v4946 = vsel %vm2314, %v4943, %v4945
      %v4947 = vrot.slane %v4314, 5
      %v4948 = vsel %vm2314, %v4945, %v4947
      %v4949 = vrot.slane %v4315, 5
      %v4950 = vsel %vm2314, %v4947, %v4949
      %v4951 = vrot.slane %v4316, 5
      %v4952 = vsel %vm2314, %v4949, %v4951
      %v4953 = vrot.slane %v4317, 5
      %v4954 = vsel %vm2314, %v4951, %v4953
      %v4955 = vrot.slane %v4318, 5
      %v4956 = vsel %vm2314, %v4953, %v4955
      %v4957 = vrot.slane %v4319, 5
      %v4958 = vsel %vm2314, %v4955, %v4957
      %v4959 = vrot.slane %v4320, 5
      %v4960 = vsel %vm2314, %v4957, %v4959
      %v4961 = vrot.slane %v4321, 5
      %v4962 = vsel %vm2314, %v4959, %v4961
      %v4963 = vrot.slane %v4322, 5
      %v4964 = vsel %vm2314, %v4961, %v4963
      %v4965 = vrot.slane %v4323, 5
      %v4966 = vsel %vm2314, %v4963, %v4965
      %v4967 = vrot.slane %v4324, 5
      %v4968 = vsel %vm2314, %v4965, %v4967
      %v4969 = vrot.slane %v4325, 5
      %v4970 = vsel %vm2314, %v4967, %v4969
      %v4971 = vrot.slane %v4326, 5
      %v4972 = vsel %vm2314, %v4969, %v4971
      %v4973 = vrot.slane %v4327, 5
      %v4974 = vsel %vm2314, %v4971, %v4973
      %v4975 = vrot.slane %v4328, 5
      %v4976 = vsel %vm2314, %v4973, %v4975
      %v4977 = vrot.slane %v4329, 5
      %v4978 = vsel %vm2314, %v4975, %v4977
      %v4979 = vrot.slane %v4330, 5
      %v4980 = vsel %vm2314, %v4977, %v4979
      %v4981 = vrot.slane %v4331, 5
      %v4982 = vsel %vm2314, %v4979, %v4981
      %v4983 = vrot.slane %v4332, 5
      %v4984 = vsel %vm2314, %v4981, %v4983
      %v4985 = vrot.slane %v4333, 5
      %v4986 = vsel %vm2314, %v4983, %v4985
      %v4987 = vrot.slane %v4334, 5
      %v4988 = vsel %vm2314, %v4985, %v4987
      %v4989 = vsel %vm4515, %v4900, 0
      %v4991 = vsel %vm4515, %v4902, 0
      %v4993 = vsel %vm4515, %v4904, 0
      %v4995 = vsel %vm4515, %v4906, 0
      %v4997 = vsel %vm4515, %v4908, 0
      %v4999 = vsel %vm4515, %v4910, 0
      %v5001 = vsel %vm4515, %v4912, 0
      %v5003 = vsel %vm4515, %v4914, 0
      %v5005 = vsel %vm4515, %v4916, 0
      %v5007 = vsel %vm4515, %v4918, 0
      %v5009 = vsel %vm4515, %v4920, 0
      %v5011 = vsel %vm4515, %v4922, 0
      %v5013 = vsel %vm4515, %v4924, 0
      %v5015 = vsel %vm4515, %v4926, 0
      %v5017 = vsel %vm4515, %v4928, 0
      %v5019 = vsel %vm4515, %v4930, 0
      %v5021 = vsel %vm4515, %v4932, 0
      %v5023 = vsel %vm4515, %v4934, 0
      %v5025 = vsel %vm4515, %v4936, 0
      %v5027 = vsel %vm4515, %v4938, 0
      %v5029 = vsel %vm4515, %v4940, 0
      %v5031 = vsel %vm4515, %v4942, 0
      %v5033 = vsel %vm4515, %v4944, 0
      %v5035 = vsel %vm4515, %v4946, 0
      %v5037 = vsel %vm4515, %v4948, 0
      %v5039 = vsel %vm4515, %v4950, 0
      %v5041 = vsel %vm4515, %v4952, 0
      %v5043 = vsel %vm4515, %v4954, 0
      %v5045 = vsel %vm4515, %v4956, 0
      %v5047 = vsel %vm4515, %v4958, 0
      %v5049 = vsel %vm4515, %v4960, 0
      %v5051 = vsel %vm4515, %v4962, 0
      %v5053 = vsel %vm4515, %v4964, 0
      %v5055 = vsel %vm4515, %v4966, 0
      %v5057 = vsel %vm4515, %v4968, 0
      %v5059 = vsel %vm4515, %v4970, 0
      %v5061 = vsel %vm4515, %v4972, 0
      %v5063 = vsel %vm4515, %v4974, 0
      %v5065 = vsel %vm4515, %v4976, 0
      %v5067 = vsel %vm4515, %v4978, 0
      %v5069 = vsel %vm4515, %v4980, 0
      %v5071 = vsel %vm4515, %v4982, 0
      %v5073 = vsel %vm4515, %v4984, 0
      %v5075 = vsel %vm4515, %v4986, 0
      %v5077 = vsel %vm4515, %v4988, 0
      %5079 = vmatprep.subr.mxu0 0.0
      %5080 = vmatpush1.msra.mxu0 %v3722
      %5081 = vmatprep.subr.mxu0 0.0
      %5082 = vmatpush1.msra.mxu0 %v3723
      %5083 = vmatprep.subr.mxu0 0.0
      %5084 = vmatpush1.msra.mxu0 %v3724
      %5085 = vmatprep.subr.mxu0 0.0
      %5086 = vmatpush1.msra.mxu0 %v3725
      %5087 = vmatprep.subr.mxu0 0.0
      %5088 = vmatpush1.msra.mxu0 %v3726
      %5089 = vmatprep.subr.mxu0 0.0
      %5090 = vmatpush1.msra.mxu0 %v3727
      %5091 = vmatprep.subr.mxu0 0.0
      %5092 = vmatpush1.msra.mxu0 %v3728
      %5093 = vmatprep.subr.mxu0 0.0
      %5094 = vmatpush1.msra.mxu0 %v3729
      %5095 = vmatprep.subr.mxu0 0.0
      %5096 = vmatpush1.msra.mxu0 %v3730
      %5097 = vmatprep.subr.mxu0 0.0
      %5098 = vmatpush1.msra.mxu0 %v3731
      %5099 = vmatprep.subr.mxu0 0.0
      %5100 = vmatpush1.msra.mxu0 %v3732
      %5101 = vmatprep.subr.mxu0 0.0
      %5102 = vmatpush1.msra.mxu0 %v3733
      %5103 = vmatprep.subr.mxu0 0.0
      %5104 = vmatpush1.msra.mxu0 0.0
      %5105 = vmatprep.subr.mxu0 0.0
      %5106 = vmatpush1.msra.mxu0 0.0
      %5107 = vmatprep.subr.mxu0 0.0
      %5108 = vmatpush1.msra.mxu0 0.0
      %5109 = vmatprep.subr.mxu0 0.0
      %5110 = vmatpush1.msra.mxu0 0.0
      %5111 = vmatprep.subr.mxu0 0.0
      %5112 = vmatpush1.msra.mxu0 0.0
      %5113 = vmatprep.subr.mxu0 0.0
      %5114 = vmatpush1.msra.mxu0 0.0
      %5115 = vmatprep.subr.mxu0 0.0
      %5116 = vmatpush1.msra.mxu0 0.0
      %5117 = vmatprep.subr.mxu0 0.0
      %5118 = vmatpush1.msra.mxu0 0.0
      %5119 = vmatprep.subr.mxu0 0.0
      %5120 = vmatpush1.msra.mxu0 0.0
      %5121 = vmatprep.subr.mxu0 0.0
      %5122 = vmatpush1.msra.mxu0 0.0
      %5123 = vmatprep.subr.mxu0 0.0
      %5124 = vmatpush1.msra.mxu0 0.0
      %5125 = vmatprep.subr.mxu0 0.0
      %5126 = vmatpush1.msra.mxu0 0.0
      %5127 = vmatprep.subr.mxu0 0.0
      %5128 = vmatpush1.msra.mxu0 0.0
      %5129 = vmatprep.subr.mxu0 0.0
      %5130 = vmatpush1.msra.mxu0 0.0
      %5131 = vmatprep.subr.mxu0 0.0
      %5132 = vmatpush1.msra.mxu0 0.0
      %5133 = vmatprep.subr.mxu0 0.0
      %5134 = vmatpush1.msra.mxu0 0.0
      %5135 = vmatprep.subr.mxu0 0.0
      %5136 = vmatpush1.msra.mxu0 0.0
      %5137 = vmatprep.subr.mxu0 0.0
      %5138 = vmatpush1.msra.mxu0 0.0
      %5139 = vmatprep.subr.mxu0 0.0
      %5140 = vmatpush1.msra.mxu0 0.0
      %5141 = vmatprep.subr.mxu0 0.0
      %5142 = vmatpush1.msra.mxu0 0.0
      %5143 = vmatprep.mubr.f32.mxu0 0.0
      %5144 = vmatmul.mubr.f32.gmra.mrb[0].mxu0 %v4989
      %v5145 = vpop.f32.mrb[0].mxu0
      %v5146 = vadd.f32 %v4673, %v5145
      %v5147 = vpop.f32.mrb[0].mxu0
      %5148 = vmatprep.mubr.f32.mxu0 0.0
      %5149 = vmatmul.mubr.f32.gmra.mrb[0].mxu0 %v4991
      %v5150 = vpop.f32.mrb[0].mxu0
      %v5151 = vadd.f32 %v4678, %v5150
      %v5152 = vpop.f32.mrb[0].mxu0
      %5153 = vmatprep.mubr.f32.mxu0 0.0
      %5154 = vmatmul.mubr.f32.gmra.mrb[0].mxu0 %v4993
      %v5155 = vpop.f32.mrb[0].mxu0
      %v5156 = vadd.f32 %v4683, %v5155
      %v5157 = vpop.f32.mrb[0].mxu0
      %5158 = vmatprep.mubr.f32.mxu0 0.0
      %5159 = vmatmul.mubr.f32.gmra.mrb[0].mxu0 %v4995
      %v5160 = vpop.f32.mrb[0].mxu0
      %v5161 = vadd.f32 %v4688, %v5160
      %v5162 = vpop.f32.mrb[0].mxu0
      %5163 = vmatprep.mubr.f32.mxu0 0.0
      %5164 = vmatmul.mubr.f32.gmra.mrb[0].mxu0 %v4997
      %v5165 = vpop.f32.mrb[0].mxu0
      %v5166 = vadd.f32 %v4693, %v5165
      %v5167 = vpop.f32.mrb[0].mxu0
      %5168 = vmatprep.mubr.f32.mxu0 0.0
      %5169 = vmatmul.mubr.f32.gmra.mrb[0].mxu0 %v4999
      %v5170 = vpop.f32.mrb[0].mxu0
      %v5171 = vadd.f32 %v4698, %v5170
      %v5172 = vpop.f32.mrb[0].mxu0
      %5173 = vmatprep.mubr.f32.mxu0 0.0
      %5174 = vmatmul.mubr.f32.gmra.mrb[0].mxu0 %v5001
      %v5175 = vpop.f32.mrb[0].mxu0
      %v5176 = vadd.f32 %v4703, %v5175
      %v5177 = vpop.f32.mrb[0].mxu0
      %5178 = vmatprep.mubr.f32.mxu0 0.0
      %5179 = vmatmul.mubr.f32.gmra.mrb[0].mxu0 %v5003
      %v5180 = vpop.f32.mrb[0].mxu0
      %v5181 = vadd.f32 %v4708, %v5180
      %v5182 = vpop.f32.mrb[0].mxu0
      %5183 = vmatprep.mubr.f32.mxu0 0.0
      %5184 = vmatmul.mubr.f32.gmra.mrb[0].mxu0 %v5005
      %v5185 = vpop.f32.mrb[0].mxu0
      %v5186 = vadd.f32 %v4713, %v5185
      %v5187 = vpop.f32.mrb[0].mxu0
      %5188 = vmatprep.mubr.f32.mxu0 0.0
      %5189 = vmatmul.mubr.f32.gmra.mrb[0].mxu0 %v5007
      %v5190 = vpop.f32.mrb[0].mxu0
      %v5191 = vadd.f32 %v4718, %v5190
      %v5192 = vpop.f32.mrb[0].mxu0
      %5193 = vmatprep.mubr.f32.mxu0 0.0
      %5194 = vmatmul.mubr.f32.gmra.mrb[0].mxu0 %v5009
      %v5195 = vpop.f32.mrb[0].mxu0
      %v5196 = vadd.f32 %v4723, %v5195
      %v5197 = vpop.f32.mrb[0].mxu0
      %5198 = vmatprep.mubr.f32.mxu0 0.0
      %5199 = vmatmul.mubr.f32.gmra.mrb[0].mxu0 %v5011
      %v5200 = vpop.f32.mrb[0].mxu0
      %v5201 = vadd.f32 %v4728, %v5200
      %v5202 = vpop.f32.mrb[0].mxu0
      %5203 = vmatprep.mubr.f32.mxu0 0.0
      %5204 = vmatmul.mubr.f32.gmra.mrb[0].mxu0 %v5013
      %v5205 = vpop.f32.mrb[0].mxu0
      %v5206 = vadd.f32 %v4733, %v5205
      %v5207 = vpop.f32.mrb[0].mxu0
      %5208 = vmatprep.mubr.f32.mxu0 0.0
      %5209 = vmatmul.mubr.f32.gmra.mrb[0].mxu0 %v5015
      %v5210 = vpop.f32.mrb[0].mxu0
      %v5211 = vadd.f32 %v4738, %v5210
      %v5212 = vpop.f32.mrb[0].mxu0
      %5213 = vmatprep.mubr.f32.mxu0 0.0
      %5214 = vmatmul.mubr.f32.gmra.mrb[0].mxu0 %v5017
      %v5215 = vpop.f32.mrb[0].mxu0
      %v5216 = vadd.f32 %v4743, %v5215
      %v5217 = vpop.f32.mrb[0].mxu0
      %5218 = vmatprep.mubr.f32.mxu0 0.0
      %5219 = vmatmul.mubr.f32.gmra.mrb[0].mxu0 %v5019
      %v5220 = vpop.f32.mrb[0].mxu0
      %v5221 = vadd.f32 %v4748, %v5220
      %v5222 = vpop.f32.mrb[0].mxu0
      %5223 = vmatprep.mubr.f32.mxu0 0.0
      %5224 = vmatmul.mubr.f32.gmra.mrb[0].mxu0 %v5021
      %v5225 = vpop.f32.mrb[0].mxu0
      %v5226 = vadd.f32 %v4753, %v5225
      %v5227 = vpop.f32.mrb[0].mxu0
      %5228 = vmatprep.mubr.f32.mxu0 0.0
      %5229 = vmatmul.mubr.f32.gmra.mrb[0].mxu0 %v5023
      %v5230 = vpop.f32.mrb[0].mxu0
      %v5231 = vadd.f32 %v4758, %v5230
      %v5232 = vpop.f32.mrb[0].mxu0
      %5233 = vmatprep.mubr.f32.mxu0 0.0
      %5234 = vmatmul.mubr.f32.gmra.mrb[0].mxu0 %v5025
      %v5235 = vpop.f32.mrb[0].mxu0
      %v5236 = vadd.f32 %v4763, %v5235
      %v5237 = vpop.f32.mrb[0].mxu0
      %5238 = vmatprep.mubr.f32.mxu0 0.0
      %5239 = vmatmul.mubr.f32.gmra.mrb[0].mxu0 %v5027
      %v5240 = vpop.f32.mrb[0].mxu0
      %v5241 = vadd.f32 %v4768, %v5240
      %v5242 = vpop.f32.mrb[0].mxu0
      %5243 = vmatprep.mubr.f32.mxu0 0.0
      %5244 = vmatmul.mubr.f32.gmra.mrb[0].mxu0 %v5029
      %v5245 = vpop.f32.mrb[0].mxu0
      %v5246 = vadd.f32 %v4773, %v5245
      %v5247 = vpop.f32.mrb[0].mxu0
      %5248 = vmatprep.mubr.f32.mxu0 0.0
      %5249 = vmatmul.mubr.f32.gmra.mrb[0].mxu0 %v5031
      %v5250 = vpop.f32.mrb[0].mxu0
      %v5251 = vadd.f32 %v4778, %v5250
      %v5252 = vpop.f32.mrb[0].mxu0
      %5253 = vmatprep.mubr.f32.mxu0 0.0
      %5254 = vmatmul.mubr.f32.gmra.mrb[0].mxu0 %v5033
      %v5255 = vpop.f32.mrb[0].mxu0
      %v5256 = vadd.f32 %v4783, %v5255
      %v5257 = vpop.f32.mrb[0].mxu0
      %5258 = vmatprep.mubr.f32.mxu0 0.0
      %5259 = vmatmul.mubr.f32.gmra.mrb[0].mxu0 %v5035
      %v5260 = vpop.f32.mrb[0].mxu0
      %v5261 = vadd.f32 %v4788, %v5260
      %v5262 = vpop.f32.mrb[0].mxu0
      %5263 = vmatprep.mubr.f32.mxu0 0.0
      %5264 = vmatmul.mubr.f32.gmra.mrb[0].mxu0 %v5037
      %v5265 = vpop.f32.mrb[0].mxu0
      %v5266 = vadd.f32 %v4793, %v5265
      %v5267 = vpop.f32.mrb[0].mxu0
      %5268 = vmatprep.mubr.f32.mxu0 0.0
      %5269 = vmatmul.mubr.f32.gmra.mrb[0].mxu0 %v5039
      %v5270 = vpop.f32.mrb[0].mxu0
      %v5271 = vadd.f32 %v4798, %v5270
      %v5272 = vpop.f32.mrb[0].mxu0
      %5273 = vmatprep.mubr.f32.mxu0 0.0
      %5274 = vmatmul.mubr.f32.gmra.mrb[0].mxu0 %v5041
      %v5275 = vpop.f32.mrb[0].mxu0
      %v5276 = vadd.f32 %v4803, %v5275
      %v5277 = vpop.f32.mrb[0].mxu0
      %5278 = vmatprep.mubr.f32.mxu0 0.0
      %5279 = vmatmul.mubr.f32.gmra.mrb[0].mxu0 %v5043
      %v5280 = vpop.f32.mrb[0].mxu0
      %v5281 = vadd.f32 %v4808, %v5280
      %v5282 = vpop.f32.mrb[0].mxu0
      %5283 = vmatprep.mubr.f32.mxu0 0.0
      %5284 = vmatmul.mubr.f32.gmra.mrb[0].mxu0 %v5045
      %v5285 = vpop.f32.mrb[0].mxu0
      %v5286 = vadd.f32 %v4813, %v5285
      %v5287 = vpop.f32.mrb[0].mxu0
      %5288 = vmatprep.mubr.f32.mxu0 0.0
      %5289 = vmatmul.mubr.f32.gmra.mrb[0].mxu0 %v5047
      %v5290 = vpop.f32.mrb[0].mxu0
      %v5291 = vadd.f32 %v4818, %v5290
      %v5292 = vpop.f32.mrb[0].mxu0
      %5293 = vmatprep.mubr.f32.mxu0 0.0
      %5294 = vmatmul.mubr.f32.gmra.mrb[0].mxu0 %v5049
      %v5295 = vpop.f32.mrb[0].mxu0
      %v5296 = vadd.f32 %v4823, %v5295
      %v5297 = vpop.f32.mrb[0].mxu0
      %5298 = vmatprep.mubr.f32.mxu0 0.0
      %5299 = vmatmul.mubr.f32.gmra.mrb[0].mxu0 %v5051
      %v5300 = vpop.f32.mrb[0].mxu0
      %v5301 = vadd.f32 %v4828, %v5300
      %v5302 = vpop.f32.mrb[0].mxu0
      %5303 = vmatprep.mubr.f32.mxu0 0.0
      %5304 = vmatmul.mubr.f32.gmra.mrb[0].mxu0 %v5053
      %v5305 = vpop.f32.mrb[0].mxu0
      %v5306 = vadd.f32 %v4833, %v5305
      %v5307 = vpop.f32.mrb[0].mxu0
      %5308 = vmatprep.mubr.f32.mxu0 0.0
      %5309 = vmatmul.mubr.f32.gmra.mrb[0].mxu0 %v5055
      %v5310 = vpop.f32.mrb[0].mxu0
      %v5311 = vadd.f32 %v4838, %v5310
      %v5312 = vpop.f32.mrb[0].mxu0
      %5313 = vmatprep.mubr.f32.mxu0 0.0
      %5314 = vmatmul.mubr.f32.gmra.mrb[0].mxu0 %v5057
      %v5315 = vpop.f32.mrb[0].mxu0
      %v5316 = vadd.f32 %v4843, %v5315
      %v5317 = vpop.f32.mrb[0].mxu0
      %5318 = vmatprep.mubr.f32.mxu0 0.0
      %5319 = vmatmul.mubr.f32.gmra.mrb[0].mxu0 %v5059
      %v5320 = vpop.f32.mrb[0].mxu0
      %v5321 = vadd.f32 %v4848, %v5320
      %v5322 = vpop.f32.mrb[0].mxu0
      %5323 = vmatprep.mubr.f32.mxu0 0.0
      %5324 = vmatmul.mubr.f32.gmra.mrb[0].mxu0 %v5061
      %v5325 = vpop.f32.mrb[0].mxu0
      %v5326 = vadd.f32 %v4853, %v5325
      %v5327 = vpop.f32.mrb[0].mxu0
      %5328 = vmatprep.mubr.f32.mxu0 0.0
      %5329 = vmatmul.mubr.f32.gmra.mrb[0].mxu0 %v5063
      %v5330 = vpop.f32.mrb[0].mxu0
      %v5331 = vadd.f32 %v4858, %v5330
      %v5332 = vpop.f32.mrb[0].mxu0
      %5333 = vmatprep.mubr.f32.mxu0 0.0
      %5334 = vmatmul.mubr.f32.gmra.mrb[0].mxu0 %v5065
      %v5335 = vpop.f32.mrb[0].mxu0
      %v5336 = vadd.f32 %v4863, %v5335
      %v5337 = vpop.f32.mrb[0].mxu0
      %5338 = vmatprep.mubr.f32.mxu0 0.0
      %5339 = vmatmul.mubr.f32.gmra.mrb[0].mxu0 %v5067
      %v5340 = vpop.f32.mrb[0].mxu0
      %v5341 = vadd.f32 %v4868, %v5340
      %v5342 = vpop.f32.mrb[0].mxu0
      %5343 = vmatprep.mubr.f32.mxu0 0.0
      %5344 = vmatmul.mubr.f32.gmra.mrb[0].mxu0 %v5069
      %v5345 = vpop.f32.mrb[0].mxu0
      %v5346 = vadd.f32 %v4873, %v5345
      %v5347 = vpop.f32.mrb[0].mxu0
      %5348 = vmatprep.mubr.f32.mxu0 0.0
      %5349 = vmatmul.mubr.f32.gmra.mrb[0].mxu0 %v5071
      %v5350 = vpop.f32.mrb[0].mxu0
      %v5351 = vadd.f32 %v4878, %v5350
      %v5352 = vpop.f32.mrb[0].mxu0
      %5353 = vmatprep.mubr.f32.mxu0 0.0
      %5354 = vmatmul.mubr.f32.gmra.mrb[0].mxu0 %v5073
      %v5355 = vpop.f32.mrb[0].mxu0
      %v5356 = vadd.f32 %v4883, %v5355
      %v5357 = vpop.f32.mrb[0].mxu0
      %5358 = vmatprep.mubr.f32.mxu0 0.0
      %5359 = vmatmul.mubr.f32.gmra.mrb[0].mxu0 %v5075
      %v5360 = vpop.f32.mrb[0].mxu0
      %v5361 = vadd.f32 %v4888, %v5360
      %v5362 = vpop.f32.mrb[0].mxu0
      %5363 = vmatprep.mubr.f32.mxu0 0.0
      %5364 = vmatmul.mubr.f32.gmra.mrb[0].mxu0 %v5077
      %v5365 = vpop.f32.mrb[0].mxu0
      %v5366 = vadd.f32 %v4893, %v5365
      %v5367 = vpop.f32.mrb[0].mxu0
      %5368 = vdwg.mxu0
      %v5369 = vsel %vm1271, %v4339, %v1272
      %5370 = vrot.lane.b32.xlu0 %v5369, 32
      %v5371 = vpop.permute.xlu0 %5370
      %5372 = vrot.lane.b32.xlu0 %v1272, 32
      %v5373 = vpop.permute.xlu0 %5372
      %5376 = vrot.lane.b32.xlu0 %v1496, 64
      %v5377 = vpop.permute.xlu0 %5376
      %v5379 = vsel %vm4244, %v3721, %v5371
      %v5380 = vsel %vm4244, 0.0, %v5373
      %v5381 = vsel %vm1584, %v5379, %v4365
      %v5382 = vsel %vm1584, %v5380, %v5377
      %v5385 = vrot.slane %v4294, 1
      %v5386 = vrot.slane %v4295, 1
      %v5387 = vsel %vm1271, %v5385, %v5386
      %v5388 = vrot.slane %v4296, 1
      %v5389 = vsel %vm1271, %v5386, %v5388
      %v5390 = vrot.slane %v4297, 1
      %v5391 = vsel %vm1271, %v5388, %v5390
      %v5392 = vrot.slane %v4298, 1
      %v5393 = vsel %vm1271, %v5390, %v5392
      %v5394 = vrot.slane %v4299, 1
      %v5395 = vsel %vm1271, %v5392, %v5394
      %v5396 = vrot.slane %v4300, 1
      %v5397 = vsel %vm1271, %v5394, %v5396
      %v5398 = vrot.slane %v4301, 1
      %v5399 = vsel %vm1271, %v5396, %v5398
      %v5400 = vrot.slane %v4302, 1
      %v5401 = vsel %vm1271, %v5398, %v5400
      %v5402 = vrot.slane %v4303, 1
      %v5403 = vsel %vm1271, %v5400, %v5402
      %v5404 = vrot.slane %v4304, 1
      %v5405 = vsel %vm1271, %v5402, %v5404
      %v5406 = vrot.slane %v4305, 1
      %v5407 = vsel %vm1271, %v5404, %v5406
      %v5408 = vrot.slane %v4306, 1
      %v5409 = vsel %vm1271, %v5406, %v5408
      %v5410 = vrot.slane %v4307, 1
      %v5411 = vsel %vm1271, %v5408, %v5410
      %v5412 = vrot.slane %v4308, 1
      %v5413 = vsel %vm1271, %v5410, %v5412
      %v5414 = vrot.slane %v4309, 1
      %v5415 = vsel %vm1271, %v5412, %v5414
      %v5416 = vrot.slane %v4310, 1
      %v5417 = vsel %vm1271, %v5414, %v5416
      %v5418 = vrot.slane %v4311, 1
      %v5419 = vsel %vm1271, %v5416, %v5418
      %v5420 = vrot.slane %v4312, 1
      %v5421 = vsel %vm1271, %v5418, %v5420
      %v5422 = vrot.slane %v4313, 1
      %v5423 = vsel %vm1271, %v5420, %v5422
      %v5424 = vrot.slane %v4314, 1
      %v5425 = vsel %vm1271, %v5422, %v5424
      %v5426 = vrot.slane %v4315, 1
      %v5427 = vsel %vm1271, %v5424, %v5426
      %v5428 = vrot.slane %v4316, 1
      %v5429 = vsel %vm1271, %v5426, %v5428
      %v5430 = vrot.slane %v4317, 1
      %v5431 = vsel %vm1271, %v5428, %v5430
      %v5432 = vrot.slane %v4318, 1
      %v5433 = vsel %vm1271, %v5430, %v5432
      %v5434 = vrot.slane %v4319, 1
      %v5435 = vsel %vm1271, %v5432, %v5434
      %v5436 = vrot.slane %v4320, 1
      %v5437 = vsel %vm1271, %v5434, %v5436
      %v5438 = vrot.slane %v4321, 1
      %v5439 = vsel %vm1271, %v5436, %v5438
      %v5440 = vrot.slane %v4322, 1
      %v5441 = vsel %vm1271, %v5438, %v5440
      %v5442 = vrot.slane %v4323, 1
      %v5443 = vsel %vm1271, %v5440, %v5442
      %v5444 = vrot.slane %v4324, 1
      %v5445 = vsel %vm1271, %v5442, %v5444
      %v5446 = vrot.slane %v4325, 1
      %v5447 = vsel %vm1271, %v5444, %v5446
      %v5448 = vrot.slane %v4326, 1
      %v5449 = vsel %vm1271, %v5446, %v5448
      %v5450 = vrot.slane %v4327, 1
      %v5451 = vsel %vm1271, %v5448, %v5450
      %v5452 = vrot.slane %v4328, 1
      %v5453 = vsel %vm1271, %v5450, %v5452
      %v5454 = vrot.slane %v4329, 1
      %v5455 = vsel %vm1271, %v5452, %v5454
      %v5456 = vrot.slane %v4330, 1
      %v5457 = vsel %vm1271, %v5454, %v5456
      %v5458 = vrot.slane %v4331, 1
      %v5459 = vsel %vm1271, %v5456, %v5458
      %v5460 = vrot.slane %v4332, 1
      %v5461 = vsel %vm1271, %v5458, %v5460
      %v5462 = vrot.slane %v4333, 1
      %v5463 = vsel %vm1271, %v5460, %v5462
      %v5464 = vrot.slane %v4375, 1
      %v5465 = vsel %vm1271, %v5462, %v5464
      %v5466 = vrot.slane %v4376, 1
      %v5467 = vsel %vm1271, %v5464, %v5466
      %v5468 = vrot.slane %v5381, 1
      %v5469 = vsel %vm1271, %v5466, %v5468
      %v5470 = vrot.slane %v4290, 1
      %v5471 = vsel %vm1271, %v5468, %v5470
      %v5472 = vsel %vm1271, %v5470, %v5470
      %v5473 = vrot.slane %v5382, 1
      %v5474 = vsel %vm1271, %v5470, %v5473
      %v5475 = vsel %vm4515, %v5387, 0
      %v5477 = vsel %vm4515, %v5389, 0
      %v5479 = vsel %vm4515, %v5391, 0
      %v5481 = vsel %vm4515, %v5393, 0
      %v5483 = vsel %vm4515, %v5395, 0
      %v5485 = vsel %vm4515, %v5397, 0
      %v5487 = vsel %vm4515, %v5399, 0
      %v5489 = vsel %vm4515, %v5401, 0
      %v5491 = vsel %vm4515, %v5403, 0
      %v5493 = vsel %vm4515, %v5405, 0
      %v5495 = vsel %vm4515, %v5407, 0
      %v5497 = vsel %vm4515, %v5409, 0
      %v5499 = vsel %vm4515, %v5411, 0
      %v5501 = vsel %vm4515, %v5413, 0
      %v5503 = vsel %vm4515, %v5415, 0
      %v5505 = vsel %vm4515, %v5417, 0
      %v5507 = vsel %vm4515, %v5419, 0
      %v5509 = vsel %vm4515, %v5421, 0
      %v5511 = vsel %vm4515, %v5423, 0
      %v5513 = vsel %vm4515, %v5425, 0
      %v5515 = vsel %vm4515, %v5427, 0
      %v5517 = vsel %vm4515, %v5429, 0
      %v5519 = vsel %vm4515, %v5431, 0
      %v5521 = vsel %vm4515, %v5433, 0
      %v5523 = vsel %vm4515, %v5435, 0
      %v5525 = vsel %vm4515, %v5437, 0
      %v5527 = vsel %vm4515, %v5439, 0
      %v5529 = vsel %vm4515, %v5441, 0
      %v5531 = vsel %vm4515, %v5443, 0
      %v5533 = vsel %vm4515, %v5445, 0
      %v5535 = vsel %vm4515, %v5447, 0
      %v5537 = vsel %vm4515, %v5449, 0
      %v5539 = vsel %vm4515, %v5451, 0
      %v5541 = vsel %vm4515, %v5453, 0
      %v5543 = vsel %vm4515, %v5455, 0
      %v5545 = vsel %vm4515, %v5457, 0
      %v5547 = vsel %vm4515, %v5459, 0
      %v5549 = vsel %vm4515, %v5461, 0
      %v5551 = vsel %vm4515, %v5463, 0
      %v5553 = vsel %vm4515, %v5465, 0
      %v5555 = vsel %vm4515, %v5467, 0
      %v5557 = vsel %vm4515, %v5469, 0
      %v5559 = vsel %vm4515, %v5471, 0
      %v5561 = vsel %vm4515, %v5472, 0
      %v5563 = vsel %vm4515, %v5474, 0
      %5565 = vmatprep.subr.mxu0 0.0
      %5566 = vmatpush1.msra.mxu0 %v3746
      %5567 = vmatprep.subr.mxu0 0.0
      %5568 = vmatpush1.msra.mxu0 %v3747
      %5569 = vmatprep.subr.mxu0 0.0
      %5570 = vmatpush1.msra.mxu0 %v3748
      %5571 = vmatprep.subr.mxu0 0.0
      %5572 = vmatpush1.msra.mxu0 %v3749
      %5573 = vmatprep.subr.mxu0 0.0
      %5574 = vmatpush1.msra.mxu0 %v3750
      %5575 = vmatprep.subr.mxu0 0.0
      %5576 = vmatpush1.msra.mxu0 %v3751
      %5577 = vmatprep.subr.mxu0 0.0
      %5578 = vmatpush1.msra.mxu0 %v3752
      %5579 = vmatprep.subr.mxu0 0.0
      %5580 = vmatpush1.msra.mxu0 %v3753
      %5581 = vmatprep.subr.mxu0 0.0
      %5582 = vmatpush1.msra.mxu0 %v3754
      %5583 = vmatprep.subr.mxu0 0.0
      %5584 = vmatpush1.msra.mxu0 %v3755
      %5585 = vmatprep.subr.mxu0 0.0
      %5586 = vmatpush1.msra.mxu0 %v3756
      %5587 = vmatprep.subr.mxu0 0.0
      %5588 = vmatpush1.msra.mxu0 %v3757
      %5589 = vmatprep.subr.mxu0 0.0
      %5590 = vmatpush1.msra.mxu0 0.0
      %5591 = vmatprep.subr.mxu0 0.0
      %5592 = vmatpush1.msra.mxu0 0.0
      %5593 = vmatprep.subr.mxu0 0.0
      %5594 = vmatpush1.msra.mxu0 0.0
      %5595 = vmatprep.subr.mxu0 0.0
      %5596 = vmatpush1.msra.mxu0 0.0
      %5597 = vmatprep.subr.mxu0 0.0
      %5598 = vmatpush1.msra.mxu0 0.0
      %5599 = vmatprep.subr.mxu0 0.0
      %5600 = vmatpush1.msra.mxu0 0.0
      %5601 = vmatprep.subr.mxu0 0.0
      %5602 = vmatpush1.msra.mxu0 0.0
      %5603 = vmatprep.subr.mxu0 0.0
      %5604 = vmatpush1.msra.mxu0 0.0
      %5605 = vmatprep.subr.mxu0 0.0
      %5606 = vmatpush1.msra.mxu0 0.0
      %5607 = vmatprep.subr.mxu0 0.0
      %5608 = vmatpush1.msra.mxu0 0.0
      %5609 = vmatprep.subr.mxu0 0.0
      %5610 = vmatpush1.msra.mxu0 0.0
      %5611 = vmatprep.subr.mxu0 0.0
      %5612 = vmatpush1.msra.mxu0 0.0
      %5613 = vmatprep.subr.mxu0 0.0
      %5614 = vmatpush1.msra.mxu0 0.0
      %5615 = vmatprep.subr.mxu0 0.0
      %5616 = vmatpush1.msra.mxu0 0.0
      %5617 = vmatprep.subr.mxu0 0.0
      %5618 = vmatpush1.msra.mxu0 0.0
      %5619 = vmatprep.subr.mxu0 0.0
      %5620 = vmatpush1.msra.mxu0 0.0
      %5621 = vmatprep.subr.mxu0 0.0
      %5622 = vmatpush1.msra.mxu0 0.0
      %5623 = vmatprep.subr.mxu0 0.0
      %5624 = vmatpush1.msra.mxu0 0.0
      %5625 = vmatprep.subr.mxu0 0.0
      %5626 = vmatpush1.msra.mxu0 0.0
      %5627 = vmatprep.subr.mxu0 0.0
      %5628 = vmatpush1.msra.mxu0 0.0
      %5629 = vmatprep.mubr.f32.mxu0 0.0
      %5630 = vmatmul.mubr.f32.gmra.mrb[0].mxu0 %v5475
      %v5631 = vpop.f32.mrb[0].mxu0
      %v5632 = vadd.f32 0.0, %v5631
      %v5633 = vpop.f32.mrb[0].mxu0
      %5634 = vmatprep.mubr.f32.mxu0 0.0
      %5635 = vmatmul.mubr.f32.gmra.mrb[0].mxu0 %v5477
      %v5636 = vpop.f32.mrb[0].mxu0
      %v5637 = vadd.f32 0.0, %v5636
      %v5638 = vpop.f32.mrb[0].mxu0
      %5639 = vmatprep.mubr.f32.mxu0 0.0
      %5640 = vmatmul.mubr.f32.gmra.mrb[0].mxu0 %v5479
      %v5641 = vpop.f32.mrb[0].mxu0
      %v5642 = vadd.f32 0.0, %v5641
      %v5643 = vpop.f32.mrb[0].mxu0
      %5644 = vmatprep.mubr.f32.mxu0 0.0
      %5645 = vmatmul.mubr.f32.gmra.mrb[0].mxu0 %v5481
      %v5646 = vpop.f32.mrb[0].mxu0
      %v5647 = vadd.f32 0.0, %v5646
      %v5648 = vpop.f32.mrb[0].mxu0
      %5649 = vmatprep.mubr.f32.mxu0 0.0
      %5650 = vmatmul.mubr.f32.gmra.mrb[0].mxu0 %v5483
      %v5651 = vpop.f32.mrb[0].mxu0
      %v5652 = vadd.f32 0.0, %v5651
      %v5653 = vpop.f32.mrb[0].mxu0
      %5654 = vmatprep.mubr.f32.mxu0 0.0
      %5655 = vmatmul.mubr.f32.gmra.mrb[0].mxu0 %v5485
      %v5656 = vpop.f32.mrb[0].mxu0
      %v5657 = vadd.f32 0.0, %v5656
      %v5658 = vpop.f32.mrb[0].mxu0
      %5659 = vmatprep.mubr.f32.mxu0 0.0
      %5660 = vmatmul.mubr.f32.gmra.mrb[0].mxu0 %v5487
      %v5661 = vpop.f32.mrb[0].mxu0
      %v5662 = vadd.f32 0.0, %v5661
      %v5663 = vpop.f32.mrb[0].mxu0
      %5664 = vmatprep.mubr.f32.mxu0 0.0
      %5665 = vmatmul.mubr.f32.gmra.mrb[0].mxu0 %v5489
      %v5666 = vpop.f32.mrb[0].mxu0
      %v5667 = vadd.f32 0.0, %v5666
      %v5668 = vpop.f32.mrb[0].mxu0
      %5669 = vmatprep.mubr.f32.mxu0 0.0
      %5670 = vmatmul.mubr.f32.gmra.mrb[0].mxu0 %v5491
      %v5671 = vpop.f32.mrb[0].mxu0
      %v5672 = vadd.f32 0.0, %v5671
      %v5673 = vpop.f32.mrb[0].mxu0
      %5674 = vmatprep.mubr.f32.mxu0 0.0
      %5675 = vmatmul.mubr.f32.gmra.mrb[0].mxu0 %v5493
      %v5676 = vpop.f32.mrb[0].mxu0
      %v5677 = vadd.f32 0.0, %v5676
      %v5678 = vpop.f32.mrb[0].mxu0
      %5679 = vmatprep.mubr.f32.mxu0 0.0
      %5680 = vmatmul.mubr.f32.gmra.mrb[0].mxu0 %v5495
      %v5681 = vpop.f32.mrb[0].mxu0
      %v5682 = vadd.f32 0.0, %v5681
      %v5683 = vpop.f32.mrb[0].mxu0
      %5684 = vmatprep.mubr.f32.mxu0 0.0
      %5685 = vmatmul.mubr.f32.gmra.mrb[0].mxu0 %v5497
      %v5686 = vpop.f32.mrb[0].mxu0
      %v5687 = vadd.f32 0.0, %v5686
      %v5688 = vpop.f32.mrb[0].mxu0
      %5689 = vmatprep.mubr.f32.mxu0 0.0
      %5690 = vmatmul.mubr.f32.gmra.mrb[0].mxu0 %v5499
      %v5691 = vpop.f32.mrb[0].mxu0
      %v5692 = vadd.f32 0.0, %v5691
      %v5693 = vpop.f32.mrb[0].mxu0
      %5694 = vmatprep.mubr.f32.mxu0 0.0
      %5695 = vmatmul.mubr.f32.gmra.mrb[0].mxu0 %v5501
      %v5696 = vpop.f32.mrb[0].mxu0
      %v5697 = vadd.f32 0.0, %v5696
      %v5698 = vpop.f32.mrb[0].mxu0
      %5699 = vmatprep.mubr.f32.mxu0 0.0
      %5700 = vmatmul.mubr.f32.gmra.mrb[0].mxu0 %v5503
      %v5701 = vpop.f32.mrb[0].mxu0
      %v5702 = vadd.f32 0.0, %v5701
      %v5703 = vpop.f32.mrb[0].mxu0
      %5704 = vmatprep.mubr.f32.mxu0 0.0
      %5705 = vmatmul.mubr.f32.gmra.mrb[0].mxu0 %v5505
      %v5706 = vpop.f32.mrb[0].mxu0
      %v5707 = vadd.f32 0.0, %v5706
      %v5708 = vpop.f32.mrb[0].mxu0
      %5709 = vmatprep.mubr.f32.mxu0 0.0
      %5710 = vmatmul.mubr.f32.gmra.mrb[0].mxu0 %v5507
      %v5711 = vpop.f32.mrb[0].mxu0
      %v5712 = vadd.f32 0.0, %v5711
      %v5713 = vpop.f32.mrb[0].mxu0
      %5714 = vmatprep.mubr.f32.mxu0 0.0
      %5715 = vmatmul.mubr.f32.gmra.mrb[0].mxu0 %v5509
      %v5716 = vpop.f32.mrb[0].mxu0
      %v5717 = vadd.f32 0.0, %v5716
      %v5718 = vpop.f32.mrb[0].mxu0
      %5719 = vmatprep.mubr.f32.mxu0 0.0
      %5720 = vmatmul.mubr.f32.gmra.mrb[0].mxu0 %v5511
      %v5721 = vpop.f32.mrb[0].mxu0
      %v5722 = vadd.f32 0.0, %v5721
      %v5723 = vpop.f32.mrb[0].mxu0
      %5724 = vmatprep.mubr.f32.mxu0 0.0
      %5725 = vmatmul.mubr.f32.gmra.mrb[0].mxu0 %v5513
      %v5726 = vpop.f32.mrb[0].mxu0
      %v5727 = vadd.f32 0.0, %v5726
      %v5728 = vpop.f32.mrb[0].mxu0
      %5729 = vmatprep.mubr.f32.mxu0 0.0
      %5730 = vmatmul.mubr.f32.gmra.mrb[0].mxu0 %v5515
      %v5731 = vpop.f32.mrb[0].mxu0
      %v5732 = vadd.f32 0.0, %v5731
      %v5733 = vpop.f32.mrb[0].mxu0
      %5734 = vmatprep.mubr.f32.mxu0 0.0
      %5735 = vmatmul.mubr.f32.gmra.mrb[0].mxu0 %v5517
      %v5736 = vpop.f32.mrb[0].mxu0
      %v5737 = vadd.f32 0.0, %v5736
      %v5738 = vpop.f32.mrb[0].mxu0
      %5739 = vmatprep.mubr.f32.mxu0 0.0
      %5740 = vmatmul.mubr.f32.gmra.mrb[0].mxu0 %v5519
      %v5741 = vpop.f32.mrb[0].mxu0
      %v5742 = vadd.f32 0.0, %v5741
      %v5743 = vpop.f32.mrb[0].mxu0
      %5744 = vmatprep.mubr.f32.mxu0 0.0
      %5745 = vmatmul.mubr.f32.gmra.mrb[0].mxu0 %v5521
      %v5746 = vpop.f32.mrb[0].mxu0
      %v5747 = vadd.f32 0.0, %v5746
      %v5748 = vpop.f32.mrb[0].mxu0
      %5749 = vmatprep.mubr.f32.mxu0 0.0
      %5750 = vmatmul.mubr.f32.gmra.mrb[0].mxu0 %v5523
      %v5751 = vpop.f32.mrb[0].mxu0
      %v5752 = vadd.f32 0.0, %v5751
      %v5753 = vpop.f32.mrb[0].mxu0
      %5754 = vmatprep.mubr.f32.mxu0 0.0
      %5755 = vmatmul.mubr.f32.gmra.mrb[0].mxu0 %v5525
      %v5756 = vpop.f32.mrb[0].mxu0
      %v5757 = vadd.f32 0.0, %v5756
      %v5758 = vpop.f32.mrb[0].mxu0
      %5759 = vmatprep.mubr.f32.mxu0 0.0
      %5760 = vmatmul.mubr.f32.gmra.mrb[0].mxu0 %v5527
      %v5761 = vpop.f32.mrb[0].mxu0
      %v5762 = vadd.f32 0.0, %v5761
      %v5763 = vpop.f32.mrb[0].mxu0
      %5764 = vmatprep.mubr.f32.mxu0 0.0
      %5765 = vmatmul.mubr.f32.gmra.mrb[0].mxu0 %v5529
      %v5766 = vpop.f32.mrb[0].mxu0
      %v5767 = vadd.f32 0.0, %v5766
      %v5768 = vpop.f32.mrb[0].mxu0
      %5769 = vmatprep.mubr.f32.mxu0 0.0
      %5770 = vmatmul.mubr.f32.gmra.mrb[0].mxu0 %v5531
      %v5771 = vpop.f32.mrb[0].mxu0
      %v5772 = vadd.f32 0.0, %v5771
      %v5773 = vpop.f32.mrb[0].mxu0
      %5774 = vmatprep.mubr.f32.mxu0 0.0
      %5775 = vmatmul.mubr.f32.gmra.mrb[0].mxu0 %v5533
      %v5776 = vpop.f32.mrb[0].mxu0
      %v5777 = vadd.f32 0.0, %v5776
      %v5778 = vpop.f32.mrb[0].mxu0
      %5779 = vmatprep.mubr.f32.mxu0 0.0
      %5780 = vmatmul.mubr.f32.gmra.mrb[0].mxu0 %v5535
      %v5781 = vpop.f32.mrb[0].mxu0
      %v5782 = vadd.f32 0.0, %v5781
      %v5783 = vpop.f32.mrb[0].mxu0
      %5784 = vmatprep.mubr.f32.mxu0 0.0
      %5785 = vmatmul.mubr.f32.gmra.mrb[0].mxu0 %v5537
      %v5786 = vpop.f32.mrb[0].mxu0
      %v5787 = vadd.f32 0.0, %v5786
      %v5788 = vpop.f32.mrb[0].mxu0
      %5789 = vmatprep.mubr.f32.mxu0 0.0
      %5790 = vmatmul.mubr.f32.gmra.mrb[0].mxu0 %v5539
      %v5791 = vpop.f32.mrb[0].mxu0
      %v5792 = vadd.f32 0.0, %v5791
      %v5793 = vpop.f32.mrb[0].mxu0
      %5794 = vmatprep.mubr.f32.mxu0 0.0
      %5795 = vmatmul.mubr.f32.gmra.mrb[0].mxu0 %v5541
      %v5796 = vpop.f32.mrb[0].mxu0
      %v5797 = vadd.f32 0.0, %v5796
      %v5798 = vpop.f32.mrb[0].mxu0
      %5799 = vmatprep.mubr.f32.mxu0 0.0
      %5800 = vmatmul.mubr.f32.gmra.mrb[0].mxu0 %v5543
      %v5801 = vpop.f32.mrb[0].mxu0
      %v5802 = vadd.f32 0.0, %v5801
      %v5803 = vpop.f32.mrb[0].mxu0
      %5804 = vmatprep.mubr.f32.mxu0 0.0
      %5805 = vmatmul.mubr.f32.gmra.mrb[0].mxu0 %v5545
      %v5806 = vpop.f32.mrb[0].mxu0
      %v5807 = vadd.f32 0.0, %v5806
      %v5808 = vpop.f32.mrb[0].mxu0
      %5809 = vmatprep.mubr.f32.mxu0 0.0
      %5810 = vmatmul.mubr.f32.gmra.mrb[0].mxu0 %v5547
      %v5811 = vpop.f32.mrb[0].mxu0
      %v5812 = vadd.f32 0.0, %v5811
      %v5813 = vpop.f32.mrb[0].mxu0
      %5814 = vmatprep.mubr.f32.mxu0 0.0
      %5815 = vmatmul.mubr.f32.gmra.mrb[0].mxu0 %v5549
      %v5816 = vpop.f32.mrb[0].mxu0
      %v5817 = vadd.f32 0.0, %v5816
      %v5818 = vpop.f32.mrb[0].mxu0
      %5819 = vmatprep.mubr.f32.mxu0 0.0
      %5820 = vmatmul.mubr.f32.gmra.mrb[0].mxu0 %v5551
      %v5821 = vpop.f32.mrb[0].mxu0
      %v5822 = vadd.f32 0.0, %v5821
      %v5823 = vpop.f32.mrb[0].mxu0
      %5824 = vmatprep.mubr.f32.mxu0 0.0
      %5825 = vmatmul.mubr.f32.gmra.mrb[0].mxu0 %v5553
      %v5826 = vpop.f32.mrb[0].mxu0
      %v5827 = vadd.f32 0.0, %v5826
      %v5828 = vpop.f32.mrb[0].mxu0
      %5829 = vmatprep.mubr.f32.mxu0 0.0
      %5830 = vmatmul.mubr.f32.gmra.mrb[0].mxu0 %v5555
      %v5831 = vpop.f32.mrb[0].mxu0
      %v5832 = vadd.f32 0.0, %v5831
      %v5833 = vpop.f32.mrb[0].mxu0
      %5834 = vmatprep.mubr.f32.mxu0 0.0
      %5835 = vmatmul.mubr.f32.gmra.mrb[0].mxu0 %v5557
      %v5836 = vpop.f32.mrb[0].mxu0
      %v5837 = vadd.f32 0.0, %v5836
      %v5838 = vpop.f32.mrb[0].mxu0
      %5839 = vmatprep.mubr.f32.mxu0 0.0
      %5840 = vmatmul.mubr.f32.gmra.mrb[0].mxu0 %v5559
      %v5841 = vpop.f32.mrb[0].mxu0
      %v5842 = vadd.f32 0.0, %v5841
      %v5843 = vpop.f32.mrb[0].mxu0
      %5844 = vmatprep.mubr.f32.mxu0 0.0
      %5845 = vmatmul.mubr.f32.gmra.mrb[0].mxu0 %v5561
      %v5846 = vpop.f32.mrb[0].mxu0
      %v5847 = vadd.f32 0.0, %v5846
      %v5848 = vpop.f32.mrb[0].mxu0
      %5849 = vmatprep.mubr.f32.mxu0 0.0
      %5850 = vmatmul.mubr.f32.gmra.mrb[0].mxu0 %v5563
      %v5851 = vpop.f32.mrb[0].mxu0
      %v5852 = vadd.f32 0.0, %v5851
      %v5853 = vpop.f32.mrb[0].mxu0
      %5854 = vdwg.mxu0
      %v5855 = vadd.f32 %v5146, %v5632
      %v5856 = vadd.f32 %v5151, %v5637
      %v5857 = vadd.f32 %v5156, %v5642
      %v5858 = vadd.f32 %v5161, %v5647
      %v5859 = vadd.f32 %v5166, %v5652
      %v5860 = vadd.f32 %v5171, %v5657
      %v5861 = vadd.f32 %v5176, %v5662
      %v5862 = vadd.f32 %v5181, %v5667
      %v5863 = vadd.f32 %v5186, %v5672
      %v5864 = vadd.f32 %v5191, %v5677
      %v5865 = vadd.f32 %v5196, %v5682
      %v5866 = vadd.f32 %v5201, %v5687
      %v5867 = vadd.f32 %v5206, %v5692
      %v5868 = vadd.f32 %v5211, %v5697
      %v5869 = vadd.f32 %v5216, %v5702
      %v5870 = vadd.f32 %v5221, %v5707
      %v5871 = vadd.f32 %v5226, %v5712
      %v5872 = vadd.f32 %v5231, %v5717
      %v5873 = vadd.f32 %v5236, %v5722
      %v5874 = vadd.f32 %v5241, %v5727
      %v5875 = vadd.f32 %v5246, %v5732
      %v5876 = vadd.f32 %v5251, %v5737
      %v5877 = vadd.f32 %v5256, %v5742
      %v5878 = vadd.f32 %v5261, %v5747
      %v5879 = vadd.f32 %v5266, %v5752
      %v5880 = vadd.f32 %v5271, %v5757
      %v5881 = vadd.f32 %v5276, %v5762
      %v5882 = vadd.f32 %v5281, %v5767
      %v5883 = vadd.f32 %v5286, %v5772
      %v5884 = vadd.f32 %v5291, %v5777
      %v5885 = vadd.f32 %v5296, %v5782
      %v5886 = vadd.f32 %v5301, %v5787
      %v5887 = vadd.f32 %v5306, %v5792
      %v5888 = vadd.f32 %v5311, %v5797
      %v5889 = vadd.f32 %v5316, %v5802
      %v5890 = vadd.f32 %v5321, %v5807
      %v5891 = vadd.f32 %v5326, %v5812
      %v5892 = vadd.f32 %v5331, %v5817
      %v5893 = vadd.f32 %v5336, %v5822
      %v5894 = vadd.f32 %v5341, %v5827
      %v5895 = vadd.f32 %v5346, %v5832
      %v5896 = vadd.f32 %v5351, %v5837
      %v5897 = vadd.f32 %v5356, %v5842
      %v5898 = vadd.f32 %v5361, %v5847
      %v5899 = vadd.f32 %v5366, %v5852
      %v5901 = vlaneseq
      %v5902 = vshrl.u32 %v5901, 7
      %v5903 = vsub.s32 0, %v5902
      %v5904 = vrot.slane %v3758, %v5903
      %v5906 = vadd.f32 %v5855, %v5904
      %v5907 = vadd.f32 %v5856, %v5904
      %v5908 = vadd.f32 %v5857, %v5904
      %v5909 = vadd.f32 %v5858, %v5904
      %v5910 = vadd.f32 %v5859, %v5904
      %v5911 = vadd.f32 %v5860, %v5904
      %v5912 = vadd.f32 %v5861, %v5904
      %v5913 = vadd.f32 %v5862, %v5904
      %v5914 = vadd.f32 %v5863, %v5904
      %v5915 = vadd.f32 %v5864, %v5904
      %v5916 = vadd.f32 %v5865, %v5904
      %v5917 = vadd.f32 %v5866, %v5904
      %v5918 = vadd.f32 %v5867, %v5904
      %v5919 = vadd.f32 %v5868, %v5904
      %v5920 = vadd.f32 %v5869, %v5904
      %v5921 = vadd.f32 %v5870, %v5904
      %v5922 = vadd.f32 %v5871, %v5904
      %v5923 = vadd.f32 %v5872, %v5904
      %v5924 = vadd.f32 %v5873, %v5904
      %v5925 = vadd.f32 %v5874, %v5904
      %v5926 = vadd.f32 %v5875, %v5904
      %v5927 = vadd.f32 %v5876, %v5904
      %v5928 = vadd.f32 %v5877, %v5904
      %v5929 = vadd.f32 %v5878, %v5904
      %v5930 = vadd.f32 %v5879, %v5904
      %v5931 = vadd.f32 %v5880, %v5904
      %v5932 = vadd.f32 %v5881, %v5904
      %v5933 = vadd.f32 %v5882, %v5904
      %v5934 = vadd.f32 %v5883, %v5904
      %v5935 = vadd.f32 %v5884, %v5904
      %v5936 = vadd.f32 %v5885, %v5904
      %v5937 = vadd.f32 %v5886, %v5904
      %v5938 = vadd.f32 %v5887, %v5904
      %v5939 = vadd.f32 %v5888, %v5904
      %v5940 = vadd.f32 %v5889, %v5904
      %v5941 = vadd.f32 %v5890, %v5904
      %v5942 = vadd.f32 %v5891, %v5904
      %v5943 = vadd.f32 %v5892, %v5904
      %v5944 = vadd.f32 %v5893, %v5904
      %v5945 = vadd.f32 %v5894, %v5904
      %v5946 = vadd.f32 %v5895, %v5904
      %v5947 = vadd.f32 %v5896, %v5904
      %v5948 = vadd.f32 %v5897, %v5904
      %v5949 = vadd.f32 %v5898, %v5904
      %v5950 = vadd.f32 %v5899, %v5904
      %v5951 = vmax.f32 %v5906, 0.0
      %v5952 = vmax.f32 %v5907, 0.0
      %v5953 = vmax.f32 %v5908, 0.0
      %v5954 = vmax.f32 %v5909, 0.0
      %v5955 = vmax.f32 %v5910, 0.0
      %v5956 = vmax.f32 %v5911, 0.0
      %v5957 = vmax.f32 %v5912, 0.0
      %v5958 = vmax.f32 %v5913, 0.0
      %v5959 = vmax.f32 %v5914, 0.0
      %v5960 = vmax.f32 %v5915, 0.0
      %v5961 = vmax.f32 %v5916, 0.0
      %v5962 = vmax.f32 %v5917, 0.0
      %v5963 = vmax.f32 %v5918, 0.0
      %v5964 = vmax.f32 %v5919, 0.0
      %v5965 = vmax.f32 %v5920, 0.0
      %v5966 = vmax.f32 %v5921, 0.0
      %v5967 = vmax.f32 %v5922, 0.0
      %v5968 = vmax.f32 %v5923, 0.0
      %v5969 = vmax.f32 %v5924, 0.0
      %v5970 = vmax.f32 %v5925, 0.0
      %v5971 = vmax.f32 %v5926, 0.0
      %v5972 = vmax.f32 %v5927, 0.0
      %v5973 = vmax.f32 %v5928, 0.0
      %v5974 = vmax.f32 %v5929, 0.0
      %v5975 = vmax.f32 %v5930, 0.0
      %v5976 = vmax.f32 %v5931, 0.0
      %v5977 = vmax.f32 %v5932, 0.0
      %v5978 = vmax.f32 %v5933, 0.0
      %v5979 = vmax.f32 %v5934, 0.0
      %v5980 = vmax.f32 %v5935, 0.0
      %v5981 = vmax.f32 %v5936, 0.0
      %v5982 = vmax.f32 %v5937, 0.0
      %v5983 = vmax.f32 %v5938, 0.0
      %v5984 = vmax.f32 %v5939, 0.0
      %v5985 = vmax.f32 %v5940, 0.0
      %v5986 = vmax.f32 %v5941, 0.0
      %v5987 = vmax.f32 %v5942, 0.0
      %v5988 = vmax.f32 %v5943, 0.0
      %v5989 = vmax.f32 %v5944, 0.0
      %v5990 = vmax.f32 %v5945, 0.0
      %v5991 = vmax.f32 %v5946, 0.0
      %v5992 = vmax.f32 %v5947, 0.0
      %v5993 = vmax.f32 %v5948, 0.0
      %v5994 = vmax.f32 %v5949, 0.0
      %v5995 = vmax.f32 %v5950, 0.0
      %v5996 = vmin.f32 %v5951, 1.0
      %v5997 = vmin.f32 %v5952, 1.0
      %v5998 = vmin.f32 %v5953, 1.0
      %v5999 = vmin.f32 %v5954, 1.0
      %v6000 = vmin.f32 %v5955, 1.0
      %v6001 = vmin.f32 %v5956, 1.0
      %v6002 = vmin.f32 %v5957, 1.0
      %v6003 = vmin.f32 %v5958, 1.0
      %v6004 = vmin.f32 %v5959, 1.0
      %v6005 = vmin.f32 %v5960, 1.0
      %v6006 = vmin.f32 %v5961, 1.0
      %v6007 = vmin.f32 %v5962, 1.0
      %v6008 = vmin.f32 %v5963, 1.0
      %v6009 = vmin.f32 %v5964, 1.0
      %v6010 = vmin.f32 %v5965, 1.0
      %v6011 = vmin.f32 %v5966, 1.0
      %v6012 = vmin.f32 %v5967, 1.0
      %v6013 = vmin.f32 %v5968, 1.0
      %v6014 = vmin.f32 %v5969, 1.0
      %v6015 = vmin.f32 %v5970, 1.0
      %v6016 = vmin.f32 %v5971, 1.0
      %v6017 = vmin.f32 %v5972, 1.0
      %v6018 = vmin.f32 %v5973, 1.0
      %v6019 = vmin.f32 %v5974, 1.0
      %v6020 = vmin.f32 %v5975, 1.0
      %v6021 = vmin.f32 %v5976, 1.0
      %v6022 = vmin.f32 %v5977, 1.0
      %v6023 = vmin.f32 %v5978, 1.0
      %v6024 = vmin.f32 %v5979, 1.0
      %v6025 = vmin.f32 %v5980, 1.0
      %v6026 = vmin.f32 %v5981, 1.0
      %v6027 = vmin.f32 %v5982, 1.0
      %v6028 = vmin.f32 %v5983, 1.0
      %v6029 = vmin.f32 %v5984, 1.0
      %v6030 = vmin.f32 %v5985, 1.0
      %v6031 = vmin.f32 %v5986, 1.0
      %v6032 = vmin.f32 %v5987, 1.0
      %v6033 = vmin.f32 %v5988, 1.0
      %v6034 = vmin.f32 %v5989, 1.0
      %v6035 = vmin.f32 %v5990, 1.0
      %v6036 = vmin.f32 %v5991, 1.0
      %v6037 = vmin.f32 %v5992, 1.0
      %v6038 = vmin.f32 %v5993, 1.0
      %v6039 = vmin.f32 %v5994, 1.0
      %v6040 = vmin.f32 %v5995, 1.0
      %vm6041 = vcmask 97280
      %6042 = vst.msk [vmem:[%s305] sm:$0xff] %vm6041, %v5996
      %6043 = vst.msk [vmem:[%s305 + $0x8] sm:$0xff] %vm6041, %v5997
      %6044 = vst.msk [vmem:[%s305 + $0x10] sm:$0xff] %vm6041, %v5998
      %6045 = vst.msk [vmem:[%s305 + $0x18] sm:$0xff] %vm6041, %v5999
      %6046 = vst.msk [vmem:[%s305 + $0x20] sm:$0xff] %vm6041, %v6000
      %6047 = vst.msk [vmem:[%s305 + $0x28] sm:$0xff] %vm6041, %v6001
      %6048 = vst.msk [vmem:[%s305 + $0x30] sm:$0xff] %vm6041, %v6002
      %6049 = vst.msk [vmem:[%s305 + $0x38] sm:$0xff] %vm6041, %v6003
      %6050 = vst.msk [vmem:[%s305 + $0x40] sm:$0xff] %vm6041, %v6004
      %6051 = vst.msk [vmem:[%s305 + $0x48] sm:$0xff] %vm6041, %v6005
      %6052 = vst.msk [vmem:[%s305 + $0x50] sm:$0xff] %vm6041, %v6006
      %6053 = vst.msk [vmem:[%s305 + $0x58] sm:$0xff] %vm6041, %v6007
      %6054 = vst.msk [vmem:[%s305 + $0x60] sm:$0xff] %vm6041, %v6008
      %6055 = vst.msk [vmem:[%s305 + $0x68] sm:$0xff] %vm6041, %v6009
      %6056 = vst.msk [vmem:[%s305 + $0x70] sm:$0xff] %vm6041, %v6010
      %6057 = vst.msk [vmem:[%s305 + $0x78] sm:$0xff] %vm6041, %v6011
      %6058 = vst.msk [vmem:[%s305 + $0x80] sm:$0xff] %vm6041, %v6012
      %6059 = vst.msk [vmem:[%s305 + $0x88] sm:$0xff] %vm6041, %v6013
      %6060 = vst.msk [vmem:[%s305 + $0x90] sm:$0xff] %vm6041, %v6014
      %6061 = vst.msk [vmem:[%s305 + $0x98] sm:$0xff] %vm6041, %v6015
      %6062 = vst.msk [vmem:[%s305 + $0xa0] sm:$0xff] %vm6041, %v6016
      %6063 = vst.msk [vmem:[%s305 + $0xa8] sm:$0xff] %vm6041, %v6017
      %6064 = vst.msk [vmem:[%s305 + $0xb0] sm:$0xff] %vm6041, %v6018
      %6065 = vst.msk [vmem:[%s305 + $0xb8] sm:$0xff] %vm6041, %v6019
      %6066 = vst.msk [vmem:[%s305 + $0xc0] sm:$0xff] %vm6041, %v6020
      %6067 = vst.msk [vmem:[%s305 + $0xc8] sm:$0xff] %vm6041, %v6021
      %6068 = vst.msk [vmem:[%s305 + $0xd0] sm:$0xff] %vm6041, %v6022
      %6069 = vst.msk [vmem:[%s305 + $0xd8] sm:$0xff] %vm6041, %v6023
      %6070 = vst.msk [vmem:[%s305 + $0xe0] sm:$0xff] %vm6041, %v6024
      %6071 = vst.msk [vmem:[%s305 + $0xe8] sm:$0xff] %vm6041, %v6025
      %6072 = vst.msk [vmem:[%s305 + $0xf0] sm:$0xff] %vm6041, %v6026
      %6073 = vst.msk [vmem:[%s305 + $0xf8] sm:$0xff] %vm6041, %v6027
      %6074 = vst.msk [vmem:[%s305 + $0x100] sm:$0xff] %vm6041, %v6028
      %6075 = vst.msk [vmem:[%s305 + $0x108] sm:$0xff] %vm6041, %v6029
      %6076 = vst.msk [vmem:[%s305 + $0x110] sm:$0xff] %vm6041, %v6030
      %6077 = vst.msk [vmem:[%s305 + $0x118] sm:$0xff] %vm6041, %v6031
      %6078 = vst.msk [vmem:[%s305 + $0x120] sm:$0xff] %vm6041, %v6032
      %6079 = vst.msk [vmem:[%s305 + $0x128] sm:$0xff] %vm6041, %v6033
      %6080 = vst.msk [vmem:[%s305 + $0x130] sm:$0xff] %vm6041, %v6034
      %6081 = vst.msk [vmem:[%s305 + $0x138] sm:$0xff] %vm6041, %v6035
      %6082 = vst.msk [vmem:[%s305 + $0x140] sm:$0xff] %vm6041, %v6036
      %6083 = vst.msk [vmem:[%s305 + $0x148] sm:$0xff] %vm6041, %v6037
      %6084 = vst.msk [vmem:[%s305 + $0x150] sm:$0xff] %vm6041, %v6038
      %6085 = vst.msk [vmem:[%s305 + $0x158] sm:$0xff] %vm6041, %v6039
      %6086 = vst.msk [vmem:[%s305 + $0x160] sm:$0xff] %vm6041, %v6040
      %p6087 = scmp.lt.s32.totalorder %s19, 1
      %s6088 = scalar_select %p6087, %s19, 1
      %s6089 = smul.addr %s6088, 45
      %s6090 = smul.addr %s6089, 8
      %s6091 = scalar_lea.vmem %s8, %s6090
      // Predicated region
      $region53: #{espcn_pallas_forward.1} parent=51 // pred_check
        %p6092 = pneg %p210
      $region54: #{espcn_pallas_forward.1} parent=51 // pred_check_branch
        %6094 = sbr.rel (%p6092) target = $region56
      $region55: #{espcn_pallas_forward.1} parent=51 // pred_region
        _
      $region56: #{espcn_pallas_forward.1} parent=51 // pred_fallthru
        _
    $region52: #{espcn_pallas_forward.1} parent=5 // pred_fallthru
      _
    %p6095 = scmp.le.s32.totalorder 2, %s14
    // Predicated region
    $region57: #{espcn_pallas_forward.1} parent=5 // pred_check
      %p6096 = pneg %p6095
    $region58: #{espcn_pallas_forward.1} parent=5 // pred_check_branch
      %6098 = sbr.rel (%p6096) target = $region60
    $region59: #{espcn_pallas_forward.1} parent=5 // pred_region
      %s6099 = ssub.s32 %s14, 2
      // Predicated region
      $region61: #{espcn_pallas_forward.1} parent=59 // pred_check
        %p6100 = pneg %p216
      $region62: #{espcn_pallas_forward.1} parent=59 // pred_check_branch
        %6102 = sbr.rel (%p6100) target = $region64
      $region63: #{espcn_pallas_forward.1} parent=59 // pred_region
        %p6103 = scmp.lt.s32.totalorder %s20, 1
        %s6104 = scalar_select %p6103, %s20, 1
        %s6105 = smul.addr %s6104, 45
        %s6106 = smul.addr %s6105, 8
        %s6107 = scalar_lea.vmem %s8, %s6106
      $region64: #{espcn_pallas_forward.1} parent=59 // pred_fallthru
        _
    $region60: #{espcn_pallas_forward.1} parent=5 // pred_fallthru
      _
  $region6: #{espcn_pallas_forward.1} parent=0 // loop_footer
    %s18 = sadd.s32 1, %s14
  $region7: #{espcn_pallas_forward.1} parent=0 // loop_footer_branch
    %13 = sbr.rel target = $region3
  $region8: #{espcn_pallas_forward.1} parent=0 // loop_exit
    _

</llo_original>
